<compile_context>
chip_gen: v7x
topology: tpu7x:2x2x1
jax: 0.10.0
libtpu: 0.0.40
codegen_flags: <defaults>
</compile_context>

<pallas_src>
import functools

import numpy as np
import jax
import jax.numpy as jnp
from jax.experimental import pallas as pl
from jax.experimental.pallas import tpu as pltpu


# ----------------------------------------------------------------------------
# Pallas kernel 1: fused DeepDecoder3d
#   3x (Linear + Tanh, bias=False) -> 4x ConvTranspose3d(k=2,s=2, bias=False)
# All matmuls + tanh happen in VMEM; up3/up4 use block-diagonal weights so the
# subvoxel index stays in the lane dimension and the output slab is lane-dense.
# ----------------------------------------------------------------------------
def _decoder_kernel(z_ref, w1_ref, w2_ref, w3_ref, u1_ref, u2_ref, u3bd_ref,
                    u4bd_ref, o_ref, *scratch, ig3):
    f32 = jnp.float32
    if ig3 > 1:
        y0_s, x0_s, y1_s, x1_s = scratch
    else:
        y1_s, x1_s = scratch

    # Linear + tanh stack (rows = batch).
    h = jnp.tanh(jnp.dot(z_ref[...], w1_ref[...], preferred_element_type=f32))
    h = jnp.tanh(jnp.dot(h, w2_ref[...], preferred_element_type=f32))
    h = jnp.tanh(jnp.dot(h, w3_ref[...], preferred_element_type=f32))

    # (bts, 32*ig^3) -> (bts*ig^3, 32) voxel-major rows (w3 columns are
    # pre-permuted to voxel-major in the wrapper).  Skipped entirely at ig=1.
    if ig3 > 1:
        m = h.shape[0]
        y0_s[...] = h
        for g in range(ig3):
            x0_s[g * m:(g + 1) * m, :] = y0_s[:, g * 32:(g + 1) * 32]
        x = x0_s[...]
    else:
        x = h

    # up1: ConvTranspose3d(32->16) as matmul; columns = (subvoxel1, 16 ch).
    h1 = jnp.tanh(jnp.dot(x, u1_ref[...], preferred_element_type=f32))     # (M1, 128)

    # Single remaining pixel-shuffle fold: (M1, 8*16) -> (8*M1, 16).
    m1 = h1.shape[0]
    y1_s[...] = h1
    for g in range(8):
        x1_s[g * m1:(g + 1) * m1, :] = y1_s[:, g * 16:(g + 1) * 16]
    x = x1_s[...]                                                           # (8*M1, 16)

    # up2 plain, up3/up4 block-diagonal: subvoxel indices stay in the lane
    # dimension, so no further folds and every store is lane-dense.
    h2 = jnp.tanh(jnp.dot(x, u2_ref[...], preferred_element_type=f32))      # (8*M1, 64)
    h3 = jnp.tanh(jnp.dot(h2, u3bd_ref[...], preferred_element_type=f32))   # (8*M1, 256)
    # up4 has no activation and already carries the downstream channel-sum.
    o_ref[...] = jnp.dot(h3, u4bd_ref[...], preferred_element_type=f32)     # (8*M1, 512)


def _hierarchical_to_spatial(dec, bts, ig):
    """(8*bts*ig^3, 512) decoder slab -> (bts, dgs, dgs, dgs) via pixel-shuffle.

    Rows encode (di1,dj1,dk1, vx,vy,vz, b); columns encode
    (di2,dj2,dk2, di3,dj3,dk3, di4,dj4,dk4).  Pure reshape/transpose (no gather),
    every transpose is rank <= 8.
    """
    a = dec.reshape(2, 2, 2, ig, ig, ig, bts, 512)
    a = a.transpose(6, 3, 0, 4, 1, 5, 2, 7)
    g = 2 * ig
    a = a.reshape(bts, g, g, g, 512)
    rem = 512
    for _ in range(3):
        rem //= 8
        a = a.reshape(bts, g, g, g, 2, 2, 2, rem)
        a = a.transpose(0, 1, 4, 2, 5, 3, 6, 7)
        g *= 2
        a = a.reshape(bts, g, g, g, rem)
    return a.reshape(bts, g, g, g)


# ----------------------------------------------------------------------------
# Pallas kernel 2: separable 3x3x3 Gaussian smoothing of a scalar field on a
# lane-dense (D, D*D) layout.  Input is x-padded by 1 and yz-flat padded by D.
# ----------------------------------------------------------------------------
def _smooth_kernel(sp_ref, o_ref, t_ref, *, d, w_side, w_center):
    yz = d * d
    c = sp_ref[:, :, d:d + yz]                                        # (1, d+2, yz)
    lane = jax.lax.broadcasted_iota(jnp.int32, c.shape, 2)
    z_id = lane % d

    # z pass (shift by +-1 lane; mask contributions that cross a y row).
    zm = jnp.where(z_id == 0, 0.0, sp_ref[:, :, d - 1:d - 1 + yz])
    zp = jnp.where(z_id == d - 1, 0.0, sp_ref[:, :, d + 1:d + 1 + yz])
    t = w_center * c + w_side * (zm + zp)

    # y pass (shift by +-d lanes; boundary handled by the zero lane padding).
    # NOTE: pads are written every step on purpose -- under megacore
    # partitioning the scratch is per-core, so a program_id==0 guard would
    # leave the second core's pads uninitialized.
    zeros_pad = jnp.zeros((c.shape[0], d + 2, d), jnp.float32)
    t_ref[:, :, 0:d] = zeros_pad
    t_ref[:, :, d + yz:d + yz + d] = zeros_pad
    t_ref[:, :, d:d + yz] = t
    t2 = (w_center * t
          + w_side * (t_ref[:, :, 0:yz] + t_ref[:, :, 2 * d:2 * d + yz]))

    # x pass (shift by +-1 sublane row; boundary handled by the x zero padding).
    t_ref[:, :, d:d + yz] = t2
    o_ref[...] = (w_center * t_ref[:, 1:1 + d, d:d + yz]
                  + w_side * (t_ref[:, 0:d, d:d + yz]
                              + t_ref[:, 2:2 + d, d:d + yz]))


def _smooth_scalar_field(s, sigma=0.5):
    bts, d = s.shape[0], s.shape[1]
    ks = int(5.0 * sigma + 0.5)
    assert ks == 3
    g1 = np.exp(-(np.arange(ks) - (ks - 1) / 2.0) ** 2 / (2.0 * sigma ** 2))
    g1 = g1 / g1.sum()
    w_side, w_center = float(g1[0]), float(g1[1])
    yz = d * d

    sp = jnp.pad(s, ((0, 0), (1, 1), (0, 0), (0, 0))).reshape(bts, d + 2, yz)
    sp = jnp.pad(sp, ((0, 0), (0, 0), (d, d)))                      # (bts, d+2, yz+2d)

    out = pl.pallas_call(
        functools.partial(_smooth_kernel, d=d, w_side=w_side, w_center=w_center),
        grid=(bts,),
        out_shape=jax.ShapeDtypeStruct((bts, d, yz), jnp.float32),
        in_specs=[pl.BlockSpec((1, d + 2, yz + 2 * d), lambda b: (b, 0, 0))],
        out_specs=pl.BlockSpec((1, d, yz), lambda b: (b, 0, 0)),
        scratch_shapes=[pltpu.VMEM((1, d + 2, yz + 2 * d), jnp.float32)],
        compiler_params=pltpu.CompilerParams(dimension_semantics=("parallel",)),
    )(sp)
    return out.reshape(bts, d, d, d)


# ----------------------------------------------------------------------------
# One-time weight preparation (hoisted out of the jitted forward)
# ----------------------------------------------------------------------------
def prepare_decoder_params(params, dgs):
    ig = int(dgs * 2 ** (-4))
    assert 16 * ig == dgs
    H = 32 * ig ** 3
    f = lambda a: np.asarray(a, np.float32)

    w1, w2 = f(params['w1']), f(params['w2'])
    # torch's .view(b, 32, ig, ig, ig) means linear3 columns are channel-major;
    # permute the weight columns to voxel-major so the (ig>1) kernel fold is a copy.
    w3 = f(params['w3']).reshape(H, 32, ig, ig, ig).transpose(0, 2, 3, 4, 1).reshape(H, H)
    # ConvTranspose3d weights (Cin, Cout, 2,2,2) -> (Cin, 8*Cout), subvoxel-major.
    u1 = f(params['up1']).transpose(0, 2, 3, 4, 1).reshape(32, 128)
    u2 = f(params['up2']).transpose(0, 2, 3, 4, 1).reshape(16, 64)
    u3 = f(params['up3']).transpose(0, 2, 3, 4, 1).reshape(8, 32)
    # up4 has no activation -> fold the downstream channel sum into its weight.
    u4 = f(params['up4']).sum(axis=1).reshape(4, 8)
    # Block-diagonal expansions keep the subvoxel index in the lane dimension.
    u3bd = np.kron(np.eye(8, dtype=np.float32), u3)       # (64, 256)
    u4bd = np.kron(np.eye(64, dtype=np.float32), u4)      # (256, 512)
    return {k: jnp.asarray(v) for k, v in dict(
        w1=w1, w2=w2, w3=w3, u1=u1, u2=u2, u3bd=u3bd, u4bd=u4bd).items()}


# ----------------------------------------------------------------------------
# Decoder wrapper: fused kernel + pixel-shuffle reorder + Gaussian smoothing
# ----------------------------------------------------------------------------
def decode_velocity(prep, z, *, gs, dsf):
    bts = z.shape[0]
    dgs = gs // dsf
    ig = int(dgs * 2 ** (-4))
    ig3 = ig ** 3
    H = 32 * ig3
    M1 = bts * ig3
    f32 = jnp.float32

    operands = (z, prep['w1'], prep['w2'], prep['w3'], prep['u1'], prep['u2'],
                prep['u3bd'], prep['u4bd'])

    scratch = []
    if ig3 > 1:
        scratch += [pltpu.VMEM((bts, H), f32), pltpu.VMEM((M1, 32), f32)]
    scratch += [pltpu.VMEM((M1, 128), f32), pltpu.VMEM((8 * M1, 16), f32)]

    latent = z.shape[1]
    flops = 2 * (bts * latent * H + 2 * bts * H * H + M1 * 32 * 128
                 + 8 * M1 * 16 * 64 + 8 * M1 * 64 * 256 + 8 * M1 * 256 * 512)
    trans = 3 * bts * H + M1 * 128 + 8 * M1 * 64 + 8 * M1 * 256
    nbytes = 4 * (sum(int(np.prod(a.shape)) for a in operands) + 8 * M1 * 512)

    # TODO(synk): on v7x a leading 'parallel' grid axis over rows/batch would
    #             use the 2nd TensorCore; unnecessary at these tiny sizes.
    dec = pl.pallas_call(
        functools.partial(_decoder_kernel, ig3=ig3),
        grid=(1,),
        out_shape=jax.ShapeDtypeStruct((8 * M1, 512), f32),
        in_specs=[pl.BlockSpec(a.shape, lambda i: (0, 0)) for a in operands],
        out_specs=pl.BlockSpec((8 * M1, 512), lambda i: (0, 0)),
        scratch_shapes=scratch,
        compiler_params=pltpu.CompilerParams(
            dimension_semantics=("arbitrary",),
            vmem_limit_bytes=32 * 1024 * 1024),
        cost_estimate=pl.CostEstimate(flops=int(flops), transcendentals=int(trans),
                                      bytes_accessed=int(nbytes)),
    )(*operands)

    # Hierarchical -> (b, x, y, z) via reshape/transpose (no gather).
    s = _hierarchical_to_spatial(dec, bts, ig)

    # Gaussian smoothing (the reference smoother makes all channels equal to
    # the smoothed channel-sum, so a single scalar field carries everything).
    return _smooth_scalar_field(s, 0.5)


# ----------------------------------------------------------------------------
# Plain-JAX glue: trilinear interpolations (consolidated gathers)
# ----------------------------------------------------------------------------
def _svf_step(vflat, gxf, gyf, gzf, dgs, dsf):
    bts, nbp = vflat.shape
    u = (gxf[None, :] + vflat + 1.0) / float(dsf) - 1.0
    v = (gyf[None, :] + vflat + 1.0) / float(dsf) - 1.0
    w = (gzf[None, :] + vflat + 1.0) / float(dsf) - 1.0
    u1 = jnp.clip(jnp.floor(u), 0.0, dgs - 1.0)
    v1 = jnp.clip(jnp.floor(v), 0.0, dgs - 1.0)
    w1 = jnp.clip(jnp.floor(w), 0.0, dgs - 1.0)
    u2 = jnp.clip(u1 + 1.0, 0.0, dgs - 1.0)
    v2 = jnp.clip(v1 + 1.0, 0.0, dgs - 1.0)
    w2 = jnp.clip(w1 + 1.0, 0.0, dgs - 1.0)
    fu, fv, fw = u - u1, v - v1, w - w1
    gu, gv, gw = u1 + 1.0 - u, v1 + 1.0 - v, w1 + 1.0 - w
    u1i, v1i, w1i = u1.astype(jnp.int32), v1.astype(jnp.int32), w1.astype(jnp.int32)
    u2i, v2i, w2i = u2.astype(jnp.int32), v2.astype(jnp.int32), w2.astype(jnp.int32)

    def fi(a, b, c):
        return (a * dgs + b) * dgs + c

    idx = jnp.concatenate([fi(u1i, v1i, w1i), fi(u1i, v1i, w2i),
                           fi(u1i, v2i, w1i), fi(u1i, v2i, w2i),
                           fi(u2i, v1i, w1i), fi(u2i, v1i, w2i),
                           fi(u2i, v2i, w1i), fi(u2i, v2i, w2i)], axis=1)
    vals = jnp.take_along_axis(vflat, idx, axis=1).reshape(bts, 8, nbp)
    wts = jnp.stack([gu * gv * gw, gu * gv * fw, gu * fv * gw, gu * fv * fw,
                     fu * gv * gw, fu * gv * fw, fu * fv * gw, fu * fv * fw], axis=1)
    return jnp.sum(vals * wts, axis=1)


def _upsample_trilinear_align_corners(points, out_size):
    def resize_axis(x, axis, out):
        in_size = x.shape[axis]
        if in_size == out:
            return x
        pos = jnp.arange(out, dtype=jnp.float32) * (in_size - 1) / (out - 1)
        i0 = jnp.clip(jnp.floor(pos), 0, in_size - 1).astype(jnp.int32)
        i1 = jnp.clip(i0 + 1, 0, in_size - 1)
        f = pos - i0.astype(jnp.float32)
        x0 = jnp.take(x, i0, axis=axis)
        x1 = jnp.take(x, i1, axis=axis)
        shp = [1] * x.ndim
        shp[axis] = out
        f = f.reshape(shp)
        return x0 * (1.0 - f) + x1 * f

    for ax in (2, 3, 4):
        points = resize_axis(points, ax, out_size)
    return points


def warp_template(template, vg, *, gs, dsf):
    """Trilinear warp of the shared template by the scalar displacement vg."""
    bts = vg.shape[0]
    # align_corners upsampling of the coarse grid is exactly arange(gs), so only
    # the single displacement channel needs to be upsampled.
    if dsf != 1:
        up = _upsample_trilinear_align_corners(vg[:, None], gs)[:, 0]
    else:
        up = vg
    g = gs
    ar = jnp.arange(g, dtype=jnp.float32)
    u = ar[None, :, None, None] + up
    v = ar[None, None, :, None] + up
    w = ar[None, None, None, :] + up
    u1 = jnp.clip(jnp.floor(u), 0.0, g - 1.0)
    v1 = jnp.clip(jnp.floor(v), 0.0, g - 1.0)
    w1 = jnp.clip(jnp.floor(w), 0.0, g - 1.0)
    u2 = jnp.clip(u1 + 1.0, 0.0, g - 1.0)
    v2 = jnp.clip(v1 + 1.0, 0.0, g - 1.0)
    w2 = jnp.clip(w1 + 1.0, 0.0, g - 1.0)
    fu, fv, fw = u - u1, v - v1, w - w1
    gu, gv, gw = u1 + 1.0 - u, v1 + 1.0 - v, w1 + 1.0 - w
    u1i, v1i, w1i = u1.astype(jnp.int32), v1.astype(jnp.int32), w1.astype(jnp.int32)
    u2i, v2i, w2i = u2.astype(jnp.int32), v2.astype(jnp.int32), w2.astype(jnp.int32)

    def fi(a, b, c):
        return (a * g + b) * g + c

    tpl = template[0].reshape(-1)
    idx = jnp.stack([fi(u1i, v1i, w1i), fi(u1i, v1i, w2i),
                     fi(u1i, v2i, w1i), fi(u1i, v2i, w2i),
                     fi(u2i, v1i, w1i), fi(u2i, v1i, w2i),
                     fi(u2i, v2i, w1i), fi(u2i, v2i, w2i)], axis=0)
    vals = jnp.take(tpl, idx.reshape(-1)).reshape(idx.shape)
    wts = jnp.stack([gu * gv * gw, gu * gv * fw, gu * fv * gw, gu * fv * fw,
                     fu * gv * gw, fu * gv * fw, fu * fv * gw, fu * fv * fw], axis=0)
    out = jnp.sum(vals * wts, axis=0)
    return out.reshape(bts, 1, g, g, g)


# ----------------------------------------------------------------------------
# BayesianAtlas.forward(z)
# ----------------------------------------------------------------------------
def bayesian_atlas_forward(prep, template, z, *, gs, dsf, ntp):
    bts = z.shape[0]
    dgs = gs // dsf
    v = decode_velocity(prep, z, gs=gs, dsf=dsf)                  # (bts,dgs,dgs,dgs)
    lin = jnp.linspace(0.0, gs - 1.0, dgs)
    gx, gy, gz = jnp.meshgrid(lin, lin, lin, indexing='ij')
    gxf, gyf, gzf = gx.reshape(-1), gy.reshape(-1), gz.reshape(-1)
    nbp = dgs ** 3
    vflat = v.reshape(bts, nbp) / float(2 ** ntp)
    for _ in range(ntp):
        vflat = vflat + _svf_step(vflat, gxf, gyf, gzf, dgs, dsf)
    vg = vflat.reshape(bts, dgs, dgs, dgs)
    return warp_template(template, vg, gs=gs, dsf=dsf)


# ----------------------------------------------------------------------------
# Pure-JAX/XLA reference (for the correctness self-check)
# ----------------------------------------------------------------------------
def _reference_vector_interpolation(vector, points, dsf):
    bts, dgs = points.shape[0], points.shape[2]
    nbp = dgs ** 3
    pts = jnp.transpose(points, (0, 2, 3, 4, 1)).reshape(bts, nbp, 3)
    vec = jnp.transpose(vector, (0, 2, 3, 4, 1)).reshape(bts, nbp, 3)
    x, y, z = pts[..., 0], pts[..., 1], pts[..., 2]
    u = (x + 1.0) / float(dsf) - 1.0
    v = (y + 1.0) / float(dsf) - 1.0
    w = (z + 1.0) / float(dsf) - 1.0
    u1 = jnp.clip(jnp.floor(u), 0.0, dgs - 1.0)
    v1 = jnp.clip(jnp.floor(v), 0.0, dgs - 1.0)
    w1 = jnp.clip(jnp.floor(w), 0.0, dgs - 1.0)
    u2 = jnp.clip(u1 + 1, 0.0, dgs - 1.0)
    v2 = jnp.clip(v1 + 1, 0.0, dgs - 1.0)
    w2 = jnp.clip(w1 + 1, 0.0, dgs - 1.0)
    fu, fv, fw = (u - u1)[..., None], (v - v1)[..., None], (w - w1)[..., None]
    gu, gv, gw = (u1 + 1 - u)[..., None], (v1 + 1 - v)[..., None], (w1 + 1 - w)[..., None]
    u1i, v1i, w1i = u1.astype(jnp.int32), v1.astype(jnp.int32), w1.astype(jnp.int32)
    u2i, v2i, w2i = u2.astype(jnp.int32), v2.astype(jnp.int32), w2.astype(jnp.int32)

    def sel(ui, vi, wi):
        idx = ui * dgs * dgs + vi * dgs + wi
        idx = jnp.broadcast_to(idx[:, :, None], (bts, nbp, 3))
        return jnp.take_along_axis(vec, idx, axis=1)

    out = (sel(u1i, v1i, w1i) * gu * gv * gw + sel(u1i, v1i, w2i) * gu * gv * fw
           + sel(u1i, v2i, w1i) * gu * fv * gw + sel(u1i, v2i, w2i) * gu * fv * fw
           + sel(u2i, v1i, w1i) * fu * gv * gw + sel(u2i, v1i, w2i) * fu * gv * fw
           + sel(u2i, v2i, w1i) * fu * fv * gw + sel(u2i, v2i, w2i) * fu * fv * fw)
    return jnp.transpose(out.reshape(bts, dgs, dgs, dgs, 3), (0, 4, 1, 2, 3))


def _reference_scalar_interpolation(scalars, points):
    bts = points.shape[0]
    gs = scalars.shape[1]
    dsf = gs // points.shape[2]
    if dsf != 1:
        points = _upsample_trilinear_align_corners(points, gs)
    g = points.shape[2]
    u, v, w = points[:, 0], points[:, 1], points[:, 2]
    u1 = jnp.clip(jnp.floor(u), 0, g - 1)
    v1 = jnp.clip(jnp.floor(v), 0, g - 1)
    w1 = jnp.clip(jnp.floor(w), 0, g - 1)
    u2 = jnp.clip(u1 + 1, 0, g - 1)
    v2 = jnp.clip(v1 + 1, 0, g - 1)
    w2 = jnp.clip(w1 + 1, 0, g - 1)
    fu, fv, fw = u - u1, v - v1, w - w1
    gu, gv, gw = u1 + 1 - u, v1 + 1 - v, w1 + 1 - w
    tpl = scalars[0]
    fl = lambda a: a.reshape(-1)
    u1i, v1i, w1i = fl(u1).astype(jnp.int32), fl(v1).astype(jnp.int32), fl(w1).astype(jnp.int32)
    u2i, v2i, w2i = fl(u2).astype(jnp.int32), fl(v2).astype(jnp.int32), fl(w2).astype(jnp.int32)
    fu, fv, fw, gu, gv, gw = map(fl, (fu, fv, fw, gu, gv, gw))
    out = (tpl[u1i, v1i, w1i] * gu * gv * gw + tpl[u1i, v1i, w2i] * gu * gv * fw
           + tpl[u1i, v2i, w1i] * gu * fv * gw + tpl[u1i, v2i, w2i] * gu * fv * fw
           + tpl[u2i, v1i, w1i] * fu * gv * gw + tpl[u2i, v1i, w2i] * fu * gv * fw
           + tpl[u2i, v2i, w1i] * fu * fv * gw + tpl[u2i, v2i, w2i] * fu * fv * fw)
    return out.reshape(bts, 1, g, g, g)


def _reference_forward(params, template, z, *, gs, dsf, ntp):
    bts = z.shape[0]
    dgs = gs // dsf
    ig = int(dgs * 2 ** (-4))
    hp = jax.lax.Precision.HIGHEST

    h = jnp.tanh(jnp.dot(z, params['w1'], precision=hp))
    h = jnp.tanh(jnp.dot(h, params['w2'], precision=hp))
    h = jnp.tanh(jnp.dot(h, params['w3'], precision=hp))
    x = h.reshape(bts, 32, ig, ig, ig)

    def up(x, w, act):
        B, D = x.shape[0], x.shape[2]
        O = w.shape[1]
        y = jnp.einsum('bcijk,codef->boidjekf', x, w, precision=hp)
        y = y.reshape(B, O, 2 * D, 2 * D, 2 * D)
        return jnp.tanh(y) if act else y

    x = up(x, params['up1'], True)
    x = up(x, params['up2'], True)
    x = up(x, params['up3'], True)
    vfield = up(x, params['up4'], False)

    sigma = 0.5
    ks = int(5.0 * sigma + 0.5)
    coords = np.arange(ks, dtype=np.float64)
    gm = np.stack(np.meshgrid(coords, coords, coords, indexing='ij'), -1)
    w3d = np.exp(-np.sum((gm - (ks - 1) / 2.0) ** 2, -1) / (2.0 * sigma ** 2))
    w3d = (w3d / w3d.sum()).astype(np.float32)
    ssum = jnp.sum(vfield, axis=1)
    spad = jnp.pad(ssum, ((0, 0), (1, 1), (1, 1), (1, 1)))
    sm = jnp.zeros_like(ssum)
    for a in range(ks):
        for b in range(ks):
            for c in range(ks):
                sm = sm + float(w3d[a, b, c]) * spad[:, a:a + dgs, b:b + dgs, c:c + dgs]
    v = jnp.broadcast_to(sm[:, None], (bts, 3, dgs, dgs, dgs))

    lin = jnp.linspace(0.0, gs - 1.0, dgs)
    gi, gj, gk = jnp.meshgrid(lin, lin, lin, indexing='ij')
    grid = jnp.broadcast_to(jnp.stack([gi, gj, gk], 0)[None], (bts, 3, dgs, dgs, dgs))
    v = v / float(2 ** ntp)
    for _ in range(ntp):
        v = v + _reference_vector_interpolation(v, grid + v, dsf)
    return sm, _reference_scalar_interpolation(template, grid + v)


# ----------------------------------------------------------------------------
# Deterministic parameter init + driver
# ----------------------------------------------------------------------------
def init_params(key, latent_dim, dgs):
    inner = int(dgs * 2 ** (-4))
    h = 32 * inner ** 3
    ks = jax.random.split(key, 7)
    scale = 0.2
    return {
        'w1': scale * jax.random.normal(ks[0], (latent_dim, h), jnp.float32),
        'w2': scale * jax.random.normal(ks[1], (h, h), jnp.float32),
        'w3': scale * jax.random.normal(ks[2], (h, h), jnp.float32),
        'up1': scale * jax.random.normal(ks[3], (32, 16, 2, 2, 2), jnp.float32),
        'up2': scale * jax.random.normal(ks[4], (16, 8, 2, 2, 2), jnp.float32),
        'up3': scale * jax.random.normal(ks[5], (8, 4, 2, 2, 2), jnp.float32),
        'up4': scale * jax.random.normal(ks[6], (4, 3, 2, 2, 2), jnp.float32),
    }


if __name__ == "__main__":
    # dimension=3, grid_size=32, downsampling_factor=2 -> downsampled=16,
    # latent_dimension=8, number_of_time_points=3, batch=2.
    GS, DSF, LATENT, NTP, BTS = 32, 2, 8, 3, 2
    DGS = GS // DSF

    key = jax.random.PRNGKey(0)
    k_par, k_tpl, k_z = jax.random.split(key, 3)
    params = init_params(k_par, LATENT, DGS)
    template = 255.0 * jax.random.uniform(k_tpl, (1, GS, GS, GS), jnp.float32)
    z = jax.random.normal(k_z, (BTS, LATENT), jnp.float32)

    # Weight preparation is hoisted: done once, outside the jitted hot path.
    prep = prepare_decoder_params(params, DGS)

    fwd = jax.jit(functools.partial(bayesian_atlas_forward, gs=GS, dsf=DSF, ntp=NTP))
    out = jax.block_until_ready(fwd(prep, template, z))
    assert out.shape == (BTS, 1, GS, GS, GS), out.shape
    assert bool(jnp.all(jnp.isfinite(out)))

    # Correctness self-check against a pure-JAX/XLA reference of the same forward.
    # NOTE: in-kernel jnp.dot uses the MXU default f32 path; the reference uses
    # Precision.HIGHEST, hence the loose (but previously validated) tolerances.
    v_pal = jax.block_until_ready(
        jax.jit(functools.partial(decode_velocity, gs=GS, dsf=DSF))(prep, z))
    v_ref, out_ref = jax.jit(
        functools.partial(_reference_forward, gs=GS, dsf=DSF, ntp=NTP))(params, template, z)
    v_ref, out_ref = jax.block_until_ready((v_ref, out_ref))
    assert float(jnp.max(jnp.abs(v_pal - v_ref))) < 3e-2
    assert float(jnp.max(jnp.abs(out - out_ref))) < 1.0

    print("KERNEL_OK")
</pallas_src>

<mosaic_0001>
module attributes {stable_mosaic.version = 11 : i64} {
  func.func @_decoder_kernel(%arg0: i32, %arg1: memref<2x8xf32, #tpu.memory_space<vmem>>, %arg2: memref<8x32xf32, #tpu.memory_space<vmem>>, %arg3: memref<32x32xf32, #tpu.memory_space<vmem>>, %arg4: memref<32x32xf32, #tpu.memory_space<vmem>>, %arg5: memref<32x128xf32, #tpu.memory_space<vmem>>, %arg6: memref<16x64xf32, #tpu.memory_space<vmem>>, %arg7: memref<64x256xf32, #tpu.memory_space<vmem>>, %arg8: memref<256x512xf32, #tpu.memory_space<vmem>>, %arg9: memref<16x512xf32, #tpu.memory_space<vmem>>, %arg10: memref<2x128xf32, #tpu.memory_space<vmem>>, %arg11: memref<16x16xf32, #tpu.memory_space<vmem>>) attributes {dimension_semantics = [#tpu.dimension_semantics<arbitrary>], iteration_bounds = array<i64: 1>, scalar_prefetch = 0 : i64, scratch_operands = 2 : i64, tpu.core_type = #tpu.core_type<tc>, window_params = [{pipeline_mode = #tpu.pipeline_mode<synchronous>, transform_indices = @transform_0, window_bounds = array<i64: 2, 8>}, {pipeline_mode = #tpu.pipeline_mode<synchronous>, transform_indices = @transform_1, window_bounds = array<i64: 8, 32>}, {pipeline_mode = #tpu.pipeline_mode<synchronous>, transform_indices = @transform_2, window_bounds = array<i64: 32, 32>}, {pipeline_mode = #tpu.pipeline_mode<synchronous>, transform_indices = @transform_3, window_bounds = array<i64: 32, 32>}, {pipeline_mode = #tpu.pipeline_mode<synchronous>, transform_indices = @transform_4, window_bounds = array<i64: 32, 128>}, {pipeline_mode = #tpu.pipeline_mode<synchronous>, transform_indices = @transform_5, window_bounds = array<i64: 16, 64>}, {pipeline_mode = #tpu.pipeline_mode<synchronous>, transform_indices = @transform_6, window_bounds = array<i64: 64, 256>}, {pipeline_mode = #tpu.pipeline_mode<synchronous>, transform_indices = @transform_7, window_bounds = array<i64: 256, 512>}, {pipeline_mode = #tpu.pipeline_mode<synchronous>, transform_indices = @transform_8, window_bounds = array<i64: 16, 512>}]} {
    %c0 = arith.constant 0 : index
    %c0_0 = arith.constant 0 : index
    %0 = vector.load %arg1[%c0, %c0_0] : memref<2x8xf32, #tpu.memory_space<vmem>>, vector<2x8xf32>
    %c0_1 = arith.constant 0 : index
    %c0_2 = arith.constant 0 : index
    %1 = vector.load %arg2[%c0_1, %c0_2] : memref<8x32xf32, #tpu.memory_space<vmem>>, vector<8x32xf32>
    %cst = arith.constant dense<0.000000e+00> : vector<2x32xf32>
    %2 = tpu.matmul %0, %1, %cst {dimension_numbers = #tpu.dot_dimension_numbers<[1], [0], [0], [1], [0, 0, 1, 1], [], []>} : vector<2x8xf32>, vector<8x32xf32>, vector<2x32xf32> -> vector<2x32xf32>
    %3 = math.tanh %2 : vector<2x32xf32>
    %c0_3 = arith.constant 0 : index
    %c0_4 = arith.constant 0 : index
    %4 = vector.load %arg3[%c0_3, %c0_4] : memref<32x32xf32, #tpu.memory_space<vmem>>, vector<32x32xf32>
    %cst_5 = arith.constant dense<0.000000e+00> : vector<2x32xf32>
    %5 = tpu.matmul %3, %4, %cst_5 {dimension_numbers = #tpu.dot_dimension_numbers<[1], [0], [0], [1], [0, 0, 1, 1], [], []>} : vector<2x32xf32>, vector<32x32xf32>, vector<2x32xf32> -> vector<2x32xf32>
    %6 = math.tanh %5 : vector<2x32xf32>
    %c0_6 = arith.constant 0 : index
    %c0_7 = arith.constant 0 : index
    %7 = vector.load %arg4[%c0_6, %c0_7] : memref<32x32xf32, #tpu.memory_space<vmem>>, vector<32x32xf32>
    %cst_8 = arith.constant dense<0.000000e+00> : vector<2x32xf32>
    %8 = tpu.matmul %6, %7, %cst_8 {dimension_numbers = #tpu.dot_dimension_numbers<[1], [0], [0], [1], [0, 0, 1, 1], [], []>} : vector<2x32xf32>, vector<32x32xf32>, vector<2x32xf32> -> vector<2x32xf32>
    %9 = math.tanh %8 : vector<2x32xf32>
    %c0_9 = arith.constant 0 : index
    %c0_10 = arith.constant 0 : index
    %10 = vector.load %arg5[%c0_9, %c0_10] : memref<32x128xf32, #tpu.memory_space<vmem>>, vector<32x128xf32>
    %cst_11 = arith.constant dense<0.000000e+00> : vector<2x128xf32>
    %11 = tpu.matmul %9, %10, %cst_11 {dimension_numbers = #tpu.dot_dimension_numbers<[1], [0], [0], [1], [0, 0, 1, 1], [], []>} : vector<2x32xf32>, vector<32x128xf32>, vector<2x128xf32> -> vector<2x128xf32>
    %12 = math.tanh %11 : vector<2x128xf32>
    %c0_12 = arith.constant 0 : index
    %c0_13 = arith.constant 0 : index
    %13 = vector.load %arg10[%c0_12, %c0_13] : memref<2x128xf32, #tpu.memory_space<vmem>>, vector<2x128xf32>
    tpu.vector_store %arg10[%c0_12, %c0_13], %12 {strides = array<i32>} : memref<2x128xf32, #tpu.memory_space<vmem>>, vector<2x128xf32>,
    %c0_14 = arith.constant 0 : index
    %c0_15 = arith.constant 0 : index
    %14 = vector.load %arg10[%c0_14, %c0_15] : memref<2x128xf32, #tpu.memory_space<vmem>>, vector<2x16xf32>
    %c0_16 = arith.constant 0 : index
    %c0_17 = arith.constant 0 : index
    %15 = vector.load %arg11[%c0_16, %c0_17] : memref<16x16xf32, #tpu.memory_space<vmem>>, vector<2x16xf32>
    tpu.vector_store %arg11[%c0_16, %c0_17], %14 {strides = array<i32>} : memref<16x16xf32, #tpu.memory_space<vmem>>, vector<2x16xf32>,
    %c0_18 = arith.constant 0 : index
    %c16 = arith.constant 16 : index
    %16 = vector.load %arg10[%c0_18, %c16] : memref<2x128xf32, #tpu.memory_space<vmem>>, vector<2x16xf32>
    %c2 = arith.constant 2 : index
    %c0_19 = arith.constant 0 : index
    %17 = vector.load %arg11[%c2, %c0_19] : memref<16x16xf32, #tpu.memory_space<vmem>>, vector<2x16xf32>
    tpu.vector_store %arg11[%c2, %c0_19], %16 {strides = array<i32>} : memref<16x16xf32, #tpu.memory_space<vmem>>, vector<2x16xf32>,
    %c0_20 = arith.constant 0 : index
    %c32 = arith.constant 32 : index
    %18 = vector.load %arg10[%c0_20, %c32] : memref<2x128xf32, #tpu.memory_space<vmem>>, vector<2x16xf32>
    %c4 = arith.constant 4 : index
    %c0_21 = arith.constant 0 : index
    %19 = vector.load %arg11[%c4, %c0_21] : memref<16x16xf32, #tpu.memory_space<vmem>>, vector<2x16xf32>
    tpu.vector_store %arg11[%c4, %c0_21], %18 {strides = array<i32>} : memref<16x16xf32, #tpu.memory_space<vmem>>, vector<2x16xf32>,
    %c0_22 = arith.constant 0 : index
    %c48 = arith.constant 48 : index
    %20 = vector.load %arg10[%c0_22, %c48] : memref<2x128xf32, #tpu.memory_space<vmem>>, vector<2x16xf32>
    %c6 = arith.constant 6 : index
    %c0_23 = arith.constant 0 : index
    %21 = vector.load %arg11[%c6, %c0_23] : memref<16x16xf32, #tpu.memory_space<vmem>>, vector<2x16xf32>
    tpu.vector_store %arg11[%c6, %c0_23], %20 {strides = array<i32>} : memref<16x16xf32, #tpu.memory_space<vmem>>, vector<2x16xf32>,
    %c0_24 = arith.constant 0 : index
    %c64 = arith.constant 64 : index
    %22 = vector.load %arg10[%c0_24, %c64] : memref<2x128xf32, #tpu.memory_space<vmem>>, vector<2x16xf32>
    %c8 = arith.constant 8 : index
    %c0_25 = arith.constant 0 : index
    %23 = vector.load %arg11[%c8, %c0_25] : memref<16x16xf32, #tpu.memory_space<vmem>>, vector<2x16xf32>
    tpu.vector_store %arg11[%c8, %c0_25], %22 {strides = array<i32>} : memref<16x16xf32, #tpu.memory_space<vmem>>, vector<2x16xf32>,
    %c0_26 = arith.constant 0 : index
    %c80 = arith.constant 80 : index
    %24 = vector.load %arg10[%c0_26, %c80] : memref<2x128xf32, #tpu.memory_space<vmem>>, vector<2x16xf32>
    %c10 = arith.constant 10 : index
    %c0_27 = arith.constant 0 : index
    %25 = vector.load %arg11[%c10, %c0_27] : memref<16x16xf32, #tpu.memory_space<vmem>>, vector<2x16xf32>
    tpu.vector_store %arg11[%c10, %c0_27], %24 {strides = array<i32>} : memref<16x16xf32, #tpu.memory_space<vmem>>, vector<2x16xf32>,
    %c0_28 = arith.constant 0 : index
    %c96 = arith.constant 96 : index
    %26 = vector.load %arg10[%c0_28, %c96] : memref<2x128xf32, #tpu.memory_space<vmem>>, vector<2x16xf32>
    %c12 = arith.constant 12 : index
    %c0_29 = arith.constant 0 : index
    %27 = vector.load %arg11[%c12, %c0_29] : memref<16x16xf32, #tpu.memory_space<vmem>>, vector<2x16xf32>
    tpu.vector_store %arg11[%c12, %c0_29], %26 {strides = array<i32>} : memref<16x16xf32, #tpu.memory_space<vmem>>, vector<2x16xf32>,
    %c0_30 = arith.constant 0 : index
    %c112 = arith.constant 112 : index
    %28 = vector.load %arg10[%c0_30, %c112] : memref<2x128xf32, #tpu.memory_space<vmem>>, vector<2x16xf32>
    %c14 = arith.constant 14 : index
    %c0_31 = arith.constant 0 : index
    %29 = vector.load %arg11[%c14, %c0_31] : memref<16x16xf32, #tpu.memory_space<vmem>>, vector<2x16xf32>
    tpu.vector_store %arg11[%c14, %c0_31], %28 {strides = array<i32>} : memref<16x16xf32, #tpu.memory_space<vmem>>, vector<2x16xf32>,
    %c0_32 = arith.constant 0 : index
    %c0_33 = arith.constant 0 : index
    %30 = vector.load %arg11[%c0_32, %c0_33] : memref<16x16xf32, #tpu.memory_space<vmem>>, vector<16x16xf32>
    %c0_34 = arith.constant 0 : index
    %c0_35 = arith.constant 0 : index
    %31 = vector.load %arg6[%c0_34, %c0_35] : memref<16x64xf32, #tpu.memory_space<vmem>>, vector<16x64xf32>
    %cst_36 = arith.constant dense<0.000000e+00> : vector<16x64xf32>
    %32 = tpu.matmul %30, %31, %cst_36 {dimension_numbers = #tpu.dot_dimension_numbers<[1], [0], [0], [1], [0, 0, 1, 1], [], []>} : vector<16x16xf32>, vector<16x64xf32>, vector<16x64xf32> -> vector<16x64xf32>
    %33 = math.tanh %32 : vector<16x64xf32>
    %c0_37 = arith.constant 0 : index
    %c0_38 = arith.constant 0 : index
    %34 = vector.load %arg7[%c0_37, %c0_38] : memref<64x256xf32, #tpu.memory_space<vmem>>, vector<64x256xf32>
    %cst_39 = arith.constant dense<0.000000e+00> : vector<16x256xf32>
    %35 = tpu.matmul %33, %34, %cst_39 {dimension_numbers = #tpu.dot_dimension_numbers<[1], [0], [0], [1], [0, 0, 1, 1], [], []>} : vector<16x64xf32>, vector<64x256xf32>, vector<16x256xf32> -> vector<16x256xf32>
    %36 = math.tanh %35 : vector<16x256xf32>
    %c0_40 = arith.constant 0 : index
    %c0_41 = arith.constant 0 : index
    %37 = vector.load %arg8[%c0_40, %c0_41] : memref<256x512xf32, #tpu.memory_space<vmem>>, vector<256x512xf32>
    %cst_42 = arith.constant dense<0.000000e+00> : vector<16x512xf32>
    %38 = tpu.matmul %36, %37, %cst_42 {dimension_numbers = #tpu.dot_dimension_numbers<[1], [0], [0], [1], [0, 0, 1, 1], [], []>} : vector<16x256xf32>, vector<256x512xf32>, vector<16x512xf32> -> vector<16x512xf32>
    %c0_43 = arith.constant 0 : index
    %c0_44 = arith.constant 0 : index
    %39 = vector.load %arg9[%c0_43, %c0_44] : memref<16x512xf32, #tpu.memory_space<vmem>>, vector<16x512xf32>
    tpu.vector_store %arg9[%c0_43, %c0_44], %38 {strides = array<i32>} : memref<16x512xf32, #tpu.memory_space<vmem>>, vector<16x512xf32>,
    return
  }
  func.func @transform_0(%arg0: i32) -> (i32, i32) {
    %c0_i32 = arith.constant 0 : i32
    %c0_i32_0 = arith.constant 0 : i32
    %c0_i32_1 = arith.constant 0 : i32
    return %c0_i32, %c0_i32_0 : i32, i32
  }
  func.func @transform_1(%arg0: i32) -> (i32, i32) {
    %c0_i32 = arith.constant 0 : i32
    %c0_i32_0 = arith.constant 0 : i32
    %c0_i32_1 = arith.constant 0 : i32
    return %c0_i32, %c0_i32_0 : i32, i32
  }
  func.func @transform_2(%arg0: i32) -> (i32, i32) {
    %c0_i32 = arith.constant 0 : i32
    %c0_i32_0 = arith.constant 0 : i32
    %c0_i32_1 = arith.constant 0 : i32
    return %c0_i32, %c0_i32_0 : i32, i32
  }
  func.func @transform_3(%arg0: i32) -> (i32, i32) {
    %c0_i32 = arith.constant 0 : i32
    %c0_i32_0 = arith.constant 0 : i32
    %c0_i32_1 = arith.constant 0 : i32
    return %c0_i32, %c0_i32_0 : i32, i32
  }
  func.func @transform_4(%arg0: i32) -> (i32, i32) {
    %c0_i32 = arith.constant 0 : i32
    %c0_i32_0 = arith.constant 0 : i32
    %c0_i32_1 = arith.constant 0 : i32
    return %c0_i32, %c0_i32_0 : i32, i32
  }
  func.func @transform_5(%arg0: i32) -> (i32, i32) {
    %c0_i32 = arith.constant 0 : i32
    %c0_i32_0 = arith.constant 0 : i32
    %c0_i32_1 = arith.constant 0 : i32
    return %c0_i32, %c0_i32_0 : i32, i32
  }
  func.func @transform_6(%arg0: i32) -> (i32, i32) {
    %c0_i32 = arith.constant 0 : i32
    %c0_i32_0 = arith.constant 0 : i32
    %c0_i32_1 = arith.constant 0 : i32
    return %c0_i32, %c0_i32_0 : i32, i32
  }
  func.func @transform_7(%arg0: i32) -> (i32, i32) {
    %c0_i32 = arith.constant 0 : i32
    %c0_i32_0 = arith.constant 0 : i32
    %c0_i32_1 = arith.constant 0 : i32
    return %c0_i32, %c0_i32_0 : i32, i32
  }
  func.func @transform_8(%arg0: i32) -> (i32, i32) {
    %c0_i32 = arith.constant 0 : i32
    %c0_i32_0 = arith.constant 0 : i32
    %c0_i32_1 = arith.constant 0 : i32
    return %c0_i32, %c0_i32_0 : i32, i32
  }
}

module attributes {stable_mosaic.version = 11 : i64} {
  func.func @_smooth_kernel(%arg0: i32, %arg1: memref<1x18x288xf32, #tpu.memory_space<vmem>>, %arg2: memref<1x16x256xf32, #tpu.memory_space<vmem>>, %arg3: memref<1x18x288xf32, #tpu.memory_space<vmem>>) attributes {dimension_semantics = [#tpu.dimension_semantics<parallel>], iteration_bounds = array<i64: 2>, scalar_prefetch = 0 : i64, scratch_operands = 1 : i64, tpu.core_type = #tpu.core_type<tc>, window_params = [{transform_indices = @transform_0, window_bounds = array<i64: 1, 18, 288>}, {transform_indices = @transform_1, window_bounds = array<i64: 1, 16, 256>}]} {
    %c0 = arith.constant 0 : index
    %c0_0 = arith.constant 0 : index
    %c16 = arith.constant 16 : index
    %0 = vector.load %arg1[%c0, %c0_0, %c16] : memref<1x18x288xf32, #tpu.memory_space<vmem>>, vector<1x18x256xf32>
    %1 = tpu.iota {dimensions = array<i32: 2>} : vector<1x18x256xi32>
    %c16_i32 = arith.constant 16 : i32
    %c0_i32 = arith.constant 0 : i32
    %2 = arith.cmpi eq, %c16_i32, %c0_i32 : i32
    %c1_i32 = arith.constant 1 : i32
    %3 = arith.select %2, %c1_i32, %c16_i32 : i32
    %4 = vector.broadcast %3 : i32 to vector<1x18x256xi32>
    %5 = arith.remsi %1, %4 : vector<1x18x256xi32>
    %c0_i32_1 = arith.constant 0 : i32
    %6 = vector.broadcast %c0_i32_1 : i32 to vector<1x18x256xi32>
    %7 = arith.cmpi ne, %5, %6 : vector<1x18x256xi32>
    %c0_i32_2 = arith.constant 0 : i32
    %8 = vector.broadcast %c0_i32_2 : i32 to vector<1x18x256xi32>
    %9 = arith.cmpi slt, %5, %8 : vector<1x18x256xi32>
    %c0_i32_3 = arith.constant 0 : i32
    %10 = arith.cmpi slt, %3, %c0_i32_3 : i32
    %11 = vector.broadcast %10 : i1 to vector<1x18x256xi1>
    %12 = vector.broadcast %11 : vector<1x18x256xi1> to vector<1x18x256xi1>
    %13 = arith.xori %9, %12 : vector<1x18x256xi1>
    %14 = arith.andi %13, %7 : vector<1x18x256xi1>
    %15 = vector.broadcast %3 : i32 to vector<1x18x256xi32>
    %16 = arith.addi %5, %15 : vector<1x18x256xi32>
    %17 = arith.select %14, %16, %5 : vector<1x18x256xi1>, vector<1x18x256xi32>
    %c0_i32_4 = arith.constant 0 : i32
    %18 = vector.broadcast %c0_i32_4 : i32 to vector<1x18x256xi32>
    %19 = arith.cmpi eq, %17, %18 : vector<1x18x256xi32>
    %c0_5 = arith.constant 0 : index
    %c0_6 = arith.constant 0 : index
    %c15 = arith.constant 15 : index
    %20 = vector.load %arg1[%c0_5, %c0_6, %c15] : memref<1x18x288xf32, #tpu.memory_space<vmem>>, vector<1x18x256xf32>
    %cst = arith.constant 0.000000e+00 : f32
    %21 = vector.broadcast %cst : f32 to vector<1x18x256xf32>
    %22 = arith.select %19, %21, %20 : vector<1x18x256xi1>, vector<1x18x256xf32>
    %c15_i32 = arith.constant 15 : i32
    %23 = vector.broadcast %c15_i32 : i32 to vector<1x18x256xi32>
    %24 = arith.cmpi eq, %17, %23 : vector<1x18x256xi32>
    %c0_7 = arith.constant 0 : index
    %c0_8 = arith.constant 0 : index
    %c17 = arith.constant 17 : index
    %25 = vector.load %arg1[%c0_7, %c0_8, %c17] : memref<1x18x288xf32, #tpu.memory_space<vmem>>, vector<1x18x256xf32>
    %cst_9 = arith.constant 0.000000e+00 : f32
    %26 = vector.broadcast %cst_9 : f32 to vector<1x18x256xf32>
    %27 = arith.select %24, %26, %25 : vector<1x18x256xi1>, vector<1x18x256xf32>
    %cst_10 = arith.constant 0.786986052 : f32
    %28 = vector.broadcast %cst_10 : f32 to vector<1x18x256xf32>
    %29 = arith.mulf %28, %0 : vector<1x18x256xf32>
    %30 = arith.addf %22, %27 : vector<1x18x256xf32>
    %cst_11 = arith.constant 0.106506981 : f32
    %31 = vector.broadcast %cst_11 : f32 to vector<1x18x256xf32>
    %32 = arith.mulf %31, %30 : vector<1x18x256xf32>
    %33 = arith.addf %29, %32 : vector<1x18x256xf32>
    %cst_12 = arith.constant 0.000000e+00 : f32
    %34 = vector.broadcast %cst_12 : f32 to vector<1x18x16xf32>
    %c0_13 = arith.constant 0 : index
    %c0_14 = arith.constant 0 : index
    %c0_15 = arith.constant 0 : index
    %35 = vector.load %arg3[%c0_13, %c0_14, %c0_15] : memref<1x18x288xf32, #tpu.memory_space<vmem>>, vector<1x18x16xf32>
    tpu.vector_store %arg3[%c0_13, %c0_14, %c0_15], %34 {strides = array<i32>} : memref<1x18x288xf32, #tpu.memory_space<vmem>>, vector<1x18x16xf32>,
    %c0_16 = arith.constant 0 : index
    %c0_17 = arith.constant 0 : index
    %c272 = arith.constant 272 : index
    %36 = vector.load %arg3[%c0_16, %c0_17, %c272] : memref<1x18x288xf32, #tpu.memory_space<vmem>>, vector<1x18x16xf32>
    tpu.vector_store %arg3[%c0_16, %c0_17, %c272], %34 {strides = array<i32>} : memref<1x18x288xf32, #tpu.memory_space<vmem>>, vector<1x18x16xf32>,
    %c0_18 = arith.constant 0 : index
    %c0_19 = arith.constant 0 : index
    %c16_20 = arith.constant 16 : index
    %37 = vector.load %arg3[%c0_18, %c0_19, %c16_20] : memref<1x18x288xf32, #tpu.memory_space<vmem>>, vector<1x18x256xf32>
    tpu.vector_store %arg3[%c0_18, %c0_19, %c16_20], %33 {strides = array<i32>} : memref<1x18x288xf32, #tpu.memory_space<vmem>>, vector<1x18x256xf32>,
    %cst_21 = arith.constant 0.786986052 : f32
    %38 = vector.broadcast %cst_21 : f32 to vector<1x18x256xf32>
    %39 = arith.mulf %38, %33 : vector<1x18x256xf32>
    %c0_22 = arith.constant 0 : index
    %c0_23 = arith.constant 0 : index
    %c0_24 = arith.constant 0 : index
    %40 = vector.load %arg3[%c0_22, %c0_23, %c0_24] : memref<1x18x288xf32, #tpu.memory_space<vmem>>, vector<1x18x256xf32>
    %c0_25 = arith.constant 0 : index
    %c0_26 = arith.constant 0 : index
    %c32 = arith.constant 32 : index
    %41 = vector.load %arg3[%c0_25, %c0_26, %c32] : memref<1x18x288xf32, #tpu.memory_space<vmem>>, vector<1x18x256xf32>
    %42 = arith.addf %40, %41 : vector<1x18x256xf32>
    %cst_27 = arith.constant 0.106506981 : f32
    %43 = vector.broadcast %cst_27 : f32 to vector<1x18x256xf32>
    %44 = arith.mulf %43, %42 : vector<1x18x256xf32>
    %45 = arith.addf %39, %44 : vector<1x18x256xf32>
    %c0_28 = arith.constant 0 : index
    %c0_29 = arith.constant 0 : index
    %c16_30 = arith.constant 16 : index
    %46 = vector.load %arg3[%c0_28, %c0_29, %c16_30] : memref<1x18x288xf32, #tpu.memory_space<vmem>>, vector<1x18x256xf32>
    tpu.vector_store %arg3[%c0_28, %c0_29, %c16_30], %45 {strides = array<i32>} : memref<1x18x288xf32, #tpu.memory_space<vmem>>, vector<1x18x256xf32>,
    %c0_31 = arith.constant 0 : index
    %c1 = arith.constant 1 : index
    %c16_32 = arith.constant 16 : index
    %47 = vector.load %arg3[%c0_31, %c1, %c16_32] : memref<1x18x288xf32, #tpu.memory_space<vmem>>, vector<1x16x256xf32>
    %cst_33 = arith.constant 0.786986052 : f32
    %48 = vector.broadcast %cst_33 : f32 to vector<1x16x256xf32>
    %49 = arith.mulf %48, %47 : vector<1x16x256xf32>
    %c0_34 = arith.constant 0 : index
    %c0_35 = arith.constant 0 : index
    %c16_36 = arith.constant 16 : index
    %50 = vector.load %arg3[%c0_34, %c0_35, %c16_36] : memref<1x18x288xf32, #tpu.memory_space<vmem>>, vector<1x16x256xf32>
    %c0_37 = arith.constant 0 : index
    %c2 = arith.constant 2 : index
    %c16_38 = arith.constant 16 : index
    %51 = vector.load %arg3[%c0_37, %c2, %c16_38] : memref<1x18x288xf32, #tpu.memory_space<vmem>>, vector<1x16x256xf32>
    %52 = arith.addf %50, %51 : vector<1x16x256xf32>
    %cst_39 = arith.constant 0.106506981 : f32
    %53 = vector.broadcast %cst_39 : f32 to vector<1x16x256xf32>
    %54 = arith.mulf %53, %52 : vector<1x16x256xf32>
    %55 = arith.addf %49, %54 : vector<1x16x256xf32>
    %c0_40 = arith.constant 0 : index
    %c0_41 = arith.constant 0 : index
    %c0_42 = arith.constant 0 : index
    %56 = vector.load %arg2[%c0_40, %c0_41, %c0_42] : memref<1x16x256xf32, #tpu.memory_space<vmem>>, vector<1x16x256xf32>
    tpu.vector_store %arg2[%c0_40, %c0_41, %c0_42], %55 {strides = array<i32>} : memref<1x16x256xf32, #tpu.memory_space<vmem>>, vector<1x16x256xf32>,
    return
  }
  func.func @transform_0(%arg0: i32) -> (i32, i32, i32) {
    %c0_i32 = arith.constant 0 : i32
    %c0_i32_0 = arith.constant 0 : i32
    %c0_i32_1 = arith.constant 0 : i32
    return %arg0, %c0_i32, %c0_i32_0 : i32, i32, i32
  }
  func.func @transform_1(%arg0: i32) -> (i32, i32, i32) {
    %c0_i32 = arith.constant 0 : i32
    %c0_i32_0 = arith.constant 0 : i32
    %c0_i32_1 = arith.constant 0 : i32
    return %arg0, %c0_i32, %c0_i32_0 : i32, i32, i32
  }
}

</mosaic_0001>

<llo_original>
// kernel: bayesian_atlas_forward.2
$region0: #{bayesian_atlas_forward.2}
  #allocation0 [shape = 'u32[]', space=smem, size = 0x4, offset = 0x4, fixed_abs, tag = 'smem constant byte address 0x4 - core index']
  #allocation1 [shape = 'u32[144,128]{1,0:T(1,128)}', space=vmem, size = 0x12000, scoped, tag = 'internal scratch']
  #allocation2 [shape = 'f32[2,128]{1,0:T(2,128)}', space=vmem, size = 0x400, scoped, tag = 'scratch operand']
  #allocation3 [shape = 'f32[16,16]{1,0:T(8,128)}', space=vmem, size = 0x2000, scoped, tag = 'scratch operand']
  %s0 = inlined_call_operand.hbm [shape: f32[2,8], index: 0, kind: input, shape index: {}]
  %s1 = inlined_call_operand.hbm [shape: f32[8,32], index: 1, kind: input, shape index: {}]
  %s2 = inlined_call_operand.hbm [shape: f32[32,32], index: 2, kind: input, shape index: {}]
  %s3 = inlined_call_operand.hbm [shape: f32[32,32], index: 3, kind: input, shape index: {}]
  %s4 = inlined_call_operand.hbm [shape: f32[32,128], index: 4, kind: input, shape index: {}]
  %s5 = inlined_call_operand.hbm [shape: f32[16,64], index: 5, kind: input, shape index: {}]
  %s6 = inlined_call_operand.hbm [shape: f32[64,256], index: 6, kind: input, shape index: {}]
  %s7 = inlined_call_operand.hbm [shape: f32[256,512], index: 7, kind: input, shape index: {}]
  %s8 = inlined_call_operand.vmem [shape: f32[16,512], index: 8, kind: output, shape index: {}]
  %s9 = sld [smem:[#allocation0]]
  $region74: #{bayesian_atlas_forward.2} parent=0
    _
  %s11 = ssub.s32 1, %s9
  %s12 = scalar_select 0, %s11, %s9
  $region1: #{bayesian_atlas_forward.2} parent=0
    #allocation4 [shape = 'u8[1024]{0}', space=vmem, size = 0x400, scoped, tag = 'input window, operand 0, single buffered']
    #allocation5 [shape = 's32[1]{0}', space=sflag, size = 0x4, scoped, tag = 'scoped memory for bayesian_atlas_forward.2']
    #allocation6 [shape = 'u8[4096]{0}', space=vmem, size = 0x1000, scoped, tag = 'input window, operand 1, single buffered']
    #allocation7 [shape = 's32[1]{0}', space=sflag, size = 0x4, scoped, tag = 'scoped memory for bayesian_atlas_forward.2']
    #allocation8 [shape = 'u8[16384]{0}', space=vmem, size = 0x4000, scoped, tag = 'input window, operand 2, single buffered']
    #allocation9 [shape = 'u8[16384]{0}', space=vmem, size = 0x4000, scoped, tag = 'input window, operand 3, single buffered']
    #allocation10 [shape = 's32[1]{0}', space=sflag, size = 0x4, scoped, tag = 'scoped memory for bayesian_atlas_forward.2']
    #allocation11 [shape = 'u8[16384]{0}', space=vmem, size = 0x4000, scoped, tag = 'input window, operand 4, single buffered']
    #allocation12 [shape = 'u8[8192]{0}', space=vmem, size = 0x2000, scoped, tag = 'input window, operand 5, single buffered']
    #allocation13 [shape = 's32[1]{0}', space=sflag, size = 0x4, scoped, tag = 'scoped memory for bayesian_atlas_forward.2']
    #allocation14 [shape = 'u8[65536]{0}', space=vmem, size = 0x10000, scoped, tag = 'input window, operand 6, single buffered']
    #allocation15 [shape = 'u8[524288]{0}', space=vmem, size = 0x80000, scoped, tag = 'input window, operand 7, single buffered']
    #allocation16 [shape = 's32[1]{0}', space=sflag, size = 0x4, scoped, tag = 'scoped memory for bayesian_atlas_forward.2']
    %13 = vsyncpa [#allocation5], 0
    %14 = vsyncpa [#allocation7], 0
    %15 = vsyncpa [#allocation10], 0
    %16 = vsyncpa [#allocation13], 0
    %17 = vsyncpa [#allocation16], 0
    // Predicated region
    $region2: #{bayesian_atlas_forward.2} parent=1 // pred_check
      _
    $region3: #{bayesian_atlas_forward.2} parent=1 // pred_check_branch
      %19 = sbr.rel (0) target = $region5
    $region4: #{bayesian_atlas_forward.2} parent=1 // pred_region
      %s21 = ssub.s32 32, 32
      %22 = vsyncadd [#allocation5], %s21
      %s24 = sshll.u32 [#allocation4], 4
      %s25 = int_to_ptr.vmem [resolvable:$true] %s24
      %27 = dma.hbm_to_vmem [thread:$0]  %s0, 32, %s25, [#allocation5]
    $region5: #{bayesian_atlas_forward.2} parent=1 // pred_fallthru
      _
    // Predicated region
    $region6: #{bayesian_atlas_forward.2} parent=1 // pred_check
      _
    $region7: #{bayesian_atlas_forward.2} parent=1 // pred_check_branch
      %29 = sbr.rel (0) target = $region9
    $region8: #{bayesian_atlas_forward.2} parent=1 // pred_region
      %s31 = ssub.s32 128, 128
      %32 = vsyncadd [#allocation7], %s31
      %s34 = sshll.u32 [#allocation6], 4
      %s35 = int_to_ptr.vmem [resolvable:$true] %s34
      %37 = dma.hbm_to_vmem [thread:$0]  %s1, 128, %s35, [#allocation7]
    $region9: #{bayesian_atlas_forward.2} parent=1 // pred_fallthru
      _
    // Predicated region
    $region10: #{bayesian_atlas_forward.2} parent=1 // pred_check
      _
    $region11: #{bayesian_atlas_forward.2} parent=1 // pred_check_branch
      %39 = sbr.rel (0) target = $region13
    $region12: #{bayesian_atlas_forward.2} parent=1 // pred_region
      %s41 = ssub.s32 512, 512
      %42 = vsyncadd [#allocation7], %s41
      %s43 = sshll.u32 [#allocation8], 4
      %s44 = int_to_ptr.vmem [resolvable:$true] %s43
      %49 = dma.hbm_to_vmem [thread:$0]  %s2, 512, %s44, [#allocation7], 128, 128, 8
    $region13: #{bayesian_atlas_forward.2} parent=1 // pred_fallthru
      _
    // Predicated region
    $region14: #{bayesian_atlas_forward.2} parent=1 // pred_check
      _
    $region15: #{bayesian_atlas_forward.2} parent=1 // pred_check_branch
      %51 = sbr.rel (0) target = $region17
    $region16: #{bayesian_atlas_forward.2} parent=1 // pred_region
      %s53 = ssub.s32 512, 512
      %54 = vsyncadd [#allocation10], %s53
      %s55 = sshll.u32 [#allocation9], 4
      %s56 = int_to_ptr.vmem [resolvable:$true] %s55
      %61 = dma.hbm_to_vmem [thread:$0]  %s3, 512, %s56, [#allocation10], 128, 128, 8
    $region17: #{bayesian_atlas_forward.2} parent=1 // pred_fallthru
      _
    // Predicated region
    $region18: #{bayesian_atlas_forward.2} parent=1 // pred_check
      _
    $region19: #{bayesian_atlas_forward.2} parent=1 // pred_check_branch
      %63 = sbr.rel (0) target = $region21
    $region20: #{bayesian_atlas_forward.2} parent=1 // pred_region
      %s65 = ssub.s32 512, 512
      %66 = vsyncadd [#allocation10], %s65
      %s67 = sshll.u32 [#allocation11], 4
      %s68 = int_to_ptr.vmem [resolvable:$true] %s67
      %73 = dma.hbm_to_vmem [thread:$0]  %s4, 512, %s68, [#allocation10], 128, 128, 8
    $region21: #{bayesian_atlas_forward.2} parent=1 // pred_fallthru
      _
    // Predicated region
    $region22: #{bayesian_atlas_forward.2} parent=1 // pred_check
      _
    $region23: #{bayesian_atlas_forward.2} parent=1 // pred_check_branch
      %75 = sbr.rel (0) target = $region25
    $region24: #{bayesian_atlas_forward.2} parent=1 // pred_region
      %s77 = ssub.s32 256, 256
      %78 = vsyncadd [#allocation13], %s77
      %s79 = sshll.u32 [#allocation12], 4
      %s80 = int_to_ptr.vmem [resolvable:$true] %s79
      %85 = dma.hbm_to_vmem [thread:$0]  %s5, 256, %s80, [#allocation13], 128, 128, 8
    $region25: #{bayesian_atlas_forward.2} parent=1 // pred_fallthru
      _
    // Predicated region
    $region26: #{bayesian_atlas_forward.2} parent=1 // pred_check
      _
    $region27: #{bayesian_atlas_forward.2} parent=1 // pred_check_branch
      %87 = sbr.rel (0) target = $region29
    $region28: #{bayesian_atlas_forward.2} parent=1 // pred_region
      %s89 = ssub.s32 2048, 2048
      %90 = vsyncadd [#allocation13], %s89
      %s91 = sshll.u32 [#allocation14], 4
      %s92 = int_to_ptr.vmem [resolvable:$true] %s91
      %97 = dma.hbm_to_vmem [thread:$0]  %s6, 2048, %s92, [#allocation13], 256, 256, 16
    $region29: #{bayesian_atlas_forward.2} parent=1 // pred_fallthru
      _
    // Predicated region
    $region30: #{bayesian_atlas_forward.2} parent=1 // pred_check
      _
    $region31: #{bayesian_atlas_forward.2} parent=1 // pred_check_branch
      %99 = sbr.rel (0) target = $region33
    $region32: #{bayesian_atlas_forward.2} parent=1 // pred_region
      %s101 = ssub.s32 16384, 16384
      %102 = vsyncadd [#allocation16], %s101
      %s103 = sshll.u32 [#allocation15], 4
      %s104 = int_to_ptr.vmem [resolvable:$true] %s103
      %109 = dma.hbm_to_vmem [thread:$0]  %s7, 16384, %s104, [#allocation16], 512, 512, 32
    $region33: #{bayesian_atlas_forward.2} parent=1 // pred_fallthru
      _
    // Predicated region
    $region34: #{bayesian_atlas_forward.2} parent=1 // pred_check
      _
    $region35: #{bayesian_atlas_forward.2} parent=1 // pred_check_branch
      %111 = sbr.rel (0) target = $region37
    $region36: #{bayesian_atlas_forward.2} parent=1 // pred_region
      %112 = dma.done [#allocation5], 32
    $region37: #{bayesian_atlas_forward.2} parent=1 // pred_fallthru
      _
    // Predicated region
    $region38: #{bayesian_atlas_forward.2} parent=1 // pred_check
      _
    $region39: #{bayesian_atlas_forward.2} parent=1 // pred_check_branch
      %114 = sbr.rel (0) target = $region41
    $region40: #{bayesian_atlas_forward.2} parent=1 // pred_region
      %115 = dma.done [#allocation7], 128
    $region41: #{bayesian_atlas_forward.2} parent=1 // pred_fallthru
      _
    // Predicated region
    $region42: #{bayesian_atlas_forward.2} parent=1 // pred_check
      _
    $region43: #{bayesian_atlas_forward.2} parent=1 // pred_check_branch
      %117 = sbr.rel (0) target = $region45
    $region44: #{bayesian_atlas_forward.2} parent=1 // pred_region
      %118 = dma.done [#allocation7], 512
    $region45: #{bayesian_atlas_forward.2} parent=1 // pred_fallthru
      _
    // Predicated region
    $region46: #{bayesian_atlas_forward.2} parent=1 // pred_check
      _
    $region47: #{bayesian_atlas_forward.2} parent=1 // pred_check_branch
      %120 = sbr.rel (0) target = $region49
    $region48: #{bayesian_atlas_forward.2} parent=1 // pred_region
      %121 = dma.done [#allocation10], 512
    $region49: #{bayesian_atlas_forward.2} parent=1 // pred_fallthru
      _
    // Predicated region
    $region50: #{bayesian_atlas_forward.2} parent=1 // pred_check
      _
    $region51: #{bayesian_atlas_forward.2} parent=1 // pred_check_branch
      %123 = sbr.rel (0) target = $region53
    $region52: #{bayesian_atlas_forward.2} parent=1 // pred_region
      %124 = dma.done [#allocation10], 512
    $region53: #{bayesian_atlas_forward.2} parent=1 // pred_fallthru
      _
    // Predicated region
    $region54: #{bayesian_atlas_forward.2} parent=1 // pred_check
      _
    $region55: #{bayesian_atlas_forward.2} parent=1 // pred_check_branch
      %126 = sbr.rel (0) target = $region57
    $region56: #{bayesian_atlas_forward.2} parent=1 // pred_region
      %127 = dma.done [#allocation13], 256
    $region57: #{bayesian_atlas_forward.2} parent=1 // pred_fallthru
      _
    // Predicated region
    $region58: #{bayesian_atlas_forward.2} parent=1 // pred_check
      _
    $region59: #{bayesian_atlas_forward.2} parent=1 // pred_check_branch
      %129 = sbr.rel (0) target = $region61
    $region60: #{bayesian_atlas_forward.2} parent=1 // pred_region
      %130 = dma.done [#allocation13], 2048
    $region61: #{bayesian_atlas_forward.2} parent=1 // pred_fallthru
      _
    // Predicated region
    $region62: #{bayesian_atlas_forward.2} parent=1 // pred_check
      _
    $region63: #{bayesian_atlas_forward.2} parent=1 // pred_check_branch
      %132 = sbr.rel (0) target = $region65
    $region64: #{bayesian_atlas_forward.2} parent=1 // pred_region
      %133 = dma.done [#allocation16], 16384
    $region65: #{bayesian_atlas_forward.2} parent=1 // pred_fallthru
      _
    %v134 = vld [vmem:[#allocation4] sm:$0x3]
    %v135 = vld [vmem:[#allocation6] sm:$0xff]
    %vm136 = vcmask 64512
    %v138 = vsel %vm136, %v134, 0
    %140 = vmatprep.subr.mxu0 0.0
    %141 = vmatpush1.msra.mxu0 %v135
    %142 = vmatprep.subr.mxu0 0.0
    %143 = vmatpush1.msra.mxu0 0.0
    %144 = vmatprep.subr.mxu0 0.0
    %145 = vmatpush1.msra.mxu0 0.0
    %146 = vmatprep.subr.mxu0 0.0
    %147 = vmatpush1.msra.mxu0 0.0
    %148 = vmatprep.subr.mxu0 0.0
    %149 = vmatpush1.msra.mxu0 0.0
    %150 = vmatprep.subr.mxu0 0.0
    %151 = vmatpush1.msra.mxu0 0.0
    %152 = vmatprep.subr.mxu0 0.0
    %153 = vmatpush1.msra.mxu0 0.0
    %154 = vmatprep.subr.mxu0 0.0
    %155 = vmatpush1.msra.mxu0 0.0
    %156 = vmatprep.subr.mxu0 0.0
    %157 = vmatpush1.msra.mxu0 0.0
    %158 = vmatprep.subr.mxu0 0.0
    %159 = vmatpush1.msra.mxu0 0.0
    %160 = vmatprep.subr.mxu0 0.0
    %161 = vmatpush1.msra.mxu0 0.0
    %162 = vmatprep.subr.mxu0 0.0
    %163 = vmatpush1.msra.mxu0 0.0
    %164 = vmatprep.subr.mxu0 0.0
    %165 = vmatpush1.msra.mxu0 0.0
    %166 = vmatprep.subr.mxu0 0.0
    %167 = vmatpush1.msra.mxu0 0.0
    %168 = vmatprep.subr.mxu0 0.0
    %169 = vmatpush1.msra.mxu0 0.0
    %170 = vmatprep.subr.mxu0 0.0
    %171 = vmatpush1.msra.mxu0 0.0
    %172 = vmatprep.subr.mxu0 0.0
    %173 = vmatpush1.msra.mxu0 0.0
    %174 = vmatprep.subr.mxu0 0.0
    %175 = vmatpush1.msra.mxu0 0.0
    %176 = vmatprep.subr.mxu0 0.0
    %177 = vmatpush1.msra.mxu0 0.0
    %178 = vmatprep.subr.mxu0 0.0
    %179 = vmatpush1.msra.mxu0 0.0
    %180 = vmatprep.subr.mxu0 0.0
    %181 = vmatpush1.msra.mxu0 0.0
    %182 = vmatprep.subr.mxu0 0.0
    %183 = vmatpush1.msra.mxu0 0.0
    %184 = vmatprep.subr.mxu0 0.0
    %185 = vmatpush1.msra.mxu0 0.0
    %186 = vmatprep.subr.mxu0 0.0
    %187 = vmatpush1.msra.mxu0 0.0
    %188 = vmatprep.subr.mxu0 0.0
    %189 = vmatpush1.msra.mxu0 0.0
    %190 = vmatprep.subr.mxu0 0.0
    %191 = vmatpush1.msra.mxu0 0.0
    %192 = vmatprep.subr.mxu0 0.0
    %193 = vmatpush1.msra.mxu0 0.0
    %194 = vmatprep.subr.mxu0 0.0
    %195 = vmatpush1.msra.mxu0 0.0
    %196 = vmatprep.subr.mxu0 0.0
    %197 = vmatpush1.msra.mxu0 0.0
    %198 = vmatprep.subr.mxu0 0.0
    %199 = vmatpush1.msra.mxu0 0.0
    %200 = vmatprep.subr.mxu0 0.0
    %201 = vmatpush1.msra.mxu0 0.0
    %202 = vmatprep.subr.mxu0 0.0
    %203 = vmatpush1.msra.mxu0 0.0
    %204 = vmatprep.mubr.f32.mxu0 0.0
    %205 = vmatmul.mubr.f32.gmra.mrb[0].mxu0 %v138
    %v206 = vpop.f32.mrb[0].mxu0
    %v207 = vadd.f32 0.0, %v206
    %v208 = vpop.f32.mrb[0].mxu0
    %209 = vdwg.mxu0
    %v210 = vtanh.pop %v207
    %v211 = vld [vmem:[#allocation8] sm:$0xff]
    %v212 = vld [vmem:[#allocation8 + $0x8] sm:$0xff]
    %v213 = vld [vmem:[#allocation8 + $0x10] sm:$0xff]
    %v214 = vld [vmem:[#allocation8 + $0x18] sm:$0xff]
    %vm215 = vcmask 261120
    %v217 = vsel %vm215, %v210, 0
    %219 = vmatprep.subr.mxu0 0.0
    %220 = vmatpush1.msra.mxu0 %v211
    %221 = vmatprep.subr.mxu0 0.0
    %222 = vmatpush1.msra.mxu0 %v212
    %223 = vmatprep.subr.mxu0 0.0
    %224 = vmatpush1.msra.mxu0 %v213
    %225 = vmatprep.subr.mxu0 0.0
    %226 = vmatpush1.msra.mxu0 %v214
    %227 = vmatprep.subr.mxu0 0.0
    %228 = vmatpush1.msra.mxu0 0.0
    %229 = vmatprep.subr.mxu0 0.0
    %230 = vmatpush1.msra.mxu0 0.0
    %231 = vmatprep.subr.mxu0 0.0
    %232 = vmatpush1.msra.mxu0 0.0
    %233 = vmatprep.subr.mxu0 0.0
    %234 = vmatpush1.msra.mxu0 0.0
    %235 = vmatprep.subr.mxu0 0.0
    %236 = vmatpush1.msra.mxu0 0.0
    %237 = vmatprep.subr.mxu0 0.0
    %238 = vmatpush1.msra.mxu0 0.0
    %239 = vmatprep.subr.mxu0 0.0
    %240 = vmatpush1.msra.mxu0 0.0
    %241 = vmatprep.subr.mxu0 0.0
    %242 = vmatpush1.msra.mxu0 0.0
    %243 = vmatprep.subr.mxu0 0.0
    %244 = vmatpush1.msra.mxu0 0.0
    %245 = vmatprep.subr.mxu0 0.0
    %246 = vmatpush1.msra.mxu0 0.0
    %247 = vmatprep.subr.mxu0 0.0
    %248 = vmatpush1.msra.mxu0 0.0
    %249 = vmatprep.subr.mxu0 0.0
    %250 = vmatpush1.msra.mxu0 0.0
    %251 = vmatprep.subr.mxu0 0.0
    %252 = vmatpush1.msra.mxu0 0.0
    %253 = vmatprep.subr.mxu0 0.0
    %254 = vmatpush1.msra.mxu0 0.0
    %255 = vmatprep.subr.mxu0 0.0
    %256 = vmatpush1.msra.mxu0 0.0
    %257 = vmatprep.subr.mxu0 0.0
    %258 = vmatpush1.msra.mxu0 0.0
    %259 = vmatprep.subr.mxu0 0.0
    %260 = vmatpush1.msra.mxu0 0.0
    %261 = vmatprep.subr.mxu0 0.0
    %262 = vmatpush1.msra.mxu0 0.0
    %263 = vmatprep.subr.mxu0 0.0
    %264 = vmatpush1.msra.mxu0 0.0
    %265 = vmatprep.subr.mxu0 0.0
    %266 = vmatpush1.msra.mxu0 0.0
    %267 = vmatprep.subr.mxu0 0.0
    %268 = vmatpush1.msra.mxu0 0.0
    %269 = vmatprep.subr.mxu0 0.0
    %270 = vmatpush1.msra.mxu0 0.0
    %271 = vmatprep.subr.mxu0 0.0
    %272 = vmatpush1.msra.mxu0 0.0
    %273 = vmatprep.subr.mxu0 0.0
    %274 = vmatpush1.msra.mxu0 0.0
    %275 = vmatprep.subr.mxu0 0.0
    %276 = vmatpush1.msra.mxu0 0.0
    %277 = vmatprep.subr.mxu0 0.0
    %278 = vmatpush1.msra.mxu0 0.0
    %279 = vmatprep.subr.mxu0 0.0
    %280 = vmatpush1.msra.mxu0 0.0
    %281 = vmatprep.subr.mxu0 0.0
    %282 = vmatpush1.msra.mxu0 0.0
    %283 = vmatprep.mubr.f32.mxu0 0.0
    %284 = vmatmul.mubr.f32.gmra.mrb[0].mxu0 %v217
    %v285 = vpop.f32.mrb[0].mxu0
    %v286 = vadd.f32 0.0, %v285
    %v287 = vpop.f32.mrb[0].mxu0
    %288 = vdwg.mxu0
    %v289 = vtanh.pop %v286
    %v290 = vld [vmem:[#allocation9] sm:$0xff]
    %v291 = vld [vmem:[#allocation9 + $0x8] sm:$0xff]
    %v292 = vld [vmem:[#allocation9 + $0x10] sm:$0xff]
    %v293 = vld [vmem:[#allocation9 + $0x18] sm:$0xff]
    %v295 = vsel %vm215, %v289, 0
    %297 = vmatprep.subr.mxu0 0.0
    %298 = vmatpush1.msra.mxu0 %v290
    %299 = vmatprep.subr.mxu0 0.0
    %300 = vmatpush1.msra.mxu0 %v291
    %301 = vmatprep.subr.mxu0 0.0
    %302 = vmatpush1.msra.mxu0 %v292
    %303 = vmatprep.subr.mxu0 0.0
    %304 = vmatpush1.msra.mxu0 %v293
    %305 = vmatprep.subr.mxu0 0.0
    %306 = vmatpush1.msra.mxu0 0.0
    %307 = vmatprep.subr.mxu0 0.0
    %308 = vmatpush1.msra.mxu0 0.0
    %309 = vmatprep.subr.mxu0 0.0
    %310 = vmatpush1.msra.mxu0 0.0
    %311 = vmatprep.subr.mxu0 0.0
    %312 = vmatpush1.msra.mxu0 0.0
    %313 = vmatprep.subr.mxu0 0.0
    %314 = vmatpush1.msra.mxu0 0.0
    %315 = vmatprep.subr.mxu0 0.0
    %316 = vmatpush1.msra.mxu0 0.0
    %317 = vmatprep.subr.mxu0 0.0
    %318 = vmatpush1.msra.mxu0 0.0
    %319 = vmatprep.subr.mxu0 0.0
    %320 = vmatpush1.msra.mxu0 0.0
    %321 = vmatprep.subr.mxu0 0.0
    %322 = vmatpush1.msra.mxu0 0.0
    %323 = vmatprep.subr.mxu0 0.0
    %324 = vmatpush1.msra.mxu0 0.0
    %325 = vmatprep.subr.mxu0 0.0
    %326 = vmatpush1.msra.mxu0 0.0
    %327 = vmatprep.subr.mxu0 0.0
    %328 = vmatpush1.msra.mxu0 0.0
    %329 = vmatprep.subr.mxu0 0.0
    %330 = vmatpush1.msra.mxu0 0.0
    %331 = vmatprep.subr.mxu0 0.0
    %332 = vmatpush1.msra.mxu0 0.0
    %333 = vmatprep.subr.mxu0 0.0
    %334 = vmatpush1.msra.mxu0 0.0
    %335 = vmatprep.subr.mxu0 0.0
    %336 = vmatpush1.msra.mxu0 0.0
    %337 = vmatprep.subr.mxu0 0.0
    %338 = vmatpush1.msra.mxu0 0.0
    %339 = vmatprep.subr.mxu0 0.0
    %340 = vmatpush1.msra.mxu0 0.0
    %341 = vmatprep.subr.mxu0 0.0
    %342 = vmatpush1.msra.mxu0 0.0
    %343 = vmatprep.subr.mxu0 0.0
    %344 = vmatpush1.msra.mxu0 0.0
    %345 = vmatprep.subr.mxu0 0.0
    %346 = vmatpush1.msra.mxu0 0.0
    %347 = vmatprep.subr.mxu0 0.0
    %348 = vmatpush1.msra.mxu0 0.0
    %349 = vmatprep.subr.mxu0 0.0
    %350 = vmatpush1.msra.mxu0 0.0
    %351 = vmatprep.subr.mxu0 0.0
    %352 = vmatpush1.msra.mxu0 0.0
    %353 = vmatprep.subr.mxu0 0.0
    %354 = vmatpush1.msra.mxu0 0.0
    %355 = vmatprep.subr.mxu0 0.0
    %356 = vmatpush1.msra.mxu0 0.0
    %357 = vmatprep.subr.mxu0 0.0
    %358 = vmatpush1.msra.mxu0 0.0
    %359 = vmatprep.subr.mxu0 0.0
    %360 = vmatpush1.msra.mxu0 0.0
    %361 = vmatprep.mubr.f32.mxu0 0.0
    %362 = vmatmul.mubr.f32.gmra.mrb[0].mxu0 %v295
    %v363 = vpop.f32.mrb[0].mxu0
    %v364 = vadd.f32 0.0, %v363
    %v365 = vpop.f32.mrb[0].mxu0
    %366 = vdwg.mxu0
    %v367 = vtanh.pop %v364
    %v368 = vld [vmem:[#allocation11] sm:$0xff]
    %v369 = vld [vmem:[#allocation11 + $0x8] sm:$0xff]
    %v370 = vld [vmem:[#allocation11 + $0x10] sm:$0xff]
    %v371 = vld [vmem:[#allocation11 + $0x18] sm:$0xff]
    %v373 = vsel %vm215, %v367, 0
    %375 = vmatprep.subr.mxu0 0.0
    %376 = vmatpush1.msra.mxu0 %v368
    %377 = vmatprep.subr.mxu0 0.0
    %378 = vmatpush1.msra.mxu0 %v369
    %379 = vmatprep.subr.mxu0 0.0
    %380 = vmatpush1.msra.mxu0 %v370
    %381 = vmatprep.subr.mxu0 0.0
    %382 = vmatpush1.msra.mxu0 %v371
    %383 = vmatprep.subr.mxu0 0.0
    %384 = vmatpush1.msra.mxu0 0.0
    %385 = vmatprep.subr.mxu0 0.0
    %386 = vmatpush1.msra.mxu0 0.0
    %387 = vmatprep.subr.mxu0 0.0
    %388 = vmatpush1.msra.mxu0 0.0
    %389 = vmatprep.subr.mxu0 0.0
    %390 = vmatpush1.msra.mxu0 0.0
    %391 = vmatprep.subr.mxu0 0.0
    %392 = vmatpush1.msra.mxu0 0.0
    %393 = vmatprep.subr.mxu0 0.0
    %394 = vmatpush1.msra.mxu0 0.0
    %395 = vmatprep.subr.mxu0 0.0
    %396 = vmatpush1.msra.mxu0 0.0
    %397 = vmatprep.subr.mxu0 0.0
    %398 = vmatpush1.msra.mxu0 0.0
    %399 = vmatprep.subr.mxu0 0.0
    %400 = vmatpush1.msra.mxu0 0.0
    %401 = vmatprep.subr.mxu0 0.0
    %402 = vmatpush1.msra.mxu0 0.0
    %403 = vmatprep.subr.mxu0 0.0
    %404 = vmatpush1.msra.mxu0 0.0
    %405 = vmatprep.subr.mxu0 0.0
    %406 = vmatpush1.msra.mxu0 0.0
    %407 = vmatprep.subr.mxu0 0.0
    %408 = vmatpush1.msra.mxu0 0.0
    %409 = vmatprep.subr.mxu0 0.0
    %410 = vmatpush1.msra.mxu0 0.0
    %411 = vmatprep.subr.mxu0 0.0
    %412 = vmatpush1.msra.mxu0 0.0
    %413 = vmatprep.subr.mxu0 0.0
    %414 = vmatpush1.msra.mxu0 0.0
    %415 = vmatprep.subr.mxu0 0.0
    %416 = vmatpush1.msra.mxu0 0.0
    %417 = vmatprep.subr.mxu0 0.0
    %418 = vmatpush1.msra.mxu0 0.0
    %419 = vmatprep.subr.mxu0 0.0
    %420 = vmatpush1.msra.mxu0 0.0
    %421 = vmatprep.subr.mxu0 0.0
    %422 = vmatpush1.msra.mxu0 0.0
    %423 = vmatprep.subr.mxu0 0.0
    %424 = vmatpush1.msra.mxu0 0.0
    %425 = vmatprep.subr.mxu0 0.0
    %426 = vmatpush1.msra.mxu0 0.0
    %427 = vmatprep.subr.mxu0 0.0
    %428 = vmatpush1.msra.mxu0 0.0
    %429 = vmatprep.subr.mxu0 0.0
    %430 = vmatpush1.msra.mxu0 0.0
    %431 = vmatprep.subr.mxu0 0.0
    %432 = vmatpush1.msra.mxu0 0.0
    %433 = vmatprep.subr.mxu0 0.0
    %434 = vmatpush1.msra.mxu0 0.0
    %435 = vmatprep.subr.mxu0 0.0
    %436 = vmatpush1.msra.mxu0 0.0
    %437 = vmatprep.subr.mxu0 0.0
    %438 = vmatpush1.msra.mxu0 0.0
    %439 = vmatprep.mubr.f32.mxu0 0.0
    %440 = vmatmul.mubr.f32.gmra.mrb[0].mxu0 %v373
    %v441 = vpop.f32.mrb[0].mxu0
    %v442 = vadd.f32 0.0, %v441
    %v443 = vpop.f32.mrb[0].mxu0
    %444 = vdwg.mxu0
    %v445 = vtanh.pop %v442
    %446 = vst [vmem:[#allocation2] sm:$0x3] %v445
    %v447 = vld [vmem:[#allocation2] sm:$0x3]
    %vm448 = vcmask 123904
    %449 = vst.msk [vmem:[#allocation3] sm:$0x3] %vm448, %v447
    %v450 = vld [vmem:[#allocation2] sm:$0x3]
    %452 = vrot.lane.b32.xlu0 %v450, 112
    %v453 = vpop.permute.xlu0 %452
    %455 = vst.msk [vmem:[#allocation3 + $0x2] sm:$0x3] %vm448, %v453
    %v456 = vld [vmem:[#allocation2] sm:$0x3]
    %458 = vrot.lane.b32.xlu0 %v456, 96
    %v459 = vpop.permute.xlu0 %458
    %461 = vst.msk [vmem:[#allocation3 + $0x4] sm:$0x3] %vm448, %v459
    %v462 = vld [vmem:[#allocation2] sm:$0x3]
    %464 = vrot.lane.b32.xlu0 %v462, 80
    %v465 = vpop.permute.xlu0 %464
    %467 = vst.msk [vmem:[#allocation3 + $0x6] sm:$0x3] %vm448, %v465
    %v468 = vld [vmem:[#allocation2] sm:$0x3]
    %470 = vrot.lane.b32.xlu0 %v468, 64
    %v471 = vpop.permute.xlu0 %470
    %473 = vst.msk [vmem:[#allocation3 + $0x8] sm:$0x3] %vm448, %v471
    %v474 = vld [vmem:[#allocation2] sm:$0x3]
    %476 = vrot.lane.b32.xlu0 %v474, 48
    %v477 = vpop.permute.xlu0 %476
    %479 = vst.msk [vmem:[#allocation3 + $0xa] sm:$0x3] %vm448, %v477
    %v480 = vld [vmem:[#allocation2] sm:$0x3]
    %482 = vrot.lane.b32.xlu0 %v480, 32
    %v483 = vpop.permute.xlu0 %482
    %485 = vst.msk [vmem:[#allocation3 + $0xc] sm:$0x3] %vm448, %v483
    %v486 = vld [vmem:[#allocation2] sm:$0x3]
    %488 = vrot.lane.b32.xlu0 %v486, 16
    %v489 = vpop.permute.xlu0 %488
    %491 = vst.msk [vmem:[#allocation3 + $0xe] sm:$0x3] %vm448, %v489
    %v492 = vld [vmem:[#allocation3] sm:$0xff]
    %v493 = vld [vmem:[#allocation3 + $0x8] sm:$0xff]
    %v494 = vld [vmem:[#allocation12] sm:$0xff]
    %v495 = vld [vmem:[#allocation12 + $0x8] sm:$0xff]
    %vm496 = vcmask 130048
    %v498 = vsel %vm496, %v492, 0
    %v501 = vsel %vm496, %v493, 0
    %503 = vmatprep.subr.mxu0 0.0
    %504 = vmatpush1.msra.mxu0 %v494
    %505 = vmatprep.subr.mxu0 0.0
    %506 = vmatpush1.msra.mxu0 %v495
    %507 = vmatprep.subr.mxu0 0.0
    %508 = vmatpush1.msra.mxu0 0.0
    %509 = vmatprep.subr.mxu0 0.0
    %510 = vmatpush1.msra.mxu0 0.0
    %511 = vmatprep.subr.mxu0 0.0
    %512 = vmatpush1.msra.mxu0 0.0
    %513 = vmatprep.subr.mxu0 0.0
    %514 = vmatpush1.msra.mxu0 0.0
    %515 = vmatprep.subr.mxu0 0.0
    %516 = vmatpush1.msra.mxu0 0.0
    %517 = vmatprep.subr.mxu0 0.0
    %518 = vmatpush1.msra.mxu0 0.0
    %519 = vmatprep.subr.mxu0 0.0
    %520 = vmatpush1.msra.mxu0 0.0
    %521 = vmatprep.subr.mxu0 0.0
    %522 = vmatpush1.msra.mxu0 0.0
    %523 = vmatprep.subr.mxu0 0.0
    %524 = vmatpush1.msra.mxu0 0.0
    %525 = vmatprep.subr.mxu0 0.0
    %526 = vmatpush1.msra.mxu0 0.0
    %527 = vmatprep.subr.mxu0 0.0
    %528 = vmatpush1.msra.mxu0 0.0
    %529 = vmatprep.subr.mxu0 0.0
    %530 = vmatpush1.msra.mxu0 0.0
    %531 = vmatprep.subr.mxu0 0.0
    %532 = vmatpush1.msra.mxu0 0.0
    %533 = vmatprep.subr.mxu0 0.0
    %534 = vmatpush1.msra.mxu0 0.0
    %535 = vmatprep.subr.mxu0 0.0
    %536 = vmatpush1.msra.mxu0 0.0
    %537 = vmatprep.subr.mxu0 0.0
    %538 = vmatpush1.msra.mxu0 0.0
    %539 = vmatprep.subr.mxu0 0.0
    %540 = vmatpush1.msra.mxu0 0.0
    %541 = vmatprep.subr.mxu0 0.0
    %542 = vmatpush1.msra.mxu0 0.0
    %543 = vmatprep.subr.mxu0 0.0
    %544 = vmatpush1.msra.mxu0 0.0
    %545 = vmatprep.subr.mxu0 0.0
    %546 = vmatpush1.msra.mxu0 0.0
    %547 = vmatprep.subr.mxu0 0.0
    %548 = vmatpush1.msra.mxu0 0.0
    %549 = vmatprep.subr.mxu0 0.0
    %550 = vmatpush1.msra.mxu0 0.0
    %551 = vmatprep.subr.mxu0 0.0
    %552 = vmatpush1.msra.mxu0 0.0
    %553 = vmatprep.subr.mxu0 0.0
    %554 = vmatpush1.msra.mxu0 0.0
    %555 = vmatprep.subr.mxu0 0.0
    %556 = vmatpush1.msra.mxu0 0.0
    %557 = vmatprep.subr.mxu0 0.0
    %558 = vmatpush1.msra.mxu0 0.0
    %559 = vmatprep.subr.mxu0 0.0
    %560 = vmatpush1.msra.mxu0 0.0
    %561 = vmatprep.subr.mxu0 0.0
    %562 = vmatpush1.msra.mxu0 0.0
    %563 = vmatprep.subr.mxu0 0.0
    %564 = vmatpush1.msra.mxu0 0.0
    %565 = vmatprep.subr.mxu0 0.0
    %566 = vmatpush1.msra.mxu0 0.0
    %567 = vmatprep.mubr.f32.mxu0 0.0
    %568 = vmatmul.mubr.f32.gmra.mrb[0].mxu0 %v498
    %v569 = vpop.f32.mrb[0].mxu0
    %v570 = vadd.f32 0.0, %v569
    %v571 = vpop.f32.mrb[0].mxu0
    %572 = vmatprep.mubr.f32.mxu0 0.0
    %573 = vmatmul.mubr.f32.gmra.mrb[0].mxu0 %v501
    %v574 = vpop.f32.mrb[0].mxu0
    %v575 = vadd.f32 0.0, %v574
    %v576 = vpop.f32.mrb[0].mxu0
    %577 = vdwg.mxu0
    %v578 = vtanh.pop %v570
    %v579 = vtanh.pop %v575
    %v580 = vld [vmem:[#allocation14] sm:$0xff]
    %v581 = vld [vmem:[#allocation14 + $0x8] sm:$0xff]
    %v582 = vld [vmem:[#allocation14 + $0x10] sm:$0xff]
    %v583 = vld [vmem:[#allocation14 + $0x18] sm:$0xff]
    %v584 = vld [vmem:[#allocation14 + $0x20] sm:$0xff]
    %v585 = vld [vmem:[#allocation14 + $0x28] sm:$0xff]
    %v586 = vld [vmem:[#allocation14 + $0x30] sm:$0xff]
    %v587 = vld [vmem:[#allocation14 + $0x38] sm:$0xff]
    %v588 = vld [vmem:[#allocation14 + $0x40] sm:$0xff]
    %v589 = vld [vmem:[#allocation14 + $0x48] sm:$0xff]
    %v590 = vld [vmem:[#allocation14 + $0x50] sm:$0xff]
    %v591 = vld [vmem:[#allocation14 + $0x58] sm:$0xff]
    %v592 = vld [vmem:[#allocation14 + $0x60] sm:$0xff]
    %v593 = vld [vmem:[#allocation14 + $0x68] sm:$0xff]
    %v594 = vld [vmem:[#allocation14 + $0x70] sm:$0xff]
    %v595 = vld [vmem:[#allocation14 + $0x78] sm:$0xff]
    %vm596 = vcmask 523264
    %v598 = vsel %vm596, %v578, 0
    %v601 = vsel %vm596, %v579, 0
    %603 = vmatprep.subr.mxu0 %v581
    %604 = vmatpush1.msra.mxu0 %v580
    %605 = vmatprep.subr.mxu0 %v583
    %606 = vmatpush1.msra.mxu0 %v582
    %607 = vmatprep.subr.mxu0 %v585
    %608 = vmatpush1.msra.mxu0 %v584
    %609 = vmatprep.subr.mxu0 %v587
    %610 = vmatpush1.msra.mxu0 %v586
    %611 = vmatprep.subr.mxu0 %v589
    %612 = vmatpush1.msra.mxu0 %v588
    %613 = vmatprep.subr.mxu0 %v591
    %614 = vmatpush1.msra.mxu0 %v590
    %615 = vmatprep.subr.mxu0 %v593
    %616 = vmatpush1.msra.mxu0 %v592
    %617 = vmatprep.subr.mxu0 %v595
    %618 = vmatpush1.msra.mxu0 %v594
    %619 = vmatprep.subr.mxu0 0.0
    %620 = vmatpush1.msra.mxu0 0.0
    %621 = vmatprep.subr.mxu0 0.0
    %622 = vmatpush1.msra.mxu0 0.0
    %623 = vmatprep.subr.mxu0 0.0
    %624 = vmatpush1.msra.mxu0 0.0
    %625 = vmatprep.subr.mxu0 0.0
    %626 = vmatpush1.msra.mxu0 0.0
    %627 = vmatprep.subr.mxu0 0.0
    %628 = vmatpush1.msra.mxu0 0.0
    %629 = vmatprep.subr.mxu0 0.0
    %630 = vmatpush1.msra.mxu0 0.0
    %631 = vmatprep.subr.mxu0 0.0
    %632 = vmatpush1.msra.mxu0 0.0
    %633 = vmatprep.subr.mxu0 0.0
    %634 = vmatpush1.msra.mxu0 0.0
    %635 = vmatprep.subr.mxu0 0.0
    %636 = vmatpush1.msra.mxu0 0.0
    %637 = vmatprep.subr.mxu0 0.0
    %638 = vmatpush1.msra.mxu0 0.0
    %639 = vmatprep.subr.mxu0 0.0
    %640 = vmatpush1.msra.mxu0 0.0
    %641 = vmatprep.subr.mxu0 0.0
    %642 = vmatpush1.msra.mxu0 0.0
    %643 = vmatprep.subr.mxu0 0.0
    %644 = vmatpush1.msra.mxu0 0.0
    %645 = vmatprep.subr.mxu0 0.0
    %646 = vmatpush1.msra.mxu0 0.0
    %647 = vmatprep.subr.mxu0 0.0
    %648 = vmatpush1.msra.mxu0 0.0
    %649 = vmatprep.subr.mxu0 0.0
    %650 = vmatpush1.msra.mxu0 0.0
    %651 = vmatprep.subr.mxu0 0.0
    %652 = vmatpush1.msra.mxu0 0.0
    %653 = vmatprep.subr.mxu0 0.0
    %654 = vmatpush1.msra.mxu0 0.0
    %655 = vmatprep.subr.mxu0 0.0
    %656 = vmatpush1.msra.mxu0 0.0
    %657 = vmatprep.subr.mxu0 0.0
    %658 = vmatpush1.msra.mxu0 0.0
    %659 = vmatprep.subr.mxu0 0.0
    %660 = vmatpush1.msra.mxu0 0.0
    %661 = vmatprep.subr.mxu0 0.0
    %662 = vmatpush1.msra.mxu0 0.0
    %663 = vmatprep.subr.mxu0 0.0
    %664 = vmatpush1.msra.mxu0 0.0
    %665 = vmatprep.subr.mxu0 0.0
    %666 = vmatpush1.msra.mxu0 0.0
    %667 = vmatprep.mubr.f32.mxu0 0.0
    %668 = vmatmul.mubr.f32.gmra.mrb[0].mxu0 %v598
    %v669 = vpop.f32.mrb[0].mxu0
    %v670 = vadd.f32 0.0, %v669
    %v671 = vpop.f32.mrb[0].mxu0
    %v672 = vadd.f32 0.0, %v671
    %673 = vmatprep.mubr.f32.mxu0 0.0
    %674 = vmatmul.mubr.f32.gmra.mrb[0].mxu0 %v601
    %v675 = vpop.f32.mrb[0].mxu0
    %v676 = vadd.f32 0.0, %v675
    %v677 = vpop.f32.mrb[0].mxu0
    %v678 = vadd.f32 0.0, %v677
    %679 = vdwg.mxu0
    %v680 = vtanh.pop %v670
    %v681 = vtanh.pop %v672
    %v682 = vtanh.pop %v676
    %v683 = vtanh.pop %v678
    %v684 = vld [vmem:[#allocation15] sm:$0xff]
    %v685 = vld [vmem:[#allocation15 + $0x8] sm:$0xff]
    %v686 = vld [vmem:[#allocation15 + $0x10] sm:$0xff]
    %v687 = vld [vmem:[#allocation15 + $0x18] sm:$0xff]
    %v688 = vld [vmem:[#allocation15 + $0x20] sm:$0xff]
    %v689 = vld [vmem:[#allocation15 + $0x28] sm:$0xff]
    %v690 = vld [vmem:[#allocation15 + $0x30] sm:$0xff]
    %v691 = vld [vmem:[#allocation15 + $0x38] sm:$0xff]
    %v692 = vld [vmem:[#allocation15 + $0x40] sm:$0xff]
    %v693 = vld [vmem:[#allocation15 + $0x48] sm:$0xff]
    %v694 = vld [vmem:[#allocation15 + $0x50] sm:$0xff]
    %v695 = vld [vmem:[#allocation15 + $0x58] sm:$0xff]
    %v696 = vld [vmem:[#allocation15 + $0x60] sm:$0xff]
    %v697 = vld [vmem:[#allocation15 + $0x68] sm:$0xff]
    %v698 = vld [vmem:[#allocation15 + $0x70] sm:$0xff]
    %v699 = vld [vmem:[#allocation15 + $0x78] sm:$0xff]
    %v700 = vld [vmem:[#allocation15 + $0x80] sm:$0xff]
    %v701 = vld [vmem:[#allocation15 + $0x88] sm:$0xff]
    %v702 = vld [vmem:[#allocation15 + $0x90] sm:$0xff]
    %v703 = vld [vmem:[#allocation15 + $0x98] sm:$0xff]
    %v704 = vld [vmem:[#allocation15 + $0xa0] sm:$0xff]
    %v705 = vld [vmem:[#allocation15 + $0xa8] sm:$0xff]
    %v706 = vld [vmem:[#allocation15 + $0xb0] sm:$0xff]
    %v707 = vld [vmem:[#allocation15 + $0xb8] sm:$0xff]
    %v708 = vld [vmem:[#allocation15 + $0xc0] sm:$0xff]
    %v709 = vld [vmem:[#allocation15 + $0xc8] sm:$0xff]
    %v710 = vld [vmem:[#allocation15 + $0xd0] sm:$0xff]
    %v711 = vld [vmem:[#allocation15 + $0xd8] sm:$0xff]
    %v712 = vld [vmem:[#allocation15 + $0xe0] sm:$0xff]
    %v713 = vld [vmem:[#allocation15 + $0xe8] sm:$0xff]
    %v714 = vld [vmem:[#allocation15 + $0xf0] sm:$0xff]
    %v715 = vld [vmem:[#allocation15 + $0xf8] sm:$0xff]
    %v716 = vld [vmem:[#allocation15 + $0x100] sm:$0xff]
    %v717 = vld [vmem:[#allocation15 + $0x108] sm:$0xff]
    %v718 = vld [vmem:[#allocation15 + $0x110] sm:$0xff]
    %v719 = vld [vmem:[#allocation15 + $0x118] sm:$0xff]
    %v720 = vld [vmem:[#allocation15 + $0x120] sm:$0xff]
    %v721 = vld [vmem:[#allocation15 + $0x128] sm:$0xff]
    %v722 = vld [vmem:[#allocation15 + $0x130] sm:$0xff]
    %v723 = vld [vmem:[#allocation15 + $0x138] sm:$0xff]
    %v724 = vld [vmem:[#allocation15 + $0x140] sm:$0xff]
    %v725 = vld [vmem:[#allocation15 + $0x148] sm:$0xff]
    %v726 = vld [vmem:[#allocation15 + $0x150] sm:$0xff]
    %v727 = vld [vmem:[#allocation15 + $0x158] sm:$0xff]
    %v728 = vld [vmem:[#allocation15 + $0x160] sm:$0xff]
    %v729 = vld [vmem:[#allocation15 + $0x168] sm:$0xff]
    %v730 = vld [vmem:[#allocation15 + $0x170] sm:$0xff]
    %v731 = vld [vmem:[#allocation15 + $0x178] sm:$0xff]
    %v732 = vld [vmem:[#allocation15 + $0x180] sm:$0xff]
    %v733 = vld [vmem:[#allocation15 + $0x188] sm:$0xff]
    %v734 = vld [vmem:[#allocation15 + $0x190] sm:$0xff]
    %v735 = vld [vmem:[#allocation15 + $0x198] sm:$0xff]
    %v736 = vld [vmem:[#allocation15 + $0x1a0] sm:$0xff]
    %v737 = vld [vmem:[#allocation15 + $0x1a8] sm:$0xff]
    %v738 = vld [vmem:[#allocation15 + $0x1b0] sm:$0xff]
    %v739 = vld [vmem:[#allocation15 + $0x1b8] sm:$0xff]
    %v740 = vld [vmem:[#allocation15 + $0x1c0] sm:$0xff]
    %v741 = vld [vmem:[#allocation15 + $0x1c8] sm:$0xff]
    %v742 = vld [vmem:[#allocation15 + $0x1d0] sm:$0xff]
    %v743 = vld [vmem:[#allocation15 + $0x1d8] sm:$0xff]
    %v744 = vld [vmem:[#allocation15 + $0x1e0] sm:$0xff]
    %v745 = vld [vmem:[#allocation15 + $0x1e8] sm:$0xff]
    %v746 = vld [vmem:[#allocation15 + $0x1f0] sm:$0xff]
    %v747 = vld [vmem:[#allocation15 + $0x1f8] sm:$0xff]
    %v748 = vld [vmem:[#allocation15 + $0x200] sm:$0xff]
    %v749 = vld [vmem:[#allocation15 + $0x208] sm:$0xff]
    %v750 = vld [vmem:[#allocation15 + $0x210] sm:$0xff]
    %v751 = vld [vmem:[#allocation15 + $0x218] sm:$0xff]
    %v752 = vld [vmem:[#allocation15 + $0x220] sm:$0xff]
    %v753 = vld [vmem:[#allocation15 + $0x228] sm:$0xff]
    %v754 = vld [vmem:[#allocation15 + $0x230] sm:$0xff]
    %v755 = vld [vmem:[#allocation15 + $0x238] sm:$0xff]
    %v756 = vld [vmem:[#allocation15 + $0x240] sm:$0xff]
    %v757 = vld [vmem:[#allocation15 + $0x248] sm:$0xff]
    %v758 = vld [vmem:[#allocation15 + $0x250] sm:$0xff]
    %v759 = vld [vmem:[#allocation15 + $0x258] sm:$0xff]
    %v760 = vld [vmem:[#allocation15 + $0x260] sm:$0xff]
    %v761 = vld [vmem:[#allocation15 + $0x268] sm:$0xff]
    %v762 = vld [vmem:[#allocation15 + $0x270] sm:$0xff]
    %v763 = vld [vmem:[#allocation15 + $0x278] sm:$0xff]
    %v764 = vld [vmem:[#allocation15 + $0x280] sm:$0xff]
    %v765 = vld [vmem:[#allocation15 + $0x288] sm:$0xff]
    %v766 = vld [vmem:[#allocation15 + $0x290] sm:$0xff]
    %v767 = vld [vmem:[#allocation15 + $0x298] sm:$0xff]
    %v768 = vld [vmem:[#allocation15 + $0x2a0] sm:$0xff]
    %v769 = vld [vmem:[#allocation15 + $0x2a8] sm:$0xff]
    %v770 = vld [vmem:[#allocation15 + $0x2b0] sm:$0xff]
    %v771 = vld [vmem:[#allocation15 + $0x2b8] sm:$0xff]
    %v772 = vld [vmem:[#allocation15 + $0x2c0] sm:$0xff]
    %v773 = vld [vmem:[#allocation15 + $0x2c8] sm:$0xff]
    %v774 = vld [vmem:[#allocation15 + $0x2d0] sm:$0xff]
    %v775 = vld [vmem:[#allocation15 + $0x2d8] sm:$0xff]
    %v776 = vld [vmem:[#allocation15 + $0x2e0] sm:$0xff]
    %v777 = vld [vmem:[#allocation15 + $0x2e8] sm:$0xff]
    %v778 = vld [vmem:[#allocation15 + $0x2f0] sm:$0xff]
    %v779 = vld [vmem:[#allocation15 + $0x2f8] sm:$0xff]
    %v780 = vld [vmem:[#allocation15 + $0x300] sm:$0xff]
    %v781 = vld [vmem:[#allocation15 + $0x308] sm:$0xff]
    %v782 = vld [vmem:[#allocation15 + $0x310] sm:$0xff]
    %v783 = vld [vmem:[#allocation15 + $0x318] sm:$0xff]
    %v784 = vld [vmem:[#allocation15 + $0x320] sm:$0xff]
    %v785 = vld [vmem:[#allocation15 + $0x328] sm:$0xff]
    %v786 = vld [vmem:[#allocation15 + $0x330] sm:$0xff]
    %v787 = vld [vmem:[#allocation15 + $0x338] sm:$0xff]
    %v788 = vld [vmem:[#allocation15 + $0x340] sm:$0xff]
    %v789 = vld [vmem:[#allocation15 + $0x348] sm:$0xff]
    %v790 = vld [vmem:[#allocation15 + $0x350] sm:$0xff]
    %v791 = vld [vmem:[#allocation15 + $0x358] sm:$0xff]
    %v792 = vld [vmem:[#allocation15 + $0x360] sm:$0xff]
    %v793 = vld [vmem:[#allocation15 + $0x368] sm:$0xff]
    %v794 = vld [vmem:[#allocation15 + $0x370] sm:$0xff]
    %v795 = vld [vmem:[#allocation15 + $0x378] sm:$0xff]
    %v796 = vld [vmem:[#allocation15 + $0x380] sm:$0xff]
    %v797 = vld [vmem:[#allocation15 + $0x388] sm:$0xff]
    %v798 = vld [vmem:[#allocation15 + $0x390] sm:$0xff]
    %v799 = vld [vmem:[#allocation15 + $0x398] sm:$0xff]
    %v800 = vld [vmem:[#allocation15 + $0x3a0] sm:$0xff]
    %v801 = vld [vmem:[#allocation15 + $0x3a8] sm:$0xff]
    %v802 = vld [vmem:[#allocation15 + $0x3b0] sm:$0xff]
    %v803 = vld [vmem:[#allocation15 + $0x3b8] sm:$0xff]
    %v804 = vld [vmem:[#allocation15 + $0x3c0] sm:$0xff]
    %v805 = vld [vmem:[#allocation15 + $0x3c8] sm:$0xff]
    %v806 = vld [vmem:[#allocation15 + $0x3d0] sm:$0xff]
    %v807 = vld [vmem:[#allocation15 + $0x3d8] sm:$0xff]
    %v808 = vld [vmem:[#allocation15 + $0x3e0] sm:$0xff]
    %v809 = vld [vmem:[#allocation15 + $0x3e8] sm:$0xff]
    %v810 = vld [vmem:[#allocation15 + $0x3f0] sm:$0xff]
    %v811 = vld [vmem:[#allocation15 + $0x3f8] sm:$0xff]
    %812 = vmatprep.subr.mxu0 %v685
    %813 = vmatpush1.msra.mxu0 %v684
    %814 = vmatprep.subr.mxu0 %v689
    %815 = vmatpush1.msra.mxu0 %v688
    %816 = vmatprep.subr.mxu0 %v693
    %817 = vmatpush1.msra.mxu0 %v692
    %818 = vmatprep.subr.mxu0 %v697
    %819 = vmatpush1.msra.mxu0 %v696
    %820 = vmatprep.subr.mxu0 %v701
    %821 = vmatpush1.msra.mxu0 %v700
    %822 = vmatprep.subr.mxu0 %v705
    %823 = vmatpush1.msra.mxu0 %v704
    %824 = vmatprep.subr.mxu0 %v709
    %825 = vmatpush1.msra.mxu0 %v708
    %826 = vmatprep.subr.mxu0 %v713
    %827 = vmatpush1.msra.mxu0 %v712
    %828 = vmatprep.subr.mxu0 %v717
    %829 = vmatpush1.msra.mxu0 %v716
    %830 = vmatprep.subr.mxu0 %v721
    %831 = vmatpush1.msra.mxu0 %v720
    %832 = vmatprep.subr.mxu0 %v725
    %833 = vmatpush1.msra.mxu0 %v724
    %834 = vmatprep.subr.mxu0 %v729
    %835 = vmatpush1.msra.mxu0 %v728
    %836 = vmatprep.subr.mxu0 %v733
    %837 = vmatpush1.msra.mxu0 %v732
    %838 = vmatprep.subr.mxu0 %v737
    %839 = vmatpush1.msra.mxu0 %v736
    %840 = vmatprep.subr.mxu0 %v741
    %841 = vmatpush1.msra.mxu0 %v740
    %842 = vmatprep.subr.mxu0 %v745
    %843 = vmatpush1.msra.mxu0 %v744
    %844 = vmatprep.subr.mxu0 %v749
    %845 = vmatpush1.msra.mxu0 %v748
    %846 = vmatprep.subr.mxu0 %v753
    %847 = vmatpush1.msra.mxu0 %v752
    %848 = vmatprep.subr.mxu0 %v757
    %849 = vmatpush1.msra.mxu0 %v756
    %850 = vmatprep.subr.mxu0 %v761
    %851 = vmatpush1.msra.mxu0 %v760
    %852 = vmatprep.subr.mxu0 %v765
    %853 = vmatpush1.msra.mxu0 %v764
    %854 = vmatprep.subr.mxu0 %v769
    %855 = vmatpush1.msra.mxu0 %v768
    %856 = vmatprep.subr.mxu0 %v773
    %857 = vmatpush1.msra.mxu0 %v772
    %858 = vmatprep.subr.mxu0 %v777
    %859 = vmatpush1.msra.mxu0 %v776
    %860 = vmatprep.subr.mxu0 %v781
    %861 = vmatpush1.msra.mxu0 %v780
    %862 = vmatprep.subr.mxu0 %v785
    %863 = vmatpush1.msra.mxu0 %v784
    %864 = vmatprep.subr.mxu0 %v789
    %865 = vmatpush1.msra.mxu0 %v788
    %866 = vmatprep.subr.mxu0 %v793
    %867 = vmatpush1.msra.mxu0 %v792
    %868 = vmatprep.subr.mxu0 %v797
    %869 = vmatpush1.msra.mxu0 %v796
    %870 = vmatprep.subr.mxu0 %v801
    %871 = vmatpush1.msra.mxu0 %v800
    %872 = vmatprep.subr.mxu0 %v805
    %873 = vmatpush1.msra.mxu0 %v804
    %874 = vmatprep.subr.mxu0 %v809
    %875 = vmatpush1.msra.mxu0 %v808
    %876 = vmatprep.mubr.f32.mxu0 %v681
    %877 = vmatmul.mubr.f32.gmra.mrb[0].mxu0 %v680
    %v878 = vpop.f32.mrb[0].mxu0
    %v879 = vadd.f32 0.0, %v878
    %v880 = vpop.f32.mrb[0].mxu0
    %v881 = vadd.f32 0.0, %v880
    %882 = vmatprep.mubr.f32.mxu0 %v683
    %883 = vmatmul.mubr.f32.gmra.mrb[0].mxu0 %v682
    %v884 = vpop.f32.mrb[0].mxu0
    %v885 = vadd.f32 0.0, %v884
    %v886 = vpop.f32.mrb[0].mxu0
    %v887 = vadd.f32 0.0, %v886
    %888 = vdwg.mxu0
    %889 = vmatprep.subr.mxu0 %v687
    %890 = vmatpush1.msra.mxu0 %v686
    %891 = vmatprep.subr.mxu0 %v691
    %892 = vmatpush1.msra.mxu0 %v690
    %893 = vmatprep.subr.mxu0 %v695
    %894 = vmatpush1.msra.mxu0 %v694
    %895 = vmatprep.subr.mxu0 %v699
    %896 = vmatpush1.msra.mxu0 %v698
    %897 = vmatprep.subr.mxu0 %v703
    %898 = vmatpush1.msra.mxu0 %v702
    %899 = vmatprep.subr.mxu0 %v707
    %900 = vmatpush1.msra.mxu0 %v706
    %901 = vmatprep.subr.mxu0 %v711
    %902 = vmatpush1.msra.mxu0 %v710
    %903 = vmatprep.subr.mxu0 %v715
    %904 = vmatpush1.msra.mxu0 %v714
    %905 = vmatprep.subr.mxu0 %v719
    %906 = vmatpush1.msra.mxu0 %v718
    %907 = vmatprep.subr.mxu0 %v723
    %908 = vmatpush1.msra.mxu0 %v722
    %909 = vmatprep.subr.mxu0 %v727
    %910 = vmatpush1.msra.mxu0 %v726
    %911 = vmatprep.subr.mxu0 %v731
    %912 = vmatpush1.msra.mxu0 %v730
    %913 = vmatprep.subr.mxu0 %v735
    %914 = vmatpush1.msra.mxu0 %v734
    %915 = vmatprep.subr.mxu0 %v739
    %916 = vmatpush1.msra.mxu0 %v738
    %917 = vmatprep.subr.mxu0 %v743
    %918 = vmatpush1.msra.mxu0 %v742
    %919 = vmatprep.subr.mxu0 %v747
    %920 = vmatpush1.msra.mxu0 %v746
    %921 = vmatprep.subr.mxu0 %v751
    %922 = vmatpush1.msra.mxu0 %v750
    %923 = vmatprep.subr.mxu0 %v755
    %924 = vmatpush1.msra.mxu0 %v754
    %925 = vmatprep.subr.mxu0 %v759
    %926 = vmatpush1.msra.mxu0 %v758
    %927 = vmatprep.subr.mxu0 %v763
    %928 = vmatpush1.msra.mxu0 %v762
    %929 = vmatprep.subr.mxu0 %v767
    %930 = vmatpush1.msra.mxu0 %v766
    %931 = vmatprep.subr.mxu0 %v771
    %932 = vmatpush1.msra.mxu0 %v770
    %933 = vmatprep.subr.mxu0 %v775
    %934 = vmatpush1.msra.mxu0 %v774
    %935 = vmatprep.subr.mxu0 %v779
    %936 = vmatpush1.msra.mxu0 %v778
    %937 = vmatprep.subr.mxu0 %v783
    %938 = vmatpush1.msra.mxu0 %v782
    %939 = vmatprep.subr.mxu0 %v787
    %940 = vmatpush1.msra.mxu0 %v786
    %941 = vmatprep.subr.mxu0 %v791
    %942 = vmatpush1.msra.mxu0 %v790
    %943 = vmatprep.subr.mxu0 %v795
    %944 = vmatpush1.msra.mxu0 %v794
    %945 = vmatprep.subr.mxu0 %v799
    %946 = vmatpush1.msra.mxu0 %v798
    %947 = vmatprep.subr.mxu0 %v803
    %948 = vmatpush1.msra.mxu0 %v802
    %949 = vmatprep.subr.mxu0 %v807
    %950 = vmatpush1.msra.mxu0 %v806
    %951 = vmatprep.subr.mxu0 %v811
    %952 = vmatpush1.msra.mxu0 %v810
    %953 = vmatprep.mubr.f32.mxu0 %v681
    %954 = vmatmul.mubr.f32.gmra.mrb[0].mxu0 %v680
    %v955 = vpop.f32.mrb[0].mxu0
    %v956 = vadd.f32 0.0, %v955
    %v957 = vpop.f32.mrb[0].mxu0
    %v958 = vadd.f32 0.0, %v957
    %959 = vmatprep.mubr.f32.mxu0 %v683
    %960 = vmatmul.mubr.f32.gmra.mrb[0].mxu0 %v682
    %v961 = vpop.f32.mrb[0].mxu0
    %v962 = vadd.f32 0.0, %v961
    %v963 = vpop.f32.mrb[0].mxu0
    %v964 = vadd.f32 0.0, %v963
    %965 = vdwg.mxu0
    %966 = vst [vmem:[%s8] sm:$0xff] %v879
    %967 = vst [vmem:[%s8 + $0x8] sm:$0xff] %v881
    %968 = vst [vmem:[%s8 + $0x10] sm:$0xff] %v956
    %969 = vst [vmem:[%s8 + $0x18] sm:$0xff] %v958
    %970 = vst [vmem:[%s8 + $0x20] sm:$0xff] %v885
    %971 = vst [vmem:[%s8 + $0x28] sm:$0xff] %v887
    %972 = vst [vmem:[%s8 + $0x30] sm:$0xff] %v962
    %973 = vst [vmem:[%s8 + $0x38] sm:$0xff] %v964
    // Predicated region
    $region66: #{bayesian_atlas_forward.2} parent=1 // pred_check
      _
    $region67: #{bayesian_atlas_forward.2} parent=1 // pred_check_branch
      %975 = sbr.rel (0) target = $region69
    $region68: #{bayesian_atlas_forward.2} parent=1 // pred_region
      _
    $region69: #{bayesian_atlas_forward.2} parent=1 // pred_fallthru
      _
    // Predicated region
    $region70: #{bayesian_atlas_forward.2} parent=1 // pred_check
      _
    $region71: #{bayesian_atlas_forward.2} parent=1 // pred_check_branch
      %977 = sbr.rel (0) target = $region73
    $region72: #{bayesian_atlas_forward.2} parent=1 // pred_region
      _
    $region73: #{bayesian_atlas_forward.2} parent=1 // pred_fallthru
      _
    %978 = vsyncpa [#allocation5], 1
    %979 = vsyncpa [#allocation7], 1
    %980 = vsyncpa [#allocation10], 1
    %981 = vsyncpa [#allocation13], 1
    %982 = vsyncpa [#allocation16], 1

// kernel: bayesian_atlas_forward.3
$region0: #{bayesian_atlas_forward.3}
  #allocation0 [shape = 'u32[]', space=smem, size = 0x4, offset = 0x4, fixed_abs, tag = 'smem constant byte address 0x4 - core index']
  #allocation1 [shape = 'u32[144,128]{1,0:T(1,128)}', space=vmem, size = 0x12000, scoped, tag = 'internal scratch']
  #allocation2 [shape = 'f32[1,18,288]{2,1,0:T(8,128)}', space=vmem, size = 0x9000, scoped, tag = 'scratch operand']
  %s0 = inlined_call_operand.vmem [shape: f32[2,18,288], index: 0, kind: input, shape index: {}]
  %s1 = inlined_call_operand.vmem [shape: f32[2,16,256], index: 1, kind: output, shape index: {}]
  %s2 = sld [smem:[#allocation0]]
  $region37: #{bayesian_atlas_forward.3} parent=0
    _
  %s4 = ssub.s32 1, %s2
  %s5 = scalar_select 0, %s4, %s2
  loop: start=0, step=1, limit=4
  $region2: #{bayesian_atlas_forward.3} parent=0 // loop_pre_header
    _
  $region3: #{bayesian_atlas_forward.3} parent=0 // loop_header
    %s7 = sphi 0, %s11
    %p8 = scmp.ge.s32.totalorder %s7, 4
    %s17 = sphi 0, %s19
    %s20 = sphi 0, %s17
    %s21 = sphi 0, %s20
    %s37 = sphi 0, %s21
    %s43 = sphi 0, %s45
    %s46 = sphi 0, %s43
    %s47 = sphi 0, %s46
    %s63 = sphi 0, %s47
  $region4: #{bayesian_atlas_forward.3} parent=0 // loop_header_branch
    %10 = sbr.rel (%p8) target = $region8
  $region5: #{bayesian_atlas_forward.3} parent=0 // loop_body
    %s12 = ssub.s32 %s7, 1
    %s13 = ssub.s32 %s7, 2
    %s14 = sadd.s32 %s7, 1
    %s15 = ssub.s32 %s7, %s14
    %p16 = scmp.eq.s32.totalorder %s15, 0
    %s18 = sadd.s32 %s17, 1
    %s19 = scalar_select %p16, %s17, %s18
    %p22 = pneg %p16
    %p23 = scmp.eq.s32.totalorder %s7, 1
    %p24 = por %p22, %p23
    %p25 = scmp.ne.s32.totalorder %s17, %s20
    %p26 = scmp.eq.s32.totalorder %s7, 0
    %p27 = por %p25, %p26
    %p28 = scmp.ne.s32.totalorder %s17, %s20
    %p29 = scmp.eq.s32.totalorder %s12, 1
    %p30 = por %p28, %p29
    %p31 = scmp.ne.s32.totalorder %s20, %s21
    %p32 = scmp.eq.s32.totalorder %s12, 0
    %p33 = por %p31, %p32
    %p34 = scmp.ne.s32.totalorder %s20, %s21
    %p35 = scmp.eq.s32.totalorder %s13, 1
    %p36 = por %p34, %p35
    %p38 = scmp.ne.s32.totalorder %s21, %s37
    %p39 = scmp.eq.s32.totalorder %s13, 0
    %p40 = por %p38, %p39
    %s41 = ssub.s32 %s7, %s14
    %p42 = scmp.eq.s32.totalorder %s41, 0
    %s44 = sadd.s32 %s43, 1
    %s45 = scalar_select %p42, %s43, %s44
    %p48 = pneg %p42
    %p49 = scmp.eq.s32.totalorder %s7, 1
    %p50 = por %p48, %p49
    %p51 = scmp.ne.s32.totalorder %s43, %s46
    %p52 = scmp.eq.s32.totalorder %s7, 0
    %p53 = por %p51, %p52
    %p54 = scmp.ne.s32.totalorder %s43, %s46
    %p55 = scmp.eq.s32.totalorder %s12, 1
    %p56 = por %p54, %p55
    %p57 = scmp.ne.s32.totalorder %s46, %s47
    %p58 = scmp.eq.s32.totalorder %s12, 0
    %p59 = por %p57, %p58
    %p60 = scmp.ne.s32.totalorder %s46, %s47
    %p61 = scmp.eq.s32.totalorder %s13, 1
    %p62 = por %p60, %p61
    %p64 = scmp.ne.s32.totalorder %s47, %s63
    %p65 = scmp.eq.s32.totalorder %s13, 0
    %p66 = por %p64, %p65
    %p67 = scmp.le.s32.totalorder 1, %s7
    %p68 = scmp.lt.s32.totalorder %s7, 3
    %p69 = pnand %p67, %p68
    %p70 = pneg %p69
    // Predicated region
    $region9: #{bayesian_atlas_forward.3} parent=5 // pred_check
      _
    $region10: #{bayesian_atlas_forward.3} parent=5 // pred_check_branch
      %72 = sbr.rel (%p69) target = $region12
    $region11: #{bayesian_atlas_forward.3} parent=5 // pred_region
      %s73 = ssub.s32 %s7, 1
    $region12: #{bayesian_atlas_forward.3} parent=5 // pred_fallthru
      _
    %p74 = scmp.lt.s32.totalorder %s7, 2
    // Predicated region
    $region13: #{bayesian_atlas_forward.3} parent=5 // pred_check
      %p75 = pneg %p74
    $region14: #{bayesian_atlas_forward.3} parent=5 // pred_check_branch
      %77 = sbr.rel (%p75) target = $region16
    $region15: #{bayesian_atlas_forward.3} parent=5 // pred_region
      // Predicated region
      $region17: #{bayesian_atlas_forward.3} parent=15 // pred_check
        %p78 = pneg %p27
      $region18: #{bayesian_atlas_forward.3} parent=15 // pred_check_branch
        %80 = sbr.rel (%p78) target = $region20
      $region19: #{bayesian_atlas_forward.3} parent=15 // pred_region
        %p81 = scmp.lt.s32.totalorder %s7, 1
        %s82 = scalar_select %p81, %s7, 1
        %s83 = smul.addr %s82, 9
        %s84 = smul.addr %s83, 8
        %s85 = scalar_lea.vmem %s0, %s84
      $region20: #{bayesian_atlas_forward.3} parent=15 // pred_fallthru
        _
    $region16: #{bayesian_atlas_forward.3} parent=5 // pred_fallthru
      _
    %p86 = scmp.le.s32.totalorder 1, %s7
    %p87 = scmp.lt.s32.totalorder %s7, 3
    %p88 = pnand %p86, %p87
    %p89 = pneg %p88
    // Predicated region
    $region21: #{bayesian_atlas_forward.3} parent=5 // pred_check
      _
    $region22: #{bayesian_atlas_forward.3} parent=5 // pred_check_branch
      %91 = sbr.rel (%p88) target = $region24
    $region23: #{bayesian_atlas_forward.3} parent=5 // pred_region
      %s92 = ssub.s32 %s7, 1
      %p93 = scmp.lt.s32.totalorder %s12, 1
      %s94 = scalar_select %p93, %s12, 1
      %s95 = smul.addr %s94, 9
      %s96 = smul.addr %s95, 8
      %s97 = scalar_lea.vmem %s0, %s96
      %p98 = pneg %p33
      %p99 = pneg %p30
      %p100 = pneg %p59
      %p101 = pneg %p56
      %p102 = scmp.lt.s32.totalorder %s12, 1
      %s103 = scalar_select %p102, %s12, 1
      %s104 = smul.addr %s103, 4
      %s105 = smul.addr %s104, 8
      %s106 = scalar_lea.vmem %s1, %s105
      %p107 = scmp.lt.s32.totalorder %s12, 1
      %s108 = scalar_select %p107, %s12, 1
      %s109 = smul.addr %s108, 9
      %s110 = smul.addr %s109, 8
      %s111 = scalar_lea.vmem %s0, %s110
      %p112 = scmp.lt.s32.totalorder %s12, 1
      %s113 = scalar_select %p112, %s12, 1
      %s114 = smul.addr %s113, 4
      %s115 = smul.addr %s114, 8
      %s116 = scalar_lea.vmem %s1, %s115
      %v117 = vld [vmem:[%s111] sm:$0xff]
      %v118 = vld [vmem:[%s111 + $0x8] sm:$0xff]
      %v119 = vld [vmem:[%s111 + $0x10] sm:$0xff]
      %v120 = vld [vmem:[%s111 + $0x18] sm:$0xff]
      %v121 = vld [vmem:[%s111 + $0x20] sm:$0xff]
      %v122 = vld [vmem:[%s111 + $0x28] sm:$0xff]
      %v123 = vld [vmem:[%s111 + $0x30] sm:$0x3]
      %v124 = vld [vmem:[%s111 + $0x38] sm:$0x3]
      %v125 = vld [vmem:[%s111 + $0x40] sm:$0x3]
      %v126 = vlaneseq
      %v127 = vand.u32 %v126, 127
      %v128 = vadd.s32 %v127, 128
      %vm129 = vcmp.lt.s32.totalorder %v127, 0
      %v130 = vsub.s32 0, %v127
      %v131 = vsel %vm129, %v130, %v127
      %v132 = vshrl.u32 %v131, 4
      %v133 = vand.u32 %v131, 15
      %v134 = vsub.s32 0, %v133
      %v135 = vsel %vm129, %v134, %v133
      %vm136 = vcmp.lt.s32.totalorder %v128, 0
      %v137 = vsub.s32 0, %v128
      %v138 = vsel %vm136, %v137, %v128
      %v139 = vshrl.u32 %v138, 4
      %v140 = vand.u32 %v138, 15
      %v141 = vsub.s32 0, %v140
      %v142 = vsel %vm136, %v141, %v140
      %vm143 = vcmp.ne.s32.totalorder %v135, 0
      %vm144 = vcmp.ne.s32.totalorder %v142, 0
      %vm145 = vcmp.lt.s32.totalorder %v135, 0
      %vm146 = vcmp.lt.s32.totalorder %v142, 0
      %vm147 = vmand %vm145, %vm143
      %vm148 = vmand %vm146, %vm144
      %v149 = vadd.s32 %v135, 16
      %v150 = vadd.s32 %v142, 16
      %v151 = vsel %vm147, %v149, %v135
      %v152 = vsel %vm148, %v150, %v142
      %vm153 = vcmp.eq.s32.totalorder %v151, 0
      %vm154 = vcmp.eq.s32.totalorder %v152, 0
      %164 = vrot.lane.b32.xlu0 %v117, 113
      %v165 = vpop.permute.xlu0 %164
      %166 = vrot.lane.b32.xlu0 %v118, 113
      %v167 = vpop.permute.xlu0 %166
      %168 = vrot.lane.b32.xlu0 %v119, 113
      %v169 = vpop.permute.xlu0 %168
      %170 = vrot.lane.b32.xlu0 %v120, 113
      %v171 = vpop.permute.xlu0 %170
      %172 = vrot.lane.b32.xlu0 %v121, 113
      %v173 = vpop.permute.xlu0 %172
      %174 = vrot.lane.b32.xlu0 %v122, 113
      %v175 = vpop.permute.xlu0 %174
      %176 = vrot.lane.b32.xlu0 %v123, 113
      %v177 = vpop.permute.xlu0 %176
      %178 = vrot.lane.b32.xlu0 %v124, 113
      %v179 = vpop.permute.xlu0 %178
      %180 = vrot.lane.b32.xlu0 %v125, 113
      %v181 = vpop.permute.xlu0 %180
      %vm182 = vcmask 924672
      %v183 = vsel %vm182, %v165, %v167
      %v184 = vsel %vm182, %v167, %v169
      %v185 = vsel %vm182, %v171, %v173
      %v186 = vsel %vm182, %v173, %v175
      %v187 = vsel %vm182, %v177, %v179
      %v188 = vsel %vm182, %v179, %v181
      %v195 = vsel %vm153, 0.0, %v183
      %v196 = vsel %vm154, 0.0, %v184
      %v197 = vsel %vm153, 0.0, %v185
      %v198 = vsel %vm154, 0.0, %v186
      %v199 = vsel %vm153, 0.0, %v187
      %v200 = vsel %vm154, 0.0, %v188
      %vm201 = vcmp.eq.s32.totalorder %v151, 15
      %vm202 = vcmp.eq.s32.totalorder %v152, 15
      %203 = vrot.lane.b32.xlu0 %v117, 111
      %v204 = vpop.permute.xlu0 %203
      %205 = vrot.lane.b32.xlu0 %v118, 111
      %v206 = vpop.permute.xlu0 %205
      %207 = vrot.lane.b32.xlu0 %v119, 111
      %v208 = vpop.permute.xlu0 %207
      %209 = vrot.lane.b32.xlu0 %v120, 111
      %v210 = vpop.permute.xlu0 %209
      %211 = vrot.lane.b32.xlu0 %v121, 111
      %v212 = vpop.permute.xlu0 %211
      %213 = vrot.lane.b32.xlu0 %v122, 111
      %v214 = vpop.permute.xlu0 %213
      %215 = vrot.lane.b32.xlu0 %v123, 111
      %v216 = vpop.permute.xlu0 %215
      %217 = vrot.lane.b32.xlu0 %v124, 111
      %v218 = vpop.permute.xlu0 %217
      %219 = vrot.lane.b32.xlu0 %v125, 111
      %v220 = vpop.permute.xlu0 %219
      %vm221 = vcmask 908288
      %v222 = vsel %vm221, %v204, %v206
      %v223 = vsel %vm221, %v206, %v208
      %v224 = vsel %vm221, %v210, %v212
      %v225 = vsel %vm221, %v212, %v214
      %v226 = vsel %vm221, %v216, %v218
      %v227 = vsel %vm221, %v218, %v220
      %v234 = vsel %vm201, 0.0, %v222
      %v235 = vsel %vm202, 0.0, %v223
      %v236 = vsel %vm201, 0.0, %v224
      %v237 = vsel %vm202, 0.0, %v225
      %v238 = vsel %vm201, 0.0, %v226
      %v239 = vsel %vm202, 0.0, %v227
      %v240 = vmul.f32 %v117, 0.78698605
      %v241 = vmul.f32 %v118, 0.78698605
      %v242 = vmul.f32 %v119, 0.78698605
      %v243 = vmul.f32 %v120, 0.78698605
      %v244 = vmul.f32 %v121, 0.78698605
      %v245 = vmul.f32 %v122, 0.78698605
      %v246 = vmul.f32 %v123, 0.78698605
      %v247 = vmul.f32 %v124, 0.78698605
      %v248 = vmul.f32 %v125, 0.78698605
      %v249 = vadd.f32 %v195, %v234
      %v250 = vadd.f32 %v196, %v235
      %v251 = vadd.f32 %v197, %v236
      %v252 = vadd.f32 %v198, %v237
      %v253 = vadd.f32 %v199, %v238
      %v254 = vadd.f32 %v200, %v239
      %v255 = vmul.f32 %v249, 0.10650698
      %v256 = vmul.f32 %v250, 0.10650698
      %v257 = vmul.f32 %v251, 0.10650698
      %v258 = vmul.f32 %v252, 0.10650698
      %v259 = vmul.f32 %v253, 0.10650698
      %v260 = vmul.f32 %v254, 0.10650698
      %267 = vrot.lane.b32.xlu0 %v255, 16
      %v268 = vpop.permute.xlu0 %267
      %269 = vrot.lane.b32.xlu0 %v256, 16
      %v270 = vpop.permute.xlu0 %269
      %271 = vrot.lane.b32.xlu0 %v257, 16
      %v272 = vpop.permute.xlu0 %271
      %273 = vrot.lane.b32.xlu0 %v258, 16
      %v274 = vpop.permute.xlu0 %273
      %275 = vrot.lane.b32.xlu0 %v259, 16
      %v276 = vpop.permute.xlu0 %275
      %277 = vrot.lane.b32.xlu0 %v260, 16
      %v278 = vpop.permute.xlu0 %277
      %vm279 = vcmask 130048
      %v280 = vsel %vm279, %v268, %v270
      %v281 = vsel %vm279, %v272, %v274
      %v282 = vsel %vm279, %v276, %v278
      %v292 = vadd.f32 %v240, %v268
      %v293 = vadd.f32 %v241, %v280
      %v294 = vadd.f32 %v242, %v270
      %v295 = vadd.f32 %v243, %v272
      %v296 = vadd.f32 %v244, %v281
      %v297 = vadd.f32 %v245, %v274
      %v298 = vadd.f32 %v246, %v276
      %v299 = vadd.f32 %v247, %v282
      %v300 = vadd.f32 %v248, %v278
      %301 = vst.msk [vmem:[#allocation2] sm:$0xff] %vm279, 0.0
      %302 = vst.msk [vmem:[#allocation2 + $0x18] sm:$0xff] %vm279, 0.0
      %vm303 = vcmask 123904
      %304 = vst.msk [vmem:[#allocation2 + $0x30] sm:$0x3] %vm303, 0.0
      %vm305 = vcmask 261248
      %306 = vst.msk [vmem:[#allocation2 + $0x10] sm:$0xff] %vm305, 0.0
      %307 = vst.msk [vmem:[#allocation2 + $0x28] sm:$0xff] %vm305, 0.0
      %vm308 = vcmask 255104
      %309 = vst.msk [vmem:[#allocation2 + $0x40] sm:$0x3] %vm308, 0.0
      %vm310 = vcmask 1047680
      %311 = vst.msk [vmem:[#allocation2] sm:$0xff] %vm310, %v292
      %312 = vst [vmem:[#allocation2 + $0x8] sm:$0xff] %v293
      %313 = vst.msk [vmem:[#allocation2 + $0x10] sm:$0xff] %vm279, %v294
      %314 = vst.msk [vmem:[#allocation2 + $0x18] sm:$0xff] %vm310, %v295
      %315 = vst [vmem:[#allocation2 + $0x20] sm:$0xff] %v296
      %316 = vst.msk [vmem:[#allocation2 + $0x28] sm:$0xff] %vm279, %v297
      %vm317 = vcmask 1041536
      %318 = vst.msk [vmem:[#allocation2 + $0x30] sm:$0x3] %vm317, %v298
      %319 = vst [vmem:[#allocation2 + $0x38] sm:$0x3] %v299
      %320 = vst.msk [vmem:[#allocation2 + $0x40] sm:$0x3] %vm303, %v300
      %v321 = vmul.f32 %v292, 0.78698605
      %v322 = vmul.f32 %v293, 0.78698605
      %v323 = vmul.f32 %v294, 0.78698605
      %v324 = vmul.f32 %v295, 0.78698605
      %v325 = vmul.f32 %v296, 0.78698605
      %v326 = vmul.f32 %v297, 0.78698605
      %v327 = vmul.f32 %v298, 0.78698605
      %v328 = vmul.f32 %v299, 0.78698605
      %v329 = vmul.f32 %v300, 0.78698605
      %v330 = vld [vmem:[#allocation2] sm:$0xff]
      %v331 = vld [vmem:[#allocation2 + $0x8] sm:$0xff]
      %v332 = vld [vmem:[#allocation2 + $0x18] sm:$0xff]
      %v333 = vld [vmem:[#allocation2 + $0x20] sm:$0xff]
      %v334 = vld [vmem:[#allocation2 + $0x30] sm:$0x3]
      %v335 = vld [vmem:[#allocation2 + $0x38] sm:$0x3]
      %v336 = vld [vmem:[#allocation2 + $0x10] sm:$0xff]
      %v337 = vld [vmem:[#allocation2 + $0x28] sm:$0xff]
      %v338 = vld [vmem:[#allocation2 + $0x40] sm:$0x3]
      %348 = vrot.lane.b32.xlu0 %v330, 96
      %v349 = vpop.permute.xlu0 %348
      %350 = vrot.lane.b32.xlu0 %v331, 96
      %v351 = vpop.permute.xlu0 %350
      %352 = vrot.lane.b32.xlu0 %v336, 96
      %v353 = vpop.permute.xlu0 %352
      %354 = vrot.lane.b32.xlu0 %v332, 96
      %v355 = vpop.permute.xlu0 %354
      %356 = vrot.lane.b32.xlu0 %v333, 96
      %v357 = vpop.permute.xlu0 %356
      %358 = vrot.lane.b32.xlu0 %v337, 96
      %v359 = vpop.permute.xlu0 %358
      %360 = vrot.lane.b32.xlu0 %v334, 96
      %v361 = vpop.permute.xlu0 %360
      %362 = vrot.lane.b32.xlu0 %v335, 96
      %v363 = vpop.permute.xlu0 %362
      %364 = vrot.lane.b32.xlu0 %v338, 96
      %v365 = vpop.permute.xlu0 %364
      %vm366 = vcmask 785408
      %v367 = vsel %vm366, %v349, %v351
      %v368 = vsel %vm366, %v351, %v353
      %v369 = vsel %vm366, %v355, %v357
      %v370 = vsel %vm366, %v357, %v359
      %v371 = vsel %vm366, %v361, %v363
      %v372 = vsel %vm366, %v363, %v365
      %v379 = vadd.f32 %v330, %v367
      %v380 = vadd.f32 %v331, %v368
      %v381 = vadd.f32 %v332, %v369
      %v382 = vadd.f32 %v333, %v370
      %v383 = vadd.f32 %v334, %v371
      %v384 = vadd.f32 %v335, %v372
      %v385 = vmul.f32 %v379, 0.10650698
      %v386 = vmul.f32 %v380, 0.10650698
      %v387 = vmul.f32 %v381, 0.10650698
      %v388 = vmul.f32 %v382, 0.10650698
      %v389 = vmul.f32 %v383, 0.10650698
      %v390 = vmul.f32 %v384, 0.10650698
      %397 = vrot.lane.b32.xlu0 %v385, 16
      %v398 = vpop.permute.xlu0 %397
      %399 = vrot.lane.b32.xlu0 %v386, 16
      %v400 = vpop.permute.xlu0 %399
      %401 = vrot.lane.b32.xlu0 %v387, 16
      %v402 = vpop.permute.xlu0 %401
      %403 = vrot.lane.b32.xlu0 %v388, 16
      %v404 = vpop.permute.xlu0 %403
      %405 = vrot.lane.b32.xlu0 %v389, 16
      %v406 = vpop.permute.xlu0 %405
      %407 = vrot.lane.b32.xlu0 %v390, 16
      %v408 = vpop.permute.xlu0 %407
      %v409 = vsel %vm279, %v398, %v400
      %v410 = vsel %vm279, %v402, %v404
      %v411 = vsel %vm279, %v406, %v408
      %v421 = vadd.f32 %v321, %v398
      %v422 = vadd.f32 %v322, %v409
      %v423 = vadd.f32 %v323, %v400
      %v424 = vadd.f32 %v324, %v402
      %v425 = vadd.f32 %v325, %v410
      %v426 = vadd.f32 %v326, %v404
      %v427 = vadd.f32 %v327, %v406
      %v428 = vadd.f32 %v328, %v411
      %v429 = vadd.f32 %v329, %v408
      %430 = vst.msk [vmem:[#allocation2] sm:$0xff] %vm310, %v421
      %431 = vst [vmem:[#allocation2 + $0x8] sm:$0xff] %v422
      %432 = vst.msk [vmem:[#allocation2 + $0x10] sm:$0xff] %vm279, %v423
      %433 = vst.msk [vmem:[#allocation2 + $0x18] sm:$0xff] %vm310, %v424
      %434 = vst [vmem:[#allocation2 + $0x20] sm:$0xff] %v425
      %435 = vst.msk [vmem:[#allocation2 + $0x28] sm:$0xff] %vm279, %v426
      %436 = vst.msk [vmem:[#allocation2 + $0x30] sm:$0x3] %vm317, %v427
      %437 = vst [vmem:[#allocation2 + $0x38] sm:$0x3] %v428
      %438 = vst.msk [vmem:[#allocation2 + $0x40] sm:$0x3] %vm303, %v429
      %v439 = vld [vmem:[#allocation2] sm:$0xfe]
      %v440 = vld [vmem:[#allocation2 + $0x8] sm:$0xfe]
      %v441 = vld [vmem:[#allocation2 + $0x10] sm:$0xfe]
      %v442 = vld [vmem:[#allocation2 + $0x18] sm:$0xff]
      %v443 = vld [vmem:[#allocation2 + $0x20] sm:$0xff]
      %v444 = vld [vmem:[#allocation2 + $0x28] sm:$0xff]
      %v445 = vld [vmem:[#allocation2 + $0x30] sm:$0x1]
      %v446 = vld [vmem:[#allocation2 + $0x38] sm:$0x1]
      %v447 = vld [vmem:[#allocation2 + $0x40] sm:$0x1]
      %v448 = vmul.f32 %v439, 0.78698605
      %v449 = vmul.f32 %v440, 0.78698605
      %v450 = vmul.f32 %v441, 0.78698605
      %v451 = vmul.f32 %v442, 0.78698605
      %v452 = vmul.f32 %v443, 0.78698605
      %v453 = vmul.f32 %v444, 0.78698605
      %v454 = vmul.f32 %v445, 0.78698605
      %v455 = vmul.f32 %v446, 0.78698605
      %v456 = vmul.f32 %v447, 0.78698605
      %v457 = vld [vmem:[#allocation2] sm:$0xff]
      %v458 = vld [vmem:[#allocation2 + $0x8] sm:$0xff]
      %v459 = vld [vmem:[#allocation2 + $0x10] sm:$0xff]
      %v460 = vld [vmem:[#allocation2] sm:$0xfc]
      %v461 = vld [vmem:[#allocation2 + $0x8] sm:$0xfc]
      %v462 = vld [vmem:[#allocation2 + $0x10] sm:$0xfc]
      %v463 = vld [vmem:[#allocation2 + $0x30] sm:$0x3]
      %v464 = vld [vmem:[#allocation2 + $0x38] sm:$0x3]
      %v465 = vld [vmem:[#allocation2 + $0x40] sm:$0x3]
      %vm475 = vcmask 1045504
      %v476 = vrot.slane %v460, 2
      %v477 = vrot.slane %v442, 2
      %v478 = vsel %vm475, %v476, %v477
      %v479 = vrot.slane %v461, 2
      %v480 = vrot.slane %v443, 2
      %v481 = vsel %vm475, %v479, %v480
      %v482 = vrot.slane %v462, 2
      %v483 = vrot.slane %v444, 2
      %v484 = vsel %vm475, %v482, %v483
      %v485 = vrot.slane %v463, 2
      %v486 = vsel %vm475, %v477, %v485
      %v487 = vrot.slane %v464, 2
      %v488 = vsel %vm475, %v480, %v487
      %v489 = vrot.slane %v465, 2
      %v490 = vsel %vm475, %v483, %v489
      %v497 = vadd.f32 %v457, %v478
      %v498 = vadd.f32 %v458, %v481
      %v499 = vadd.f32 %v459, %v484
      %v500 = vadd.f32 %v442, %v486
      %v501 = vadd.f32 %v443, %v488
      %v502 = vadd.f32 %v444, %v490
      %v503 = vmul.f32 %v497, 0.10650698
      %v504 = vmul.f32 %v498, 0.10650698
      %v505 = vmul.f32 %v499, 0.10650698
      %v506 = vmul.f32 %v500, 0.10650698
      %v507 = vmul.f32 %v501, 0.10650698
      %v508 = vmul.f32 %v502, 0.10650698
      %vm515 = vcmask 1040384
      %v516 = vrot.slane %v503, 7
      %v517 = vrot.slane %v504, 7
      %v518 = vrot.slane %v505, 7
      %v519 = vrot.slane %v506, 7
      %v520 = vsel %vm515, %v516, %v519
      %v521 = vrot.slane %v507, 7
      %v522 = vsel %vm515, %v517, %v521
      %v523 = vrot.slane %v508, 7
      %v524 = vsel %vm515, %v518, %v523
      %v534 = vadd.f32 %v448, %v516
      %v535 = vadd.f32 %v449, %v517
      %v536 = vadd.f32 %v450, %v518
      %v537 = vadd.f32 %v451, %v520
      %v538 = vadd.f32 %v452, %v522
      %v539 = vadd.f32 %v453, %v524
      %v540 = vadd.f32 %v454, %v519
      %v541 = vadd.f32 %v455, %v521
      %v542 = vadd.f32 %v456, %v523
      %vm552 = vcmask 1046528
      %v553 = vrot.slane %v534, 1
      %v554 = vrot.slane %v537, 1
      %v555 = vsel %vm552, %v553, %v554
      %v556 = vrot.slane %v535, 1
      %v557 = vrot.slane %v538, 1
      %v558 = vsel %vm552, %v556, %v557
      %v559 = vrot.slane %v536, 1
      %v560 = vrot.slane %v539, 1
      %v561 = vsel %vm552, %v559, %v560
      %v562 = vrot.slane %v540, 1
      %v563 = vsel %vm552, %v554, %v562
      %v564 = vrot.slane %v541, 1
      %v565 = vsel %vm552, %v557, %v564
      %v566 = vrot.slane %v542, 1
      %v567 = vsel %vm552, %v560, %v566
      %568 = vrot.lane.b32.xlu0 %v555, 112
      %v569 = vpop.permute.xlu0 %568
      %570 = vrot.lane.b32.xlu0 %v558, 112
      %v571 = vpop.permute.xlu0 %570
      %572 = vrot.lane.b32.xlu0 %v561, 112
      %v573 = vpop.permute.xlu0 %572
      %574 = vrot.lane.b32.xlu0 %v563, 112
      %v575 = vpop.permute.xlu0 %574
      %576 = vrot.lane.b32.xlu0 %v565, 112
      %v577 = vpop.permute.xlu0 %576
      %578 = vrot.lane.b32.xlu0 %v567, 112
      %v579 = vpop.permute.xlu0 %578
      %vm580 = vcmask 916480
      %v581 = vsel %vm580, %v569, %v571
      %v582 = vsel %vm580, %v571, %v573
      %v583 = vsel %vm580, %v575, %v577
      %v584 = vsel %vm580, %v577, %v579
      %589 = vst [vmem:[%s116] sm:$0xff] %v581
      %590 = vst [vmem:[%s116 + $0x8] sm:$0xff] %v582
      %591 = vst [vmem:[%s116 + $0x10] sm:$0xff] %v583
      %592 = vst [vmem:[%s116 + $0x18] sm:$0xff] %v584
      %p593 = scmp.lt.s32.totalorder %s12, 1
      %s594 = scalar_select %p593, %s12, 1
      %s595 = smul.addr %s594, 4
      %s596 = smul.addr %s595, 8
      %s597 = scalar_lea.vmem %s1, %s596
      // Predicated region
      $region25: #{bayesian_atlas_forward.3} parent=23 // pred_check
        %p598 = pneg %p56
      $region26: #{bayesian_atlas_forward.3} parent=23 // pred_check_branch
        %600 = sbr.rel (%p598) target = $region28
      $region27: #{bayesian_atlas_forward.3} parent=23 // pred_region
        _
      $region28: #{bayesian_atlas_forward.3} parent=23 // pred_fallthru
        _
    $region24: #{bayesian_atlas_forward.3} parent=5 // pred_fallthru
      _
    %p601 = scmp.le.s32.totalorder 2, %s7
    // Predicated region
    $region29: #{bayesian_atlas_forward.3} parent=5 // pred_check
      %p602 = pneg %p601
    $region30: #{bayesian_atlas_forward.3} parent=5 // pred_check_branch
      %604 = sbr.rel (%p602) target = $region32
    $region31: #{bayesian_atlas_forward.3} parent=5 // pred_region
      %s605 = ssub.s32 %s7, 2
      // Predicated region
      $region33: #{bayesian_atlas_forward.3} parent=31 // pred_check
        %p606 = pneg %p62
      $region34: #{bayesian_atlas_forward.3} parent=31 // pred_check_branch
        %608 = sbr.rel (%p606) target = $region36
      $region35: #{bayesian_atlas_forward.3} parent=31 // pred_region
        %p609 = scmp.lt.s32.totalorder %s13, 1
        %s610 = scalar_select %p609, %s13, 1
        %s611 = smul.addr %s610, 4
        %s612 = smul.addr %s611, 8
        %s613 = scalar_lea.vmem %s1, %s612
      $region36: #{bayesian_atlas_forward.3} parent=31 // pred_fallthru
        _
    $region32: #{bayesian_atlas_forward.3} parent=5 // pred_fallthru
      _
  $region6: #{bayesian_atlas_forward.3} parent=0 // loop_footer
    %s11 = sadd.s32 1, %s7
  $region7: #{bayesian_atlas_forward.3} parent=0 // loop_footer_branch
    %6 = sbr.rel target = $region3
  $region8: #{bayesian_atlas_forward.3} parent=0 // loop_exit
    _

// kernel: squeeze.3
$region0: #{squeeze.3}
  %s0 = inlined_call_operand.vmem [shape: f32[1,32,32,32], index: 0, kind: input, shape index: {}]
  %s1 = inlined_call_operand.vmem [shape: f32[32768], index: 1, kind: output, shape index: {}]
  %v2 = vld [vmem:[%s0] ss:$4 sm:$0xff]
  %vm3 = vcmask 261120
  %4 = vst.msk [vmem:[%s1] sm:$0xff] %vm3, %v2
  %s5 = scalar_lea.vmem %s0, 32
  %v6 = vld [vmem:[%s5] ss:$4 sm:$0xff]
  %vm7 = vcmask 261120
  %s8 = scalar_lea.vmem %s1, 8
  %9 = vst.msk [vmem:[%s8] sm:$0xff] %vm7, %v6
  %s10 = scalar_lea.vmem %s0, 64
  %v11 = vld [vmem:[%s10] ss:$4 sm:$0xff]
  %vm12 = vcmask 261120
  %s13 = scalar_lea.vmem %s1, 16
  %14 = vst.msk [vmem:[%s13] sm:$0xff] %vm12, %v11
  %s15 = scalar_lea.vmem %s0, 96
  %v16 = vld [vmem:[%s15] ss:$4 sm:$0xff]
  %vm17 = vcmask 261120
  %s18 = scalar_lea.vmem %s1, 24
  %19 = vst.msk [vmem:[%s18] sm:$0xff] %vm17, %v16
  %s20 = scalar_lea.vmem %s0, 128
  %v21 = vld [vmem:[%s20] ss:$4 sm:$0xff]
  %vm22 = vcmask 261120
  %s23 = scalar_lea.vmem %s1, 32
  %24 = vst.msk [vmem:[%s23] sm:$0xff] %vm22, %v21
  %s25 = scalar_lea.vmem %s0, 160
  %v26 = vld [vmem:[%s25] ss:$4 sm:$0xff]
  %vm27 = vcmask 261120
  %s28 = scalar_lea.vmem %s1, 40
  %29 = vst.msk [vmem:[%s28] sm:$0xff] %vm27, %v26
  %s30 = scalar_lea.vmem %s0, 192
  %v31 = vld [vmem:[%s30] ss:$4 sm:$0xff]
  %vm32 = vcmask 261120
  %s33 = scalar_lea.vmem %s1, 48
  %34 = vst.msk [vmem:[%s33] sm:$0xff] %vm32, %v31
  %s35 = scalar_lea.vmem %s0, 224
  %v36 = vld [vmem:[%s35] ss:$4 sm:$0xff]
  %vm37 = vcmask 261120
  %s38 = scalar_lea.vmem %s1, 56
  %39 = vst.msk [vmem:[%s38] sm:$0xff] %vm37, %v36
  %s40 = scalar_lea.vmem %s0, 256
  %v41 = vld [vmem:[%s40] ss:$4 sm:$0xff]
  %vm42 = vcmask 261120
  %s43 = scalar_lea.vmem %s1, 64
  %44 = vst.msk [vmem:[%s43] sm:$0xff] %vm42, %v41
  %s45 = scalar_lea.vmem %s0, 288
  %v46 = vld [vmem:[%s45] ss:$4 sm:$0xff]
  %vm47 = vcmask 261120
  %s48 = scalar_lea.vmem %s1, 72
  %49 = vst.msk [vmem:[%s48] sm:$0xff] %vm47, %v46
  %s50 = scalar_lea.vmem %s0, 320
  %v51 = vld [vmem:[%s50] ss:$4 sm:$0xff]
  %vm52 = vcmask 261120
  %s53 = scalar_lea.vmem %s1, 80
  %54 = vst.msk [vmem:[%s53] sm:$0xff] %vm52, %v51
  %s55 = scalar_lea.vmem %s0, 352
  %v56 = vld [vmem:[%s55] ss:$4 sm:$0xff]
  %vm57 = vcmask 261120
  %s58 = scalar_lea.vmem %s1, 88
  %59 = vst.msk [vmem:[%s58] sm:$0xff] %vm57, %v56
  %s60 = scalar_lea.vmem %s0, 384
  %v61 = vld [vmem:[%s60] ss:$4 sm:$0xff]
  %vm62 = vcmask 261120
  %s63 = scalar_lea.vmem %s1, 96
  %64 = vst.msk [vmem:[%s63] sm:$0xff] %vm62, %v61
  %s65 = scalar_lea.vmem %s0, 416
  %v66 = vld [vmem:[%s65] ss:$4 sm:$0xff]
  %vm67 = vcmask 261120
  %s68 = scalar_lea.vmem %s1, 104
  %69 = vst.msk [vmem:[%s68] sm:$0xff] %vm67, %v66
  %s70 = scalar_lea.vmem %s0, 448
  %v71 = vld [vmem:[%s70] ss:$4 sm:$0xff]
  %vm72 = vcmask 261120
  %s73 = scalar_lea.vmem %s1, 112
  %74 = vst.msk [vmem:[%s73] sm:$0xff] %vm72, %v71
  %s75 = scalar_lea.vmem %s0, 480
  %v76 = vld [vmem:[%s75] ss:$4 sm:$0xff]
  %vm77 = vcmask 261120
  %s78 = scalar_lea.vmem %s1, 120
  %79 = vst.msk [vmem:[%s78] sm:$0xff] %vm77, %v76
  %s80 = scalar_lea.vmem %s0, 512
  %v81 = vld [vmem:[%s80] ss:$4 sm:$0xff]
  %vm82 = vcmask 261120
  %s83 = scalar_lea.vmem %s1, 128
  %84 = vst.msk [vmem:[%s83] sm:$0xff] %vm82, %v81
  %s85 = scalar_lea.vmem %s0, 544
  %v86 = vld [vmem:[%s85] ss:$4 sm:$0xff]
  %vm87 = vcmask 261120
  %s88 = scalar_lea.vmem %s1, 136
  %89 = vst.msk [vmem:[%s88] sm:$0xff] %vm87, %v86
  %s90 = scalar_lea.vmem %s0, 576
  %v91 = vld [vmem:[%s90] ss:$4 sm:$0xff]
  %vm92 = vcmask 261120
  %s93 = scalar_lea.vmem %s1, 144
  %94 = vst.msk [vmem:[%s93] sm:$0xff] %vm92, %v91
  %s95 = scalar_lea.vmem %s0, 608
  %v96 = vld [vmem:[%s95] ss:$4 sm:$0xff]
  %vm97 = vcmask 261120
  %s98 = scalar_lea.vmem %s1, 152
  %99 = vst.msk [vmem:[%s98] sm:$0xff] %vm97, %v96
  %s100 = scalar_lea.vmem %s0, 640
  %v101 = vld [vmem:[%s100] ss:$4 sm:$0xff]
  %vm102 = vcmask 261120
  %s103 = scalar_lea.vmem %s1, 160
  %104 = vst.msk [vmem:[%s103] sm:$0xff] %vm102, %v101
  %s105 = scalar_lea.vmem %s0, 672
  %v106 = vld [vmem:[%s105] ss:$4 sm:$0xff]
  %vm107 = vcmask 261120
  %s108 = scalar_lea.vmem %s1, 168
  %109 = vst.msk [vmem:[%s108] sm:$0xff] %vm107, %v106
  %s110 = scalar_lea.vmem %s0, 704
  %v111 = vld [vmem:[%s110] ss:$4 sm:$0xff]
  %vm112 = vcmask 261120
  %s113 = scalar_lea.vmem %s1, 176
  %114 = vst.msk [vmem:[%s113] sm:$0xff] %vm112, %v111
  %s115 = scalar_lea.vmem %s0, 736
  %v116 = vld [vmem:[%s115] ss:$4 sm:$0xff]
  %vm117 = vcmask 261120
  %s118 = scalar_lea.vmem %s1, 184
  %119 = vst.msk [vmem:[%s118] sm:$0xff] %vm117, %v116
  %s120 = scalar_lea.vmem %s0, 768
  %v121 = vld [vmem:[%s120] ss:$4 sm:$0xff]
  %vm122 = vcmask 261120
  %s123 = scalar_lea.vmem %s1, 192
  %124 = vst.msk [vmem:[%s123] sm:$0xff] %vm122, %v121
  %s125 = scalar_lea.vmem %s0, 800
  %v126 = vld [vmem:[%s125] ss:$4 sm:$0xff]
  %vm127 = vcmask 261120
  %s128 = scalar_lea.vmem %s1, 200
  %129 = vst.msk [vmem:[%s128] sm:$0xff] %vm127, %v126
  %s130 = scalar_lea.vmem %s0, 832
  %v131 = vld [vmem:[%s130] ss:$4 sm:$0xff]
  %vm132 = vcmask 261120
  %s133 = scalar_lea.vmem %s1, 208
  %134 = vst.msk [vmem:[%s133] sm:$0xff] %vm132, %v131
  %s135 = scalar_lea.vmem %s0, 864
  %v136 = vld [vmem:[%s135] ss:$4 sm:$0xff]
  %vm137 = vcmask 261120
  %s138 = scalar_lea.vmem %s1, 216
  %139 = vst.msk [vmem:[%s138] sm:$0xff] %vm137, %v136
  %s140 = scalar_lea.vmem %s0, 896
  %v141 = vld [vmem:[%s140] ss:$4 sm:$0xff]
  %vm142 = vcmask 261120
  %s143 = scalar_lea.vmem %s1, 224
  %144 = vst.msk [vmem:[%s143] sm:$0xff] %vm142, %v141
  %s145 = scalar_lea.vmem %s0, 928
  %v146 = vld [vmem:[%s145] ss:$4 sm:$0xff]
  %vm147 = vcmask 261120
  %s148 = scalar_lea.vmem %s1, 232
  %149 = vst.msk [vmem:[%s148] sm:$0xff] %vm147, %v146
  %s150 = scalar_lea.vmem %s0, 960
  %v151 = vld [vmem:[%s150] ss:$4 sm:$0xff]
  %vm152 = vcmask 261120
  %s153 = scalar_lea.vmem %s1, 240
  %154 = vst.msk [vmem:[%s153] sm:$0xff] %vm152, %v151
  %s155 = scalar_lea.vmem %s0, 992
  %v156 = vld [vmem:[%s155] ss:$4 sm:$0xff]
  %vm157 = vcmask 261120
  %s158 = scalar_lea.vmem %s1, 248
  %159 = vst.msk [vmem:[%s158] sm:$0xff] %vm157, %v156
  %s160 = scalar_lea.vmem %s0, 3
  %v161 = vld [vmem:[%s160] ss:$4 sm:$0xff]
  %162 = vrot.lane.b32.xlu0 %v161, 96
  %v163 = vpop.permute.xlu0 %162
  %vm164 = vcmask 1048320
  %165 = vst.msk [vmem:[%s1] sm:$0xff] %vm164, %v163
  %s166 = scalar_lea.vmem %s0, 131
  %v167 = vld [vmem:[%s166] ss:$4 sm:$0xff]
  %168 = vrot.lane.b32.xlu0 %v167, 96
  %v169 = vpop.permute.xlu0 %168
  %vm170 = vcmask 1048320
  %s171 = scalar_lea.vmem %s1, 32
  %172 = vst.msk [vmem:[%s171] sm:$0xff] %vm170, %v169
  %s173 = scalar_lea.vmem %s0, 259
  %v174 = vld [vmem:[%s173] ss:$4 sm:$0xff]
  %175 = vrot.lane.b32.xlu0 %v174, 96
  %v176 = vpop.permute.xlu0 %175
  %vm177 = vcmask 1048320
  %s178 = scalar_lea.vmem %s1, 64
  %179 = vst.msk [vmem:[%s178] sm:$0xff] %vm177, %v176
  %s180 = scalar_lea.vmem %s0, 387
  %v181 = vld [vmem:[%s180] ss:$4 sm:$0xff]
  %182 = vrot.lane.b32.xlu0 %v181, 96
  %v183 = vpop.permute.xlu0 %182
  %vm184 = vcmask 1048320
  %s185 = scalar_lea.vmem %s1, 96
  %186 = vst.msk [vmem:[%s185] sm:$0xff] %vm184, %v183
  %s187 = scalar_lea.vmem %s0, 515
  %v188 = vld [vmem:[%s187] ss:$4 sm:$0xff]
  %189 = vrot.lane.b32.xlu0 %v188, 96
  %v190 = vpop.permute.xlu0 %189
  %vm191 = vcmask 1048320
  %s192 = scalar_lea.vmem %s1, 128
  %193 = vst.msk [vmem:[%s192] sm:$0xff] %vm191, %v190
  %s194 = scalar_lea.vmem %s0, 643
  %v195 = vld [vmem:[%s194] ss:$4 sm:$0xff]
  %196 = vrot.lane.b32.xlu0 %v195, 96
  %v197 = vpop.permute.xlu0 %196
  %vm198 = vcmask 1048320
  %s199 = scalar_lea.vmem %s1, 160
  %200 = vst.msk [vmem:[%s199] sm:$0xff] %vm198, %v197
  %s201 = scalar_lea.vmem %s0, 771
  %v202 = vld [vmem:[%s201] ss:$4 sm:$0xff]
  %203 = vrot.lane.b32.xlu0 %v202, 96
  %v204 = vpop.permute.xlu0 %203
  %vm205 = vcmask 1048320
  %s206 = scalar_lea.vmem %s1, 192
  %207 = vst.msk [vmem:[%s206] sm:$0xff] %vm205, %v204
  %s208 = scalar_lea.vmem %s0, 899
  %v209 = vld [vmem:[%s208] ss:$4 sm:$0xff]
  %210 = vrot.lane.b32.xlu0 %v209, 96
  %v211 = vpop.permute.xlu0 %210
  %vm212 = vcmask 1048320
  %s213 = scalar_lea.vmem %s1, 224
  %214 = vst.msk [vmem:[%s213] sm:$0xff] %vm212, %v211
  %s215 = scalar_lea.vmem %s0, 35
  %v216 = vld [vmem:[%s215] ss:$4 sm:$0xff]
  %217 = vrot.lane.b32.xlu0 %v216, 96
  %v218 = vpop.permute.xlu0 %217
  %vm219 = vcmask 1048320
  %s220 = scalar_lea.vmem %s1, 8
  %221 = vst.msk [vmem:[%s220] sm:$0xff] %vm219, %v218
  %s222 = scalar_lea.vmem %s0, 163
  %v223 = vld [vmem:[%s222] ss:$4 sm:$0xff]
  %224 = vrot.lane.b32.xlu0 %v223, 96
  %v225 = vpop.permute.xlu0 %224
  %vm226 = vcmask 1048320
  %s227 = scalar_lea.vmem %s1, 40
  %228 = vst.msk [vmem:[%s227] sm:$0xff] %vm226, %v225
  %s229 = scalar_lea.vmem %s0, 291
  %v230 = vld [vmem:[%s229] ss:$4 sm:$0xff]
  %231 = vrot.lane.b32.xlu0 %v230, 96
  %v232 = vpop.permute.xlu0 %231
  %vm233 = vcmask 1048320
  %s234 = scalar_lea.vmem %s1, 72
  %235 = vst.msk [vmem:[%s234] sm:$0xff] %vm233, %v232
  %s236 = scalar_lea.vmem %s0, 419
  %v237 = vld [vmem:[%s236] ss:$4 sm:$0xff]
  %238 = vrot.lane.b32.xlu0 %v237, 96
  %v239 = vpop.permute.xlu0 %238
  %vm240 = vcmask 1048320
  %s241 = scalar_lea.vmem %s1, 104
  %242 = vst.msk [vmem:[%s241] sm:$0xff] %vm240, %v239
  %s243 = scalar_lea.vmem %s0, 547
  %v244 = vld [vmem:[%s243] ss:$4 sm:$0xff]
  %245 = vrot.lane.b32.xlu0 %v244, 96
  %v246 = vpop.permute.xlu0 %245
  %vm247 = vcmask 1048320
  %s248 = scalar_lea.vmem %s1, 136
  %249 = vst.msk [vmem:[%s248] sm:$0xff] %vm247, %v246
  %s250 = scalar_lea.vmem %s0, 675
  %v251 = vld [vmem:[%s250] ss:$4 sm:$0xff]
  %252 = vrot.lane.b32.xlu0 %v251, 96
  %v253 = vpop.permute.xlu0 %252
  %vm254 = vcmask 1048320
  %s255 = scalar_lea.vmem %s1, 168
  %256 = vst.msk [vmem:[%s255] sm:$0xff] %vm254, %v253
  %s257 = scalar_lea.vmem %s0, 803
  %v258 = vld [vmem:[%s257] ss:$4 sm:$0xff]
  %259 = vrot.lane.b32.xlu0 %v258, 96
  %v260 = vpop.permute.xlu0 %259
  %vm261 = vcmask 1048320
  %s262 = scalar_lea.vmem %s1, 200
  %263 = vst.msk [vmem:[%s262] sm:$0xff] %vm261, %v260
  %s264 = scalar_lea.vmem %s0, 931
  %v265 = vld [vmem:[%s264] ss:$4 sm:$0xff]
  %266 = vrot.lane.b32.xlu0 %v265, 96
  %v267 = vpop.permute.xlu0 %266
  %vm268 = vcmask 1048320
  %s269 = scalar_lea.vmem %s1, 232
  %270 = vst.msk [vmem:[%s269] sm:$0xff] %vm268, %v267
  %s271 = scalar_lea.vmem %s0, 67
  %v272 = vld [vmem:[%s271] ss:$4 sm:$0xff]
  %273 = vrot.lane.b32.xlu0 %v272, 96
  %v274 = vpop.permute.xlu0 %273
  %vm275 = vcmask 1048320
  %s276 = scalar_lea.vmem %s1, 16
  %277 = vst.msk [vmem:[%s276] sm:$0xff] %vm275, %v274
  %s278 = scalar_lea.vmem %s0, 195
  %v279 = vld [vmem:[%s278] ss:$4 sm:$0xff]
  %280 = vrot.lane.b32.xlu0 %v279, 96
  %v281 = vpop.permute.xlu0 %280
  %vm282 = vcmask 1048320
  %s283 = scalar_lea.vmem %s1, 48
  %284 = vst.msk [vmem:[%s283] sm:$0xff] %vm282, %v281
  %s285 = scalar_lea.vmem %s0, 323
  %v286 = vld [vmem:[%s285] ss:$4 sm:$0xff]
  %287 = vrot.lane.b32.xlu0 %v286, 96
  %v288 = vpop.permute.xlu0 %287
  %vm289 = vcmask 1048320
  %s290 = scalar_lea.vmem %s1, 80
  %291 = vst.msk [vmem:[%s290] sm:$0xff] %vm289, %v288
  %s292 = scalar_lea.vmem %s0, 451
  %v293 = vld [vmem:[%s292] ss:$4 sm:$0xff]
  %294 = vrot.lane.b32.xlu0 %v293, 96
  %v295 = vpop.permute.xlu0 %294
  %vm296 = vcmask 1048320
  %s297 = scalar_lea.vmem %s1, 112
  %298 = vst.msk [vmem:[%s297] sm:$0xff] %vm296, %v295
  %s299 = scalar_lea.vmem %s0, 579
  %v300 = vld [vmem:[%s299] ss:$4 sm:$0xff]
  %301 = vrot.lane.b32.xlu0 %v300, 96
  %v302 = vpop.permute.xlu0 %301
  %vm303 = vcmask 1048320
  %s304 = scalar_lea.vmem %s1, 144
  %305 = vst.msk [vmem:[%s304] sm:$0xff] %vm303, %v302
  %s306 = scalar_lea.vmem %s0, 707
  %v307 = vld [vmem:[%s306] ss:$4 sm:$0xff]
  %308 = vrot.lane.b32.xlu0 %v307, 96
  %v309 = vpop.permute.xlu0 %308
  %vm310 = vcmask 1048320
  %s311 = scalar_lea.vmem %s1, 176
  %312 = vst.msk [vmem:[%s311] sm:$0xff] %vm310, %v309
  %s313 = scalar_lea.vmem %s0, 835
  %v314 = vld [vmem:[%s313] ss:$4 sm:$0xff]
  %315 = vrot.lane.b32.xlu0 %v314, 96
  %v316 = vpop.permute.xlu0 %315
  %vm317 = vcmask 1048320
  %s318 = scalar_lea.vmem %s1, 208
  %319 = vst.msk [vmem:[%s318] sm:$0xff] %vm317, %v316
  %s320 = scalar_lea.vmem %s0, 963
  %v321 = vld [vmem:[%s320] ss:$4 sm:$0xff]
  %322 = vrot.lane.b32.xlu0 %v321, 96
  %v323 = vpop.permute.xlu0 %322
  %vm324 = vcmask 1048320
  %s325 = scalar_lea.vmem %s1, 240
  %326 = vst.msk [vmem:[%s325] sm:$0xff] %vm324, %v323
  %s327 = scalar_lea.vmem %s0, 99
  %v328 = vld [vmem:[%s327] ss:$4 sm:$0xff]
  %329 = vrot.lane.b32.xlu0 %v328, 96
  %v330 = vpop.permute.xlu0 %329
  %vm331 = vcmask 1048320
  %s332 = scalar_lea.vmem %s1, 24
  %333 = vst.msk [vmem:[%s332] sm:$0xff] %vm331, %v330
  %s334 = scalar_lea.vmem %s0, 227
  %v335 = vld [vmem:[%s334] ss:$4 sm:$0xff]
  %336 = vrot.lane.b32.xlu0 %v335, 96
  %v337 = vpop.permute.xlu0 %336
  %vm338 = vcmask 1048320
  %s339 = scalar_lea.vmem %s1, 56
  %340 = vst.msk [vmem:[%s339] sm:$0xff] %vm338, %v337
  %s341 = scalar_lea.vmem %s0, 355
  %v342 = vld [vmem:[%s341] ss:$4 sm:$0xff]
  %343 = vrot.lane.b32.xlu0 %v342, 96
  %v344 = vpop.permute.xlu0 %343
  %vm345 = vcmask 1048320
  %s346 = scalar_lea.vmem %s1, 88
  %347 = vst.msk [vmem:[%s346] sm:$0xff] %vm345, %v344
  %s348 = scalar_lea.vmem %s0, 483
  %v349 = vld [vmem:[%s348] ss:$4 sm:$0xff]
  %350 = vrot.lane.b32.xlu0 %v349, 96
  %v351 = vpop.permute.xlu0 %350
  %vm352 = vcmask 1048320
  %s353 = scalar_lea.vmem %s1, 120
  %354 = vst.msk [vmem:[%s353] sm:$0xff] %vm352, %v351
  %s355 = scalar_lea.vmem %s0, 611
  %v356 = vld [vmem:[%s355] ss:$4 sm:$0xff]
  %357 = vrot.lane.b32.xlu0 %v356, 96
  %v358 = vpop.permute.xlu0 %357
  %vm359 = vcmask 1048320
  %s360 = scalar_lea.vmem %s1, 152
  %361 = vst.msk [vmem:[%s360] sm:$0xff] %vm359, %v358
  %s362 = scalar_lea.vmem %s0, 739
  %v363 = vld [vmem:[%s362] ss:$4 sm:$0xff]
  %364 = vrot.lane.b32.xlu0 %v363, 96
  %v365 = vpop.permute.xlu0 %364
  %vm366 = vcmask 1048320
  %s367 = scalar_lea.vmem %s1, 184
  %368 = vst.msk [vmem:[%s367] sm:$0xff] %vm366, %v365
  %s369 = scalar_lea.vmem %s0, 867
  %v370 = vld [vmem:[%s369] ss:$4 sm:$0xff]
  %371 = vrot.lane.b32.xlu0 %v370, 96
  %v372 = vpop.permute.xlu0 %371
  %vm373 = vcmask 1048320
  %s374 = scalar_lea.vmem %s1, 216
  %375 = vst.msk [vmem:[%s374] sm:$0xff] %vm373, %v372
  %s376 = scalar_lea.vmem %s0, 995
  %v377 = vld [vmem:[%s376] ss:$4 sm:$0xff]
  %378 = vrot.lane.b32.xlu0 %v377, 96
  %v379 = vpop.permute.xlu0 %378
  %vm380 = vcmask 1048320
  %s381 = scalar_lea.vmem %s1, 248
  %382 = vst.msk [vmem:[%s381] sm:$0xff] %vm380, %v379
  %s383 = scalar_lea.vmem %s0, 2
  %v384 = vld [vmem:[%s383] ss:$4 sm:$0xff]
  %385 = vrot.lane.b32.xlu0 %v384, 64
  %v386 = vpop.permute.xlu0 %385
  %vm387 = vcmask 785920
  %388 = vst.msk [vmem:[%s1] sm:$0xff] %vm387, %v386
  %s389 = scalar_lea.vmem %s0, 130
  %v390 = vld [vmem:[%s389] ss:$4 sm:$0xff]
  %391 = vrot.lane.b32.xlu0 %v390, 64
  %v392 = vpop.permute.xlu0 %391
  %vm393 = vcmask 785920
  %s394 = scalar_lea.vmem %s1, 32
  %395 = vst.msk [vmem:[%s394] sm:$0xff] %vm393, %v392
  %s396 = scalar_lea.vmem %s0, 258
  %v397 = vld [vmem:[%s396] ss:$4 sm:$0xff]
  %398 = vrot.lane.b32.xlu0 %v397, 64
  %v399 = vpop.permute.xlu0 %398
  %vm400 = vcmask 785920
  %s401 = scalar_lea.vmem %s1, 64
  %402 = vst.msk [vmem:[%s401] sm:$0xff] %vm400, %v399
  %s403 = scalar_lea.vmem %s0, 386
  %v404 = vld [vmem:[%s403] ss:$4 sm:$0xff]
  %405 = vrot.lane.b32.xlu0 %v404, 64
  %v406 = vpop.permute.xlu0 %405
  %vm407 = vcmask 785920
  %s408 = scalar_lea.vmem %s1, 96
  %409 = vst.msk [vmem:[%s408] sm:$0xff] %vm407, %v406
  %s410 = scalar_lea.vmem %s0, 514
  %v411 = vld [vmem:[%s410] ss:$4 sm:$0xff]
  %412 = vrot.lane.b32.xlu0 %v411, 64
  %v413 = vpop.permute.xlu0 %412
  %vm414 = vcmask 785920
  %s415 = scalar_lea.vmem %s1, 128
  %416 = vst.msk [vmem:[%s415] sm:$0xff] %vm414, %v413
  %s417 = scalar_lea.vmem %s0, 642
  %v418 = vld [vmem:[%s417] ss:$4 sm:$0xff]
  %419 = vrot.lane.b32.xlu0 %v418, 64
  %v420 = vpop.permute.xlu0 %419
  %vm421 = vcmask 785920
  %s422 = scalar_lea.vmem %s1, 160
  %423 = vst.msk [vmem:[%s422] sm:$0xff] %vm421, %v420
  %s424 = scalar_lea.vmem %s0, 770
  %v425 = vld [vmem:[%s424] ss:$4 sm:$0xff]
  %426 = vrot.lane.b32.xlu0 %v425, 64
  %v427 = vpop.permute.xlu0 %426
  %vm428 = vcmask 785920
  %s429 = scalar_lea.vmem %s1, 192
  %430 = vst.msk [vmem:[%s429] sm:$0xff] %vm428, %v427
  %s431 = scalar_lea.vmem %s0, 898
  %v432 = vld [vmem:[%s431] ss:$4 sm:$0xff]
  %433 = vrot.lane.b32.xlu0 %v432, 64
  %v434 = vpop.permute.xlu0 %433
  %vm435 = vcmask 785920
  %s436 = scalar_lea.vmem %s1, 224
  %437 = vst.msk [vmem:[%s436] sm:$0xff] %vm435, %v434
  %s438 = scalar_lea.vmem %s0, 34
  %v439 = vld [vmem:[%s438] ss:$4 sm:$0xff]
  %440 = vrot.lane.b32.xlu0 %v439, 64
  %v441 = vpop.permute.xlu0 %440
  %vm442 = vcmask 785920
  %s443 = scalar_lea.vmem %s1, 8
  %444 = vst.msk [vmem:[%s443] sm:$0xff] %vm442, %v441
  %s445 = scalar_lea.vmem %s0, 162
  %v446 = vld [vmem:[%s445] ss:$4 sm:$0xff]
  %447 = vrot.lane.b32.xlu0 %v446, 64
  %v448 = vpop.permute.xlu0 %447
  %vm449 = vcmask 785920
  %s450 = scalar_lea.vmem %s1, 40
  %451 = vst.msk [vmem:[%s450] sm:$0xff] %vm449, %v448
  %s452 = scalar_lea.vmem %s0, 290
  %v453 = vld [vmem:[%s452] ss:$4 sm:$0xff]
  %454 = vrot.lane.b32.xlu0 %v453, 64
  %v455 = vpop.permute.xlu0 %454
  %vm456 = vcmask 785920
  %s457 = scalar_lea.vmem %s1, 72
  %458 = vst.msk [vmem:[%s457] sm:$0xff] %vm456, %v455
  %s459 = scalar_lea.vmem %s0, 418
  %v460 = vld [vmem:[%s459] ss:$4 sm:$0xff]
  %461 = vrot.lane.b32.xlu0 %v460, 64
  %v462 = vpop.permute.xlu0 %461
  %vm463 = vcmask 785920
  %s464 = scalar_lea.vmem %s1, 104
  %465 = vst.msk [vmem:[%s464] sm:$0xff] %vm463, %v462
  %s466 = scalar_lea.vmem %s0, 546
  %v467 = vld [vmem:[%s466] ss:$4 sm:$0xff]
  %468 = vrot.lane.b32.xlu0 %v467, 64
  %v469 = vpop.permute.xlu0 %468
  %vm470 = vcmask 785920
  %s471 = scalar_lea.vmem %s1, 136
  %472 = vst.msk [vmem:[%s471] sm:$0xff] %vm470, %v469
  %s473 = scalar_lea.vmem %s0, 674
  %v474 = vld [vmem:[%s473] ss:$4 sm:$0xff]
  %475 = vrot.lane.b32.xlu0 %v474, 64
  %v476 = vpop.permute.xlu0 %475
  %vm477 = vcmask 785920
  %s478 = scalar_lea.vmem %s1, 168
  %479 = vst.msk [vmem:[%s478] sm:$0xff] %vm477, %v476
  %s480 = scalar_lea.vmem %s0, 802
  %v481 = vld [vmem:[%s480] ss:$4 sm:$0xff]
  %482 = vrot.lane.b32.xlu0 %v481, 64
  %v483 = vpop.permute.xlu0 %482
  %vm484 = vcmask 785920
  %s485 = scalar_lea.vmem %s1, 200
  %486 = vst.msk [vmem:[%s485] sm:$0xff] %vm484, %v483
  %s487 = scalar_lea.vmem %s0, 930
  %v488 = vld [vmem:[%s487] ss:$4 sm:$0xff]
  %489 = vrot.lane.b32.xlu0 %v488, 64
  %v490 = vpop.permute.xlu0 %489
  %vm491 = vcmask 785920
  %s492 = scalar_lea.vmem %s1, 232
  %493 = vst.msk [vmem:[%s492] sm:$0xff] %vm491, %v490
  %s494 = scalar_lea.vmem %s0, 66
  %v495 = vld [vmem:[%s494] ss:$4 sm:$0xff]
  %496 = vrot.lane.b32.xlu0 %v495, 64
  %v497 = vpop.permute.xlu0 %496
  %vm498 = vcmask 785920
  %s499 = scalar_lea.vmem %s1, 16
  %500 = vst.msk [vmem:[%s499] sm:$0xff] %vm498, %v497
  %s501 = scalar_lea.vmem %s0, 194
  %v502 = vld [vmem:[%s501] ss:$4 sm:$0xff]
  %503 = vrot.lane.b32.xlu0 %v502, 64
  %v504 = vpop.permute.xlu0 %503
  %vm505 = vcmask 785920
  %s506 = scalar_lea.vmem %s1, 48
  %507 = vst.msk [vmem:[%s506] sm:$0xff] %vm505, %v504
  %s508 = scalar_lea.vmem %s0, 322
  %v509 = vld [vmem:[%s508] ss:$4 sm:$0xff]
  %510 = vrot.lane.b32.xlu0 %v509, 64
  %v511 = vpop.permute.xlu0 %510
  %vm512 = vcmask 785920
  %s513 = scalar_lea.vmem %s1, 80
  %514 = vst.msk [vmem:[%s513] sm:$0xff] %vm512, %v511
  %s515 = scalar_lea.vmem %s0, 450
  %v516 = vld [vmem:[%s515] ss:$4 sm:$0xff]
  %517 = vrot.lane.b32.xlu0 %v516, 64
  %v518 = vpop.permute.xlu0 %517
  %vm519 = vcmask 785920
  %s520 = scalar_lea.vmem %s1, 112
  %521 = vst.msk [vmem:[%s520] sm:$0xff] %vm519, %v518
  %s522 = scalar_lea.vmem %s0, 578
  %v523 = vld [vmem:[%s522] ss:$4 sm:$0xff]
  %524 = vrot.lane.b32.xlu0 %v523, 64
  %v525 = vpop.permute.xlu0 %524
  %vm526 = vcmask 785920
  %s527 = scalar_lea.vmem %s1, 144
  %528 = vst.msk [vmem:[%s527] sm:$0xff] %vm526, %v525
  %s529 = scalar_lea.vmem %s0, 706
  %v530 = vld [vmem:[%s529] ss:$4 sm:$0xff]
  %531 = vrot.lane.b32.xlu0 %v530, 64
  %v532 = vpop.permute.xlu0 %531
  %vm533 = vcmask 785920
  %s534 = scalar_lea.vmem %s1, 176
  %535 = vst.msk [vmem:[%s534] sm:$0xff] %vm533, %v532
  %s536 = scalar_lea.vmem %s0, 834
  %v537 = vld [vmem:[%s536] ss:$4 sm:$0xff]
  %538 = vrot.lane.b32.xlu0 %v537, 64
  %v539 = vpop.permute.xlu0 %538
  %vm540 = vcmask 785920
  %s541 = scalar_lea.vmem %s1, 208
  %542 = vst.msk [vmem:[%s541] sm:$0xff] %vm540, %v539
  %s543 = scalar_lea.vmem %s0, 962
  %v544 = vld [vmem:[%s543] ss:$4 sm:$0xff]
  %545 = vrot.lane.b32.xlu0 %v544, 64
  %v546 = vpop.permute.xlu0 %545
  %vm547 = vcmask 785920
  %s548 = scalar_lea.vmem %s1, 240
  %549 = vst.msk [vmem:[%s548] sm:$0xff] %vm547, %v546
  %s550 = scalar_lea.vmem %s0, 98
  %v551 = vld [vmem:[%s550] ss:$4 sm:$0xff]
  %552 = vrot.lane.b32.xlu0 %v551, 64
  %v553 = vpop.permute.xlu0 %552
  %vm554 = vcmask 785920
  %s555 = scalar_lea.vmem %s1, 24
  %556 = vst.msk [vmem:[%s555] sm:$0xff] %vm554, %v553
  %s557 = scalar_lea.vmem %s0, 226
  %v558 = vld [vmem:[%s557] ss:$4 sm:$0xff]
  %559 = vrot.lane.b32.xlu0 %v558, 64
  %v560 = vpop.permute.xlu0 %559
  %vm561 = vcmask 785920
  %s562 = scalar_lea.vmem %s1, 56
  %563 = vst.msk [vmem:[%s562] sm:$0xff] %vm561, %v560
  %s564 = scalar_lea.vmem %s0, 354
  %v565 = vld [vmem:[%s564] ss:$4 sm:$0xff]
  %566 = vrot.lane.b32.xlu0 %v565, 64
  %v567 = vpop.permute.xlu0 %566
  %vm568 = vcmask 785920
  %s569 = scalar_lea.vmem %s1, 88
  %570 = vst.msk [vmem:[%s569] sm:$0xff] %vm568, %v567
  %s571 = scalar_lea.vmem %s0, 482
  %v572 = vld [vmem:[%s571] ss:$4 sm:$0xff]
  %573 = vrot.lane.b32.xlu0 %v572, 64
  %v574 = vpop.permute.xlu0 %573
  %vm575 = vcmask 785920
  %s576 = scalar_lea.vmem %s1, 120
  %577 = vst.msk [vmem:[%s576] sm:$0xff] %vm575, %v574
  %s578 = scalar_lea.vmem %s0, 610
  %v579 = vld [vmem:[%s578] ss:$4 sm:$0xff]
  %580 = vrot.lane.b32.xlu0 %v579, 64
  %v581 = vpop.permute.xlu0 %580
  %vm582 = vcmask 785920
  %s583 = scalar_lea.vmem %s1, 152
  %584 = vst.msk [vmem:[%s583] sm:$0xff] %vm582, %v581
  %s585 = scalar_lea.vmem %s0, 738
  %v586 = vld [vmem:[%s585] ss:$4 sm:$0xff]
  %587 = vrot.lane.b32.xlu0 %v586, 64
  %v588 = vpop.permute.xlu0 %587
  %vm589 = vcmask 785920
  %s590 = scalar_lea.vmem %s1, 184
  %591 = vst.msk [vmem:[%s590] sm:$0xff] %vm589, %v588
  %s592 = scalar_lea.vmem %s0, 866
  %v593 = vld [vmem:[%s592] ss:$4 sm:$0xff]
  %594 = vrot.lane.b32.xlu0 %v593, 64
  %v595 = vpop.permute.xlu0 %594
  %vm596 = vcmask 785920
  %s597 = scalar_lea.vmem %s1, 216
  %598 = vst.msk [vmem:[%s597] sm:$0xff] %vm596, %v595
  %s599 = scalar_lea.vmem %s0, 994
  %v600 = vld [vmem:[%s599] ss:$4 sm:$0xff]
  %601 = vrot.lane.b32.xlu0 %v600, 64
  %v602 = vpop.permute.xlu0 %601
  %vm603 = vcmask 785920
  %s604 = scalar_lea.vmem %s1, 248
  %605 = vst.msk [vmem:[%s604] sm:$0xff] %vm603, %v602
  %s606 = scalar_lea.vmem %s0, 1
  %v607 = vld [vmem:[%s606] ss:$4 sm:$0xff]
  %608 = vrot.lane.b32.xlu0 %v607, 32
  %v609 = vpop.permute.xlu0 %608
  %vm610 = vcmask 523520
  %611 = vst.msk [vmem:[%s1] sm:$0xff] %vm610, %v609
  %s612 = scalar_lea.vmem %s0, 129
  %v613 = vld [vmem:[%s612] ss:$4 sm:$0xff]
  %614 = vrot.lane.b32.xlu0 %v613, 32
  %v615 = vpop.permute.xlu0 %614
  %vm616 = vcmask 523520
  %s617 = scalar_lea.vmem %s1, 32
  %618 = vst.msk [vmem:[%s617] sm:$0xff] %vm616, %v615
  %s619 = scalar_lea.vmem %s0, 257
  %v620 = vld [vmem:[%s619] ss:$4 sm:$0xff]
  %621 = vrot.lane.b32.xlu0 %v620, 32
  %v622 = vpop.permute.xlu0 %621
  %vm623 = vcmask 523520
  %s624 = scalar_lea.vmem %s1, 64
  %625 = vst.msk [vmem:[%s624] sm:$0xff] %vm623, %v622
  %s626 = scalar_lea.vmem %s0, 385
  %v627 = vld [vmem:[%s626] ss:$4 sm:$0xff]
  %628 = vrot.lane.b32.xlu0 %v627, 32
  %v629 = vpop.permute.xlu0 %628
  %vm630 = vcmask 523520
  %s631 = scalar_lea.vmem %s1, 96
  %632 = vst.msk [vmem:[%s631] sm:$0xff] %vm630, %v629
  %s633 = scalar_lea.vmem %s0, 513
  %v634 = vld [vmem:[%s633] ss:$4 sm:$0xff]
  %635 = vrot.lane.b32.xlu0 %v634, 32
  %v636 = vpop.permute.xlu0 %635
  %vm637 = vcmask 523520
  %s638 = scalar_lea.vmem %s1, 128
  %639 = vst.msk [vmem:[%s638] sm:$0xff] %vm637, %v636
  %s640 = scalar_lea.vmem %s0, 641
  %v641 = vld [vmem:[%s640] ss:$4 sm:$0xff]
  %642 = vrot.lane.b32.xlu0 %v641, 32
  %v643 = vpop.permute.xlu0 %642
  %vm644 = vcmask 523520
  %s645 = scalar_lea.vmem %s1, 160
  %646 = vst.msk [vmem:[%s645] sm:$0xff] %vm644, %v643
  %s647 = scalar_lea.vmem %s0, 769
  %v648 = vld [vmem:[%s647] ss:$4 sm:$0xff]
  %649 = vrot.lane.b32.xlu0 %v648, 32
  %v650 = vpop.permute.xlu0 %649
  %vm651 = vcmask 523520
  %s652 = scalar_lea.vmem %s1, 192
  %653 = vst.msk [vmem:[%s652] sm:$0xff] %vm651, %v650
  %s654 = scalar_lea.vmem %s0, 897
  %v655 = vld [vmem:[%s654] ss:$4 sm:$0xff]
  %656 = vrot.lane.b32.xlu0 %v655, 32
  %v657 = vpop.permute.xlu0 %656
  %vm658 = vcmask 523520
  %s659 = scalar_lea.vmem %s1, 224
  %660 = vst.msk [vmem:[%s659] sm:$0xff] %vm658, %v657
  %s661 = scalar_lea.vmem %s0, 33
  %v662 = vld [vmem:[%s661] ss:$4 sm:$0xff]
  %663 = vrot.lane.b32.xlu0 %v662, 32
  %v664 = vpop.permute.xlu0 %663
  %vm665 = vcmask 523520
  %s666 = scalar_lea.vmem %s1, 8
  %667 = vst.msk [vmem:[%s666] sm:$0xff] %vm665, %v664
  %s668 = scalar_lea.vmem %s0, 161
  %v669 = vld [vmem:[%s668] ss:$4 sm:$0xff]
  %670 = vrot.lane.b32.xlu0 %v669, 32
  %v671 = vpop.permute.xlu0 %670
  %vm672 = vcmask 523520
  %s673 = scalar_lea.vmem %s1, 40
  %674 = vst.msk [vmem:[%s673] sm:$0xff] %vm672, %v671
  %s675 = scalar_lea.vmem %s0, 289
  %v676 = vld [vmem:[%s675] ss:$4 sm:$0xff]
  %677 = vrot.lane.b32.xlu0 %v676, 32
  %v678 = vpop.permute.xlu0 %677
  %vm679 = vcmask 523520
  %s680 = scalar_lea.vmem %s1, 72
  %681 = vst.msk [vmem:[%s680] sm:$0xff] %vm679, %v678
  %s682 = scalar_lea.vmem %s0, 417
  %v683 = vld [vmem:[%s682] ss:$4 sm:$0xff]
  %684 = vrot.lane.b32.xlu0 %v683, 32
  %v685 = vpop.permute.xlu0 %684
  %vm686 = vcmask 523520
  %s687 = scalar_lea.vmem %s1, 104
  %688 = vst.msk [vmem:[%s687] sm:$0xff] %vm686, %v685
  %s689 = scalar_lea.vmem %s0, 545
  %v690 = vld [vmem:[%s689] ss:$4 sm:$0xff]
  %691 = vrot.lane.b32.xlu0 %v690, 32
  %v692 = vpop.permute.xlu0 %691
  %vm693 = vcmask 523520
  %s694 = scalar_lea.vmem %s1, 136
  %695 = vst.msk [vmem:[%s694] sm:$0xff] %vm693, %v692
  %s696 = scalar_lea.vmem %s0, 673
  %v697 = vld [vmem:[%s696] ss:$4 sm:$0xff]
  %698 = vrot.lane.b32.xlu0 %v697, 32
  %v699 = vpop.permute.xlu0 %698
  %vm700 = vcmask 523520
  %s701 = scalar_lea.vmem %s1, 168
  %702 = vst.msk [vmem:[%s701] sm:$0xff] %vm700, %v699
  %s703 = scalar_lea.vmem %s0, 801
  %v704 = vld [vmem:[%s703] ss:$4 sm:$0xff]
  %705 = vrot.lane.b32.xlu0 %v704, 32
  %v706 = vpop.permute.xlu0 %705
  %vm707 = vcmask 523520
  %s708 = scalar_lea.vmem %s1, 200
  %709 = vst.msk [vmem:[%s708] sm:$0xff] %vm707, %v706
  %s710 = scalar_lea.vmem %s0, 929
  %v711 = vld [vmem:[%s710] ss:$4 sm:$0xff]
  %712 = vrot.lane.b32.xlu0 %v711, 32
  %v713 = vpop.permute.xlu0 %712
  %vm714 = vcmask 523520
  %s715 = scalar_lea.vmem %s1, 232
  %716 = vst.msk [vmem:[%s715] sm:$0xff] %vm714, %v713
  %s717 = scalar_lea.vmem %s0, 65
  %v718 = vld [vmem:[%s717] ss:$4 sm:$0xff]
  %719 = vrot.lane.b32.xlu0 %v718, 32
  %v720 = vpop.permute.xlu0 %719
  %vm721 = vcmask 523520
  %s722 = scalar_lea.vmem %s1, 16
  %723 = vst.msk [vmem:[%s722] sm:$0xff] %vm721, %v720
  %s724 = scalar_lea.vmem %s0, 193
  %v725 = vld [vmem:[%s724] ss:$4 sm:$0xff]
  %726 = vrot.lane.b32.xlu0 %v725, 32
  %v727 = vpop.permute.xlu0 %726
  %vm728 = vcmask 523520
  %s729 = scalar_lea.vmem %s1, 48
  %730 = vst.msk [vmem:[%s729] sm:$0xff] %vm728, %v727
  %s731 = scalar_lea.vmem %s0, 321
  %v732 = vld [vmem:[%s731] ss:$4 sm:$0xff]
  %733 = vrot.lane.b32.xlu0 %v732, 32
  %v734 = vpop.permute.xlu0 %733
  %vm735 = vcmask 523520
  %s736 = scalar_lea.vmem %s1, 80
  %737 = vst.msk [vmem:[%s736] sm:$0xff] %vm735, %v734
  %s738 = scalar_lea.vmem %s0, 449
  %v739 = vld [vmem:[%s738] ss:$4 sm:$0xff]
  %740 = vrot.lane.b32.xlu0 %v739, 32
  %v741 = vpop.permute.xlu0 %740
  %vm742 = vcmask 523520
  %s743 = scalar_lea.vmem %s1, 112
  %744 = vst.msk [vmem:[%s743] sm:$0xff] %vm742, %v741
  %s745 = scalar_lea.vmem %s0, 577
  %v746 = vld [vmem:[%s745] ss:$4 sm:$0xff]
  %747 = vrot.lane.b32.xlu0 %v746, 32
  %v748 = vpop.permute.xlu0 %747
  %vm749 = vcmask 523520
  %s750 = scalar_lea.vmem %s1, 144
  %751 = vst.msk [vmem:[%s750] sm:$0xff] %vm749, %v748
  %s752 = scalar_lea.vmem %s0, 705
  %v753 = vld [vmem:[%s752] ss:$4 sm:$0xff]
  %754 = vrot.lane.b32.xlu0 %v753, 32
  %v755 = vpop.permute.xlu0 %754
  %vm756 = vcmask 523520
  %s757 = scalar_lea.vmem %s1, 176
  %758 = vst.msk [vmem:[%s757] sm:$0xff] %vm756, %v755
  %s759 = scalar_lea.vmem %s0, 833
  %v760 = vld [vmem:[%s759] ss:$4 sm:$0xff]
  %761 = vrot.lane.b32.xlu0 %v760, 32
  %v762 = vpop.permute.xlu0 %761
  %vm763 = vcmask 523520
  %s764 = scalar_lea.vmem %s1, 208
  %765 = vst.msk [vmem:[%s764] sm:$0xff] %vm763, %v762
  %s766 = scalar_lea.vmem %s0, 961
  %v767 = vld [vmem:[%s766] ss:$4 sm:$0xff]
  %768 = vrot.lane.b32.xlu0 %v767, 32
  %v769 = vpop.permute.xlu0 %768
  %vm770 = vcmask 523520
  %s771 = scalar_lea.vmem %s1, 240
  %772 = vst.msk [vmem:[%s771] sm:$0xff] %vm770, %v769
  %s773 = scalar_lea.vmem %s0, 97
  %v774 = vld [vmem:[%s773] ss:$4 sm:$0xff]
  %775 = vrot.lane.b32.xlu0 %v774, 32
  %v776 = vpop.permute.xlu0 %775
  %vm777 = vcmask 523520
  %s778 = scalar_lea.vmem %s1, 24
  %779 = vst.msk [vmem:[%s778] sm:$0xff] %vm777, %v776
  %s780 = scalar_lea.vmem %s0, 225
  %v781 = vld [vmem:[%s780] ss:$4 sm:$0xff]
  %782 = vrot.lane.b32.xlu0 %v781, 32
  %v783 = vpop.permute.xlu0 %782
  %vm784 = vcmask 523520
  %s785 = scalar_lea.vmem %s1, 56
  %786 = vst.msk [vmem:[%s785] sm:$0xff] %vm784, %v783
  %s787 = scalar_lea.vmem %s0, 353
  %v788 = vld [vmem:[%s787] ss:$4 sm:$0xff]
  %789 = vrot.lane.b32.xlu0 %v788, 32
  %v790 = vpop.permute.xlu0 %789
  %vm791 = vcmask 523520
  %s792 = scalar_lea.vmem %s1, 88
  %793 = vst.msk [vmem:[%s792] sm:$0xff] %vm791, %v790
  %s794 = scalar_lea.vmem %s0, 481
  %v795 = vld [vmem:[%s794] ss:$4 sm:$0xff]
  %796 = vrot.lane.b32.xlu0 %v795, 32
  %v797 = vpop.permute.xlu0 %796
  %vm798 = vcmask 523520
  %s799 = scalar_lea.vmem %s1, 120
  %800 = vst.msk [vmem:[%s799] sm:$0xff] %vm798, %v797
  %s801 = scalar_lea.vmem %s0, 609
  %v802 = vld [vmem:[%s801] ss:$4 sm:$0xff]
  %803 = vrot.lane.b32.xlu0 %v802, 32
  %v804 = vpop.permute.xlu0 %803
  %vm805 = vcmask 523520
  %s806 = scalar_lea.vmem %s1, 152
  %807 = vst.msk [vmem:[%s806] sm:$0xff] %vm805, %v804
  %s808 = scalar_lea.vmem %s0, 737
  %v809 = vld [vmem:[%s808] ss:$4 sm:$0xff]
  %810 = vrot.lane.b32.xlu0 %v809, 32
  %v811 = vpop.permute.xlu0 %810
  %vm812 = vcmask 523520
  %s813 = scalar_lea.vmem %s1, 184
  %814 = vst.msk [vmem:[%s813] sm:$0xff] %vm812, %v811
  %s815 = scalar_lea.vmem %s0, 865
  %v816 = vld [vmem:[%s815] ss:$4 sm:$0xff]
  %817 = vrot.lane.b32.xlu0 %v816, 32
  %v818 = vpop.permute.xlu0 %817
  %vm819 = vcmask 523520
  %s820 = scalar_lea.vmem %s1, 216
  %821 = vst.msk [vmem:[%s820] sm:$0xff] %vm819, %v818
  %s822 = scalar_lea.vmem %s0, 993
  %v823 = vld [vmem:[%s822] ss:$4 sm:$0xff]
  %824 = vrot.lane.b32.xlu0 %v823, 32
  %v825 = vpop.permute.xlu0 %824
  %vm826 = vcmask 523520
  %s827 = scalar_lea.vmem %s1, 248
  %828 = vst.msk [vmem:[%s827] sm:$0xff] %vm826, %v825

</llo_original>
